<compile_context>
chip_gen: v5e
topology: v5e:2x2
jax: 0.10.0
libtpu: 0.0.40
codegen_flags: <defaults>
</compile_context>

<pallas_src>
import functools

import jax
import jax.numpy as jnp
from jax.experimental import pallas as pl
from jax.experimental.pallas import tpu as pltpu

EPS = 1e-5


# ----------------------------------------------------------------------------
# In-kernel helpers
# ----------------------------------------------------------------------------
def _bn(y):
    """BatchNorm over rows (axis 0), biased variance, eps=1e-5, train mode."""
    mean = jnp.mean(y, axis=0, keepdims=True)
    var = jnp.mean(jnp.square(y - mean), axis=0, keepdims=True)
    return (y - mean) * jax.lax.rsqrt(var + EPS)


def _mm(x, w_ref):
    return jnp.dot(x, w_ref[...], preferred_element_type=jnp.float32)


# ----------------------------------------------------------------------------
# Pallas kernels
# ----------------------------------------------------------------------------
def backbone_kernel(p_ref, w_ref, g_ref, b_ref, pool_ref, o_ref):
    # conv-as-matmul on lane-dense im2col patches (K padded to 128),
    # BN2d over this view's B*H*W rows, ReLU, then matmul-based global avg pool.
    y = _mm(p_ref[...], w_ref)                                   # [R, HID] f32
    a = jnp.maximum(_bn(y) * g_ref[...] + b_ref[...], 0.0)       # [R, HID]
    z = jnp.dot(pool_ref[...], a.astype(jnp.bfloat16),
                preferred_element_type=jnp.float32)              # [B, HID]
    o_ref[...] = z.astype(o_ref.dtype)


def mlp_heads_kernel(z_ref, w1, g1, b1, w2, g2, b2, wfc,
                     pw1, pg1, pb1, pw2, pb2, hw, hb,
                     h_ref, p_ref, head_ref):
    z = z_ref[...]                                               # [B, HID] bf16

    # --- projector ---
    a = jnp.maximum(_bn(_mm(z, w1)) * g1[...] + b1[...], 0.0).astype(jnp.bfloat16)
    a = jnp.maximum(_bn(_mm(a, w2)) * g2[...] + b2[...], 0.0).astype(jnp.bfloat16)
    # fc bias dropped: cancelled exactly by the affine-free BN mean subtraction.
    h = _bn(_mm(a, wfc))                                         # [B, BD] f32

    # --- predictor ---
    h16 = h.astype(jnp.bfloat16)
    q = jnp.maximum(_bn(_mm(h16, pw1)) * pg1[...] + pb1[...], 0.0).astype(jnp.bfloat16)
    p = _mm(q, pw2) + pb2[...]                                   # [B, BD] f32

    # --- fused classifier + domain discriminator (GRL is identity forward) ---
    head = _mm(z, hw) + hb[...]                                  # [B, 128] f32

    h_ref[...] = h
    p_ref[...] = p
    head_ref[...] = head


# ----------------------------------------------------------------------------
# pallas_call wrappers (grid over the two views, parallel for megacore)
# ----------------------------------------------------------------------------
def _full_spec(a):
    return pl.BlockSpec(a.shape, lambda v: (0,) * a.ndim)


def backbone_call(patches, w, g, b, pool):
    n_views, rows, kp = patches.shape
    hid = w.shape[1]
    batch = pool.shape[0]
    return pl.pallas_call(
        backbone_kernel,
        out_shape=jax.ShapeDtypeStruct((n_views, batch, hid), jnp.bfloat16),
        grid=(n_views,),
        in_specs=[
            pl.BlockSpec((None, rows, kp), lambda v: (v, 0, 0)),
            _full_spec(w), _full_spec(g), _full_spec(b), _full_spec(pool),
        ],
        out_specs=pl.BlockSpec((None, batch, hid), lambda v: (v, 0, 0)),
        compiler_params=pltpu.CompilerParams(
            dimension_semantics=("parallel",)),
    )(patches, w, g, b, pool)


def mlp_heads_call(z, w1, g1, b1, w2, g2, b2, wfc, pw1, pg1, pb1, pw2, pb2, hw, hb):
    n_views, batch, hid = z.shape
    bd = wfc.shape[1]
    hp = hw.shape[1]
    weights = (w1, g1, b1, w2, g2, b2, wfc, pw1, pg1, pb1, pw2, pb2, hw, hb)
    return pl.pallas_call(
        mlp_heads_kernel,
        out_shape=(
            jax.ShapeDtypeStruct((n_views, batch, bd), jnp.float32),   # h
            jax.ShapeDtypeStruct((n_views, batch, bd), jnp.float32),   # p
            jax.ShapeDtypeStruct((n_views, batch, hp), jnp.float32),   # heads
        ),
        grid=(n_views,),
        in_specs=[pl.BlockSpec((None, batch, hid), lambda v: (v, 0, 0))]
        + [_full_spec(a) for a in weights],
        out_specs=(
            pl.BlockSpec((None, batch, bd), lambda v: (v, 0, 0)),
            pl.BlockSpec((None, batch, bd), lambda v: (v, 0, 0)),
            pl.BlockSpec((None, batch, hp), lambda v: (v, 0, 0)),
        ),
        compiler_params=pltpu.CompilerParams(
            dimension_semantics=("parallel",)),
    )(z, *weights)


# ----------------------------------------------------------------------------
# Plain-JAX glue (layout prep only)
# ----------------------------------------------------------------------------
def im2col_3x3(x, k_pad):
    """x: [N, C, H, W] -> channel-last im2col patches [N*H*W, k_pad].

    Feature ordering is (kh, kw, C); the stand-in conv weight uses the same
    ordering (no PyTorch weights are loaded).  The feature axis is zero-padded
    to k_pad lanes so the Pallas kernel input is lane-dense.
    """
    n, c, h, w = x.shape
    xt = jnp.transpose(x, (0, 2, 3, 1))                    # NHWC
    xp = jnp.pad(xt, ((0, 0), (1, 1), (1, 1), (0, 0)))
    cols = [xp[:, i:i + h, j:j + w, :] for i in range(3) for j in range(3)]
    pat = jnp.concatenate(cols, axis=-1).reshape(n * h * w, 9 * c)
    return jnp.pad(pat, ((0, 0), (0, k_pad - 9 * c)))


# ----------------------------------------------------------------------------
# Parameters + forward
# ----------------------------------------------------------------------------
K_PAD = 128      # padded im2col contraction dim (C*9 -> 128)
HEAD_PAD = 128   # fused classifier + domain-disc output width (lane-dense)


def init_params(key, c_in, hidden_dim, backbone_dim, prediction_dim, num_classes):
    ks = jax.random.split(key, 10)
    norm = lambda k, shape, std=0.05: std * jax.random.normal(k, shape, jnp.float32)
    zeros_row = lambda d: jnp.zeros((1, d), jnp.float32)
    ones_row = lambda d: jnp.ones((1, d), jnp.float32)

    # backbone stand-in: conv3x3(c_in -> hidden_dim) + BN2d; K padded to 128.
    bb_w = jnp.pad(norm(ks[0], (c_in * 9, hidden_dim)),
                   ((0, K_PAD - c_in * 9), (0, 0)))

    # fused classifier (num_classes) + domain discriminator (2), padded to 128.
    cl_w = norm(ks[8], (hidden_dim, num_classes), 0.01)
    dd_w = norm(ks[9], (hidden_dim, 2), 0.01)
    head_w = jnp.zeros((hidden_dim, HEAD_PAD), jnp.float32)
    head_w = head_w.at[:, :num_classes].set(cl_w)
    head_w = head_w.at[:, num_classes:num_classes + 2].set(dd_w)

    return {
        "bb_w": bb_w, "bb_g": ones_row(hidden_dim), "bb_b": zeros_row(hidden_dim),
        # projector (Linear no-bias + BN + ReLU) x2, then backbone.fc + BN(affine=False)
        "pj_w1": norm(ks[1], (hidden_dim, hidden_dim)),
        "pj_g1": ones_row(hidden_dim), "pj_b1": zeros_row(hidden_dim),
        "pj_w2": norm(ks[2], (hidden_dim, hidden_dim)),
        "pj_g2": ones_row(hidden_dim), "pj_b2": zeros_row(hidden_dim),
        "pj_wfc": norm(ks[3], (hidden_dim, backbone_dim)),
        # (fc bias omitted: cancelled by the affine-free BN that follows)
        # predictor
        "pr_w1": norm(ks[4], (backbone_dim, prediction_dim)),
        "pr_g1": ones_row(prediction_dim), "pr_b1": zeros_row(prediction_dim),
        "pr_w2": norm(ks[5], (prediction_dim, backbone_dim)),
        "pr_b2": norm(ks[6], (1, backbone_dim), 0.01),
        # fused heads: weights ~ N(0, 0.01), biases zero (matches module init)
        "head_w": head_w, "head_b": zeros_row(HEAD_PAD),
    }


@functools.partial(jax.jit, static_argnames=("num_classes",))
def simsiam_forward(params, x1, x2, num_classes):
    B, C, H, W = x1.shape
    kp = params["bb_w"].shape[0]
    bf16 = lambda a: a.astype(jnp.bfloat16)

    # Fuse the two views: [2, B, C, H, W] -> lane-dense im2col per view.
    x = jnp.stack([x1, x2], axis=0).reshape(2 * B, C, H, W)
    patches = bf16(im2col_3x3(x, kp).reshape(2, B * H * W, kp))

    # Matmul-based global average pool (block-constant, same for both views).
    hw_count = H * W
    pool = bf16(jnp.repeat(jnp.eye(B, dtype=jnp.float32), hw_count, axis=1)
                / hw_count)                                   # [B, B*H*W]

    # Backbone (one call, grid over views).
    z = backbone_call(patches, bf16(params["bb_w"]),
                      params["bb_g"], params["bb_b"], pool)   # [2, B, HID] bf16

    # Projector + predictor + fused heads (one call, grid over views).
    h, p, head = mlp_heads_call(
        z,
        bf16(params["pj_w1"]), params["pj_g1"], params["pj_b1"],
        bf16(params["pj_w2"]), params["pj_g2"], params["pj_b2"],
        bf16(params["pj_wfc"]),
        bf16(params["pr_w1"]), params["pr_g1"], params["pr_b1"],
        bf16(params["pr_w2"]), params["pr_b2"],
        bf16(params["head_w"]), params["head_b"],
    )

    logits = head[..., :num_classes]
    domain = head[..., num_classes:num_classes + 2]

    sg = jax.lax.stop_gradient
    return (
        p[0], p[1],                       # p1, p2
        sg(h[0]), sg(h[1]),               # h1.detach(), h2.detach()
        logits[0], sg(logits[1]),         # logits1, logits2.detach()
        domain[0], sg(domain[1]),         # domain_logits1, domain_logits2.detach()
    )


# ----------------------------------------------------------------------------
if __name__ == "__main__":
    # Small, lane-dense toy shapes (production: hidden/backbone=2048, pred=512).
    B, C_IN, H, W = 8, 3, 16, 16
    HIDDEN_DIM = 128
    BACKBONE_DIM = 128
    PREDICTION_DIM = 128
    NUM_CLASSES = 10

    key = jax.random.PRNGKey(0)
    kparam, k1, k2 = jax.random.split(key, 3)
    params = init_params(kparam, C_IN, HIDDEN_DIM, BACKBONE_DIM,
                         PREDICTION_DIM, NUM_CLASSES)
    x1 = jax.random.normal(k1, (B, C_IN, H, W), jnp.float32)   # NCHW
    x2 = jax.random.normal(k2, (B, C_IN, H, W), jnp.float32)   # NCHW

    outs = simsiam_forward(params, x1, x2, num_classes=NUM_CLASSES)
    outs = jax.block_until_ready(outs)

    expected_shapes = [
        (B, BACKBONE_DIM), (B, BACKBONE_DIM),        # p1, p2
        (B, BACKBONE_DIM), (B, BACKBONE_DIM),        # h1, h2 (detached)
        (B, NUM_CLASSES), (B, NUM_CLASSES),          # logits1, logits2
        (B, 2), (B, 2),                              # domain logits
    ]
    assert [tuple(o.shape) for o in outs] == expected_shapes
    assert all(bool(jnp.all(jnp.isfinite(o))) for o in outs)
    print("KERNEL_OK")
</pallas_src>

<mosaic_0001>
module attributes {stable_mosaic.version = 11 : i64} {
  func.func @backbone_kernel(%arg0: i32, %arg1: memref<1x2048x128xbf16, #tpu.memory_space<vmem>>, %arg2: memref<128x128xbf16, #tpu.memory_space<vmem>>, %arg3: memref<1x128xf32, #tpu.memory_space<vmem>>, %arg4: memref<1x128xf32, #tpu.memory_space<vmem>>, %arg5: memref<8x2048xbf16, #tpu.memory_space<vmem>>, %arg6: memref<1x8x128xbf16, #tpu.memory_space<vmem>>) attributes {dimension_semantics = [#tpu.dimension_semantics<parallel>], iteration_bounds = array<i64: 2>, scalar_prefetch = 0 : i64, scratch_operands = 0 : i64, tpu.core_type = #tpu.core_type<tc>, window_params = [{transform_indices = @transform_0, window_bounds = array<i64: 1, 2048, 128>}, {pipeline_mode = #tpu.pipeline_mode<synchronous>, transform_indices = @transform_1, window_bounds = array<i64: 128, 128>}, {pipeline_mode = #tpu.pipeline_mode<synchronous>, transform_indices = @transform_2, window_bounds = array<i64: 1, 128>}, {pipeline_mode = #tpu.pipeline_mode<synchronous>, transform_indices = @transform_3, window_bounds = array<i64: 1, 128>}, {pipeline_mode = #tpu.pipeline_mode<synchronous>, transform_indices = @transform_4, window_bounds = array<i64: 8, 2048>}, {transform_indices = @transform_5, window_bounds = array<i64: 1, 8, 128>}]} {
    %c0 = arith.constant 0 : index
    %c0_0 = arith.constant 0 : index
    %c0_1 = arith.constant 0 : index
    %0 = vector.load %arg1[%c0, %c0_0, %c0_1] : memref<1x2048x128xbf16, #tpu.memory_space<vmem>>, vector<1x2048x128xbf16>
    %1 = vector.shape_cast %0 : vector<1x2048x128xbf16> to vector<2048x128xbf16>
    %c0_2 = arith.constant 0 : index
    %c0_3 = arith.constant 0 : index
    %2 = vector.load %arg2[%c0_2, %c0_3] : memref<128x128xbf16, #tpu.memory_space<vmem>>, vector<128x128xbf16>
    %cst = arith.constant dense<0.000000e+00> : vector<2048x128xf32>
    %3 = tpu.matmul %1, %2, %cst {dimension_numbers = #tpu.dot_dimension_numbers<[1], [0], [0], [1], [0, 0, 1, 1], [], []>} : vector<2048x128xbf16>, vector<128x128xbf16>, vector<2048x128xf32> -> vector<2048x128xf32>
    %cst_4 = arith.constant dense<0.000000e+00> : vector<128xf32>
    %4 = vector.multi_reduction <add>, %3, %cst_4 [0] : vector<2048x128xf32> to vector<128xf32>
    %5 = vector.shape_cast %4 : vector<128xf32> to vector<1x128xf32>
    %cst_5 = arith.constant 2.048000e+03 : f32
    %6 = vector.broadcast %cst_5 : f32 to vector<1x128xf32>
    %7 = arith.divf %5, %6 : vector<1x128xf32>
    %8 = vector.broadcast %7 : vector<1x128xf32> to vector<2048x128xf32>
    %9 = arith.subf %3, %8 : vector<2048x128xf32>
    %10 = arith.mulf %9, %9 : vector<2048x128xf32>
    %cst_6 = arith.constant dense<0.000000e+00> : vector<128xf32>
    %11 = vector.multi_reduction <add>, %10, %cst_6 [0] : vector<2048x128xf32> to vector<128xf32>
    %12 = vector.shape_cast %11 : vector<128xf32> to vector<1x128xf32>
    %cst_7 = arith.constant 2.048000e+03 : f32
    %13 = vector.broadcast %cst_7 : f32 to vector<1x128xf32>
    %14 = arith.divf %12, %13 : vector<1x128xf32>
    %15 = vector.broadcast %7 : vector<1x128xf32> to vector<2048x128xf32>
    %16 = arith.subf %3, %15 : vector<2048x128xf32>
    %cst_8 = arith.constant 9.99999974E-6 : f32
    %17 = vector.broadcast %cst_8 : f32 to vector<1x128xf32>
    %18 = arith.addf %14, %17 : vector<1x128xf32>
    %19 = math.rsqrt %18 : vector<1x128xf32>
    %20 = vector.broadcast %19 : vector<1x128xf32> to vector<2048x128xf32>
    %21 = arith.mulf %16, %20 : vector<2048x128xf32>
    %c0_9 = arith.constant 0 : index
    %c0_10 = arith.constant 0 : index
    %22 = vector.load %arg3[%c0_9, %c0_10] : memref<1x128xf32, #tpu.memory_space<vmem>>, vector<1x128xf32>
    %23 = vector.broadcast %22 : vector<1x128xf32> to vector<2048x128xf32>
    %24 = arith.mulf %21, %23 : vector<2048x128xf32>
    %c0_11 = arith.constant 0 : index
    %c0_12 = arith.constant 0 : index
    %25 = vector.load %arg4[%c0_11, %c0_12] : memref<1x128xf32, #tpu.memory_space<vmem>>, vector<1x128xf32>
    %26 = vector.broadcast %25 : vector<1x128xf32> to vector<2048x128xf32>
    %27 = arith.addf %24, %26 : vector<2048x128xf32>
    %cst_13 = arith.constant 0.000000e+00 : f32
    %28 = vector.broadcast %cst_13 : f32 to vector<2048x128xf32>
    %29 = arith.maximumf %27, %28 : vector<2048x128xf32>
    %c0_14 = arith.constant 0 : index
    %c0_15 = arith.constant 0 : index
    %30 = vector.load %arg5[%c0_14, %c0_15] : memref<8x2048xbf16, #tpu.memory_space<vmem>>, vector<8x2048xbf16>
    %31 = arith.truncf %29 : vector<2048x128xf32> to vector<2048x128xbf16>
    %cst_16 = arith.constant dense<0.000000e+00> : vector<8x128xf32>
    %32 = tpu.matmul %30, %31, %cst_16 {dimension_numbers = #tpu.dot_dimension_numbers<[1], [0], [0], [1], [0, 0, 1, 1], [], []>} : vector<8x2048xbf16>, vector<2048x128xbf16>, vector<8x128xf32> -> vector<8x128xf32>
    %33 = arith.truncf %32 : vector<8x128xf32> to vector<8x128xbf16>
    %c0_17 = arith.constant 0 : index
    %c0_18 = arith.constant 0 : index
    %c0_19 = arith.constant 0 : index
    %34 = vector.load %arg6[%c0_17, %c0_18, %c0_19] : memref<1x8x128xbf16, #tpu.memory_space<vmem>>, vector<1x8x128xbf16>
    %35 = vector.shape_cast %34 : vector<1x8x128xbf16> to vector<8x128xbf16>
    %36 = vector.shape_cast %33 : vector<8x128xbf16> to vector<1x8x128xbf16>
    tpu.vector_store %arg6[%c0_17, %c0_18, %c0_19], %36 {strides = array<i32>} : memref<1x8x128xbf16, #tpu.memory_space<vmem>>, vector<1x8x128xbf16>,
    return
  }
  func.func @transform_0(%arg0: i32) -> (i32, i32, i32) {
    %c0_i32 = arith.constant 0 : i32
    %c0_i32_0 = arith.constant 0 : i32
    %c0_i32_1 = arith.constant 0 : i32
    return %arg0, %c0_i32, %c0_i32_0 : i32, i32, i32
  }
  func.func @transform_1(%arg0: i32) -> (i32, i32) {
    %c0_i32 = arith.constant 0 : i32
    %c0_i32_0 = arith.constant 0 : i32
    %c0_i32_1 = arith.constant 0 : i32
    return %c0_i32, %c0_i32_0 : i32, i32
  }
  func.func @transform_2(%arg0: i32) -> (i32, i32) {
    %c0_i32 = arith.constant 0 : i32
    %c0_i32_0 = arith.constant 0 : i32
    %c0_i32_1 = arith.constant 0 : i32
    return %c0_i32, %c0_i32_0 : i32, i32
  }
  func.func @transform_3(%arg0: i32) -> (i32, i32) {
    %c0_i32 = arith.constant 0 : i32
    %c0_i32_0 = arith.constant 0 : i32
    %c0_i32_1 = arith.constant 0 : i32
    return %c0_i32, %c0_i32_0 : i32, i32
  }
  func.func @transform_4(%arg0: i32) -> (i32, i32) {
    %c0_i32 = arith.constant 0 : i32
    %c0_i32_0 = arith.constant 0 : i32
    %c0_i32_1 = arith.constant 0 : i32
    return %c0_i32, %c0_i32_0 : i32, i32
  }
  func.func @transform_5(%arg0: i32) -> (i32, i32, i32) {
    %c0_i32 = arith.constant 0 : i32
    %c0_i32_0 = arith.constant 0 : i32
    %c0_i32_1 = arith.constant 0 : i32
    return %arg0, %c0_i32, %c0_i32_0 : i32, i32, i32
  }
}

module attributes {stable_mosaic.version = 11 : i64} {
  func.func @mlp_heads_kernel(%arg0: i32, %arg1: memref<1x8x128xbf16, #tpu.memory_space<vmem>>, %arg2: memref<128x128xbf16, #tpu.memory_space<vmem>>, %arg3: memref<1x128xf32, #tpu.memory_space<vmem>>, %arg4: memref<1x128xf32, #tpu.memory_space<vmem>>, %arg5: memref<128x128xbf16, #tpu.memory_space<vmem>>, %arg6: memref<1x128xf32, #tpu.memory_space<vmem>>, %arg7: memref<1x128xf32, #tpu.memory_space<vmem>>, %arg8: memref<128x128xbf16, #tpu.memory_space<vmem>>, %arg9: memref<128x128xbf16, #tpu.memory_space<vmem>>, %arg10: memref<1x128xf32, #tpu.memory_space<vmem>>, %arg11: memref<1x128xf32, #tpu.memory_space<vmem>>, %arg12: memref<128x128xbf16, #tpu.memory_space<vmem>>, %arg13: memref<1x128xf32, #tpu.memory_space<vmem>>, %arg14: memref<128x128xbf16, #tpu.memory_space<vmem>>, %arg15: memref<1x128xf32, #tpu.memory_space<vmem>>, %arg16: memref<1x8x128xf32, #tpu.memory_space<vmem>>, %arg17: memref<1x8x128xf32, #tpu.memory_space<vmem>>, %arg18: memref<1x8x128xf32, #tpu.memory_space<vmem>>) attributes {dimension_semantics = [#tpu.dimension_semantics<parallel>], iteration_bounds = array<i64: 2>, scalar_prefetch = 0 : i64, scratch_operands = 0 : i64, tpu.core_type = #tpu.core_type<tc>, window_params = [{transform_indices = @transform_0, window_bounds = array<i64: 1, 8, 128>}, {pipeline_mode = #tpu.pipeline_mode<synchronous>, transform_indices = @transform_1, window_bounds = array<i64: 128, 128>}, {pipeline_mode = #tpu.pipeline_mode<synchronous>, transform_indices = @transform_2, window_bounds = array<i64: 1, 128>}, {pipeline_mode = #tpu.pipeline_mode<synchronous>, transform_indices = @transform_3, window_bounds = array<i64: 1, 128>}, {pipeline_mode = #tpu.pipeline_mode<synchronous>, transform_indices = @transform_4, window_bounds = array<i64: 128, 128>}, {pipeline_mode = #tpu.pipeline_mode<synchronous>, transform_indices = @transform_5, window_bounds = array<i64: 1, 128>}, {pipeline_mode = #tpu.pipeline_mode<synchronous>, transform_indices = @transform_6, window_bounds = array<i64: 1, 128>}, {pipeline_mode = #tpu.pipeline_mode<synchronous>, transform_indices = @transform_7, window_bounds = array<i64: 128, 128>}, {pipeline_mode = #tpu.pipeline_mode<synchronous>, transform_indices = @transform_8, window_bounds = array<i64: 128, 128>}, {pipeline_mode = #tpu.pipeline_mode<synchronous>, transform_indices = @transform_9, window_bounds = array<i64: 1, 128>}, {pipeline_mode = #tpu.pipeline_mode<synchronous>, transform_indices = @transform_10, window_bounds = array<i64: 1, 128>}, {pipeline_mode = #tpu.pipeline_mode<synchronous>, transform_indices = @transform_11, window_bounds = array<i64: 128, 128>}, {pipeline_mode = #tpu.pipeline_mode<synchronous>, transform_indices = @transform_12, window_bounds = array<i64: 1, 128>}, {pipeline_mode = #tpu.pipeline_mode<synchronous>, transform_indices = @transform_13, window_bounds = array<i64: 128, 128>}, {pipeline_mode = #tpu.pipeline_mode<synchronous>, transform_indices = @transform_14, window_bounds = array<i64: 1, 128>}, {transform_indices = @transform_15, window_bounds = array<i64: 1, 8, 128>}, {transform_indices = @transform_16, window_bounds = array<i64: 1, 8, 128>}, {transform_indices = @transform_17, window_bounds = array<i64: 1, 8, 128>}]} {
    %c0 = arith.constant 0 : index
    %c0_0 = arith.constant 0 : index
    %c0_1 = arith.constant 0 : index
    %0 = vector.load %arg1[%c0, %c0_0, %c0_1] : memref<1x8x128xbf16, #tpu.memory_space<vmem>>, vector<1x8x128xbf16>
    %1 = vector.shape_cast %0 : vector<1x8x128xbf16> to vector<8x128xbf16>
    %c0_2 = arith.constant 0 : index
    %c0_3 = arith.constant 0 : index
    %2 = vector.load %arg2[%c0_2, %c0_3] : memref<128x128xbf16, #tpu.memory_space<vmem>>, vector<128x128xbf16>
    %cst = arith.constant dense<0.000000e+00> : vector<8x128xf32>
    %3 = tpu.matmul %1, %2, %cst {dimension_numbers = #tpu.dot_dimension_numbers<[1], [0], [0], [1], [0, 0, 1, 1], [], []>} : vector<8x128xbf16>, vector<128x128xbf16>, vector<8x128xf32> -> vector<8x128xf32>
    %cst_4 = arith.constant dense<0.000000e+00> : vector<128xf32>
    %4 = vector.multi_reduction <add>, %3, %cst_4 [0] : vector<8x128xf32> to vector<128xf32>
    %5 = vector.shape_cast %4 : vector<128xf32> to vector<1x128xf32>
    %cst_5 = arith.constant 8.000000e+00 : f32
    %6 = vector.broadcast %cst_5 : f32 to vector<1x128xf32>
    %7 = arith.divf %5, %6 : vector<1x128xf32>
    %8 = vector.broadcast %7 : vector<1x128xf32> to vector<8x128xf32>
    %9 = arith.subf %3, %8 : vector<8x128xf32>
    %10 = arith.mulf %9, %9 : vector<8x128xf32>
    %cst_6 = arith.constant dense<0.000000e+00> : vector<128xf32>
    %11 = vector.multi_reduction <add>, %10, %cst_6 [0] : vector<8x128xf32> to vector<128xf32>
    %12 = vector.shape_cast %11 : vector<128xf32> to vector<1x128xf32>
    %cst_7 = arith.constant 8.000000e+00 : f32
    %13 = vector.broadcast %cst_7 : f32 to vector<1x128xf32>
    %14 = arith.divf %12, %13 : vector<1x128xf32>
    %15 = vector.broadcast %7 : vector<1x128xf32> to vector<8x128xf32>
    %16 = arith.subf %3, %15 : vector<8x128xf32>
    %cst_8 = arith.constant 9.99999974E-6 : f32
    %17 = vector.broadcast %cst_8 : f32 to vector<1x128xf32>
    %18 = arith.addf %14, %17 : vector<1x128xf32>
    %19 = math.rsqrt %18 : vector<1x128xf32>
    %20 = vector.broadcast %19 : vector<1x128xf32> to vector<8x128xf32>
    %21 = arith.mulf %16, %20 : vector<8x128xf32>
    %c0_9 = arith.constant 0 : index
    %c0_10 = arith.constant 0 : index
    %22 = vector.load %arg3[%c0_9, %c0_10] : memref<1x128xf32, #tpu.memory_space<vmem>>, vector<1x128xf32>
    %23 = vector.broadcast %22 : vector<1x128xf32> to vector<8x128xf32>
    %24 = arith.mulf %21, %23 : vector<8x128xf32>
    %c0_11 = arith.constant 0 : index
    %c0_12 = arith.constant 0 : index
    %25 = vector.load %arg4[%c0_11, %c0_12] : memref<1x128xf32, #tpu.memory_space<vmem>>, vector<1x128xf32>
    %26 = vector.broadcast %25 : vector<1x128xf32> to vector<8x128xf32>
    %27 = arith.addf %24, %26 : vector<8x128xf32>
    %cst_13 = arith.constant 0.000000e+00 : f32
    %28 = vector.broadcast %cst_13 : f32 to vector<8x128xf32>
    %29 = arith.maximumf %27, %28 : vector<8x128xf32>
    %30 = arith.truncf %29 : vector<8x128xf32> to vector<8x128xbf16>
    %c0_14 = arith.constant 0 : index
    %c0_15 = arith.constant 0 : index
    %31 = vector.load %arg5[%c0_14, %c0_15] : memref<128x128xbf16, #tpu.memory_space<vmem>>, vector<128x128xbf16>
    %cst_16 = arith.constant dense<0.000000e+00> : vector<8x128xf32>
    %32 = tpu.matmul %30, %31, %cst_16 {dimension_numbers = #tpu.dot_dimension_numbers<[1], [0], [0], [1], [0, 0, 1, 1], [], []>} : vector<8x128xbf16>, vector<128x128xbf16>, vector<8x128xf32> -> vector<8x128xf32>
    %cst_17 = arith.constant dense<0.000000e+00> : vector<128xf32>
    %33 = vector.multi_reduction <add>, %32, %cst_17 [0] : vector<8x128xf32> to vector<128xf32>
    %34 = vector.shape_cast %33 : vector<128xf32> to vector<1x128xf32>
    %cst_18 = arith.constant 8.000000e+00 : f32
    %35 = vector.broadcast %cst_18 : f32 to vector<1x128xf32>
    %36 = arith.divf %34, %35 : vector<1x128xf32>
    %37 = vector.broadcast %36 : vector<1x128xf32> to vector<8x128xf32>
    %38 = arith.subf %32, %37 : vector<8x128xf32>
    %39 = arith.mulf %38, %38 : vector<8x128xf32>
    %cst_19 = arith.constant dense<0.000000e+00> : vector<128xf32>
    %40 = vector.multi_reduction <add>, %39, %cst_19 [0] : vector<8x128xf32> to vector<128xf32>
    %41 = vector.shape_cast %40 : vector<128xf32> to vector<1x128xf32>
    %cst_20 = arith.constant 8.000000e+00 : f32
    %42 = vector.broadcast %cst_20 : f32 to vector<1x128xf32>
    %43 = arith.divf %41, %42 : vector<1x128xf32>
    %44 = vector.broadcast %36 : vector<1x128xf32> to vector<8x128xf32>
    %45 = arith.subf %32, %44 : vector<8x128xf32>
    %cst_21 = arith.constant 9.99999974E-6 : f32
    %46 = vector.broadcast %cst_21 : f32 to vector<1x128xf32>
    %47 = arith.addf %43, %46 : vector<1x128xf32>
    %48 = math.rsqrt %47 : vector<1x128xf32>
    %49 = vector.broadcast %48 : vector<1x128xf32> to vector<8x128xf32>
    %50 = arith.mulf %45, %49 : vector<8x128xf32>
    %c0_22 = arith.constant 0 : index
    %c0_23 = arith.constant 0 : index
    %51 = vector.load %arg6[%c0_22, %c0_23] : memref<1x128xf32, #tpu.memory_space<vmem>>, vector<1x128xf32>
    %52 = vector.broadcast %51 : vector<1x128xf32> to vector<8x128xf32>
    %53 = arith.mulf %50, %52 : vector<8x128xf32>
    %c0_24 = arith.constant 0 : index
    %c0_25 = arith.constant 0 : index
    %54 = vector.load %arg7[%c0_24, %c0_25] : memref<1x128xf32, #tpu.memory_space<vmem>>, vector<1x128xf32>
    %55 = vector.broadcast %54 : vector<1x128xf32> to vector<8x128xf32>
    %56 = arith.addf %53, %55 : vector<8x128xf32>
    %cst_26 = arith.constant 0.000000e+00 : f32
    %57 = vector.broadcast %cst_26 : f32 to vector<8x128xf32>
    %58 = arith.maximumf %56, %57 : vector<8x128xf32>
    %59 = arith.truncf %58 : vector<8x128xf32> to vector<8x128xbf16>
    %c0_27 = arith.constant 0 : index
    %c0_28 = arith.constant 0 : index
    %60 = vector.load %arg8[%c0_27, %c0_28] : memref<128x128xbf16, #tpu.memory_space<vmem>>, vector<128x128xbf16>
    %cst_29 = arith.constant dense<0.000000e+00> : vector<8x128xf32>
    %61 = tpu.matmul %59, %60, %cst_29 {dimension_numbers = #tpu.dot_dimension_numbers<[1], [0], [0], [1], [0, 0, 1, 1], [], []>} : vector<8x128xbf16>, vector<128x128xbf16>, vector<8x128xf32> -> vector<8x128xf32>
    %cst_30 = arith.constant dense<0.000000e+00> : vector<128xf32>
    %62 = vector.multi_reduction <add>, %61, %cst_30 [0] : vector<8x128xf32> to vector<128xf32>
    %63 = vector.shape_cast %62 : vector<128xf32> to vector<1x128xf32>
    %cst_31 = arith.constant 8.000000e+00 : f32
    %64 = vector.broadcast %cst_31 : f32 to vector<1x128xf32>
    %65 = arith.divf %63, %64 : vector<1x128xf32>
    %66 = vector.broadcast %65 : vector<1x128xf32> to vector<8x128xf32>
    %67 = arith.subf %61, %66 : vector<8x128xf32>
    %68 = arith.mulf %67, %67 : vector<8x128xf32>
    %cst_32 = arith.constant dense<0.000000e+00> : vector<128xf32>
    %69 = vector.multi_reduction <add>, %68, %cst_32 [0] : vector<8x128xf32> to vector<128xf32>
    %70 = vector.shape_cast %69 : vector<128xf32> to vector<1x128xf32>
    %cst_33 = arith.constant 8.000000e+00 : f32
    %71 = vector.broadcast %cst_33 : f32 to vector<1x128xf32>
    %72 = arith.divf %70, %71 : vector<1x128xf32>
    %73 = vector.broadcast %65 : vector<1x128xf32> to vector<8x128xf32>
    %74 = arith.subf %61, %73 : vector<8x128xf32>
    %cst_34 = arith.constant 9.99999974E-6 : f32
    %75 = vector.broadcast %cst_34 : f32 to vector<1x128xf32>
    %76 = arith.addf %72, %75 : vector<1x128xf32>
    %77 = math.rsqrt %76 : vector<1x128xf32>
    %78 = vector.broadcast %77 : vector<1x128xf32> to vector<8x128xf32>
    %79 = arith.mulf %74, %78 : vector<8x128xf32>
    %80 = arith.truncf %79 : vector<8x128xf32> to vector<8x128xbf16>
    %c0_35 = arith.constant 0 : index
    %c0_36 = arith.constant 0 : index
    %81 = vector.load %arg9[%c0_35, %c0_36] : memref<128x128xbf16, #tpu.memory_space<vmem>>, vector<128x128xbf16>
    %cst_37 = arith.constant dense<0.000000e+00> : vector<8x128xf32>
    %82 = tpu.matmul %80, %81, %cst_37 {dimension_numbers = #tpu.dot_dimension_numbers<[1], [0], [0], [1], [0, 0, 1, 1], [], []>} : vector<8x128xbf16>, vector<128x128xbf16>, vector<8x128xf32> -> vector<8x128xf32>
    %cst_38 = arith.constant dense<0.000000e+00> : vector<128xf32>
    %83 = vector.multi_reduction <add>, %82, %cst_38 [0] : vector<8x128xf32> to vector<128xf32>
    %84 = vector.shape_cast %83 : vector<128xf32> to vector<1x128xf32>
    %cst_39 = arith.constant 8.000000e+00 : f32
    %85 = vector.broadcast %cst_39 : f32 to vector<1x128xf32>
    %86 = arith.divf %84, %85 : vector<1x128xf32>
    %87 = vector.broadcast %86 : vector<1x128xf32> to vector<8x128xf32>
    %88 = arith.subf %82, %87 : vector<8x128xf32>
    %89 = arith.mulf %88, %88 : vector<8x128xf32>
    %cst_40 = arith.constant dense<0.000000e+00> : vector<128xf32>
    %90 = vector.multi_reduction <add>, %89, %cst_40 [0] : vector<8x128xf32> to vector<128xf32>
    %91 = vector.shape_cast %90 : vector<128xf32> to vector<1x128xf32>
    %cst_41 = arith.constant 8.000000e+00 : f32
    %92 = vector.broadcast %cst_41 : f32 to vector<1x128xf32>
    %93 = arith.divf %91, %92 : vector<1x128xf32>
    %94 = vector.broadcast %86 : vector<1x128xf32> to vector<8x128xf32>
    %95 = arith.subf %82, %94 : vector<8x128xf32>
    %cst_42 = arith.constant 9.99999974E-6 : f32
    %96 = vector.broadcast %cst_42 : f32 to vector<1x128xf32>
    %97 = arith.addf %93, %96 : vector<1x128xf32>
    %98 = math.rsqrt %97 : vector<1x128xf32>
    %99 = vector.broadcast %98 : vector<1x128xf32> to vector<8x128xf32>
    %100 = arith.mulf %95, %99 : vector<8x128xf32>
    %c0_43 = arith.constant 0 : index
    %c0_44 = arith.constant 0 : index
    %101 = vector.load %arg10[%c0_43, %c0_44] : memref<1x128xf32, #tpu.memory_space<vmem>>, vector<1x128xf32>
    %102 = vector.broadcast %101 : vector<1x128xf32> to vector<8x128xf32>
    %103 = arith.mulf %100, %102 : vector<8x128xf32>
    %c0_45 = arith.constant 0 : index
    %c0_46 = arith.constant 0 : index
    %104 = vector.load %arg11[%c0_45, %c0_46] : memref<1x128xf32, #tpu.memory_space<vmem>>, vector<1x128xf32>
    %105 = vector.broadcast %104 : vector<1x128xf32> to vector<8x128xf32>
    %106 = arith.addf %103, %105 : vector<8x128xf32>
    %cst_47 = arith.constant 0.000000e+00 : f32
    %107 = vector.broadcast %cst_47 : f32 to vector<8x128xf32>
    %108 = arith.maximumf %106, %107 : vector<8x128xf32>
    %109 = arith.truncf %108 : vector<8x128xf32> to vector<8x128xbf16>
    %c0_48 = arith.constant 0 : index
    %c0_49 = arith.constant 0 : index
    %110 = vector.load %arg12[%c0_48, %c0_49] : memref<128x128xbf16, #tpu.memory_space<vmem>>, vector<128x128xbf16>
    %cst_50 = arith.constant dense<0.000000e+00> : vector<8x128xf32>
    %111 = tpu.matmul %109, %110, %cst_50 {dimension_numbers = #tpu.dot_dimension_numbers<[1], [0], [0], [1], [0, 0, 1, 1], [], []>} : vector<8x128xbf16>, vector<128x128xbf16>, vector<8x128xf32> -> vector<8x128xf32>
    %c0_51 = arith.constant 0 : index
    %c0_52 = arith.constant 0 : index
    %112 = vector.load %arg13[%c0_51, %c0_52] : memref<1x128xf32, #tpu.memory_space<vmem>>, vector<1x128xf32>
    %113 = vector.broadcast %112 : vector<1x128xf32> to vector<8x128xf32>
    %114 = arith.addf %111, %113 : vector<8x128xf32>
    %c0_53 = arith.constant 0 : index
    %c0_54 = arith.constant 0 : index
    %115 = vector.load %arg14[%c0_53, %c0_54] : memref<128x128xbf16, #tpu.memory_space<vmem>>, vector<128x128xbf16>
    %cst_55 = arith.constant dense<0.000000e+00> : vector<8x128xf32>
    %116 = tpu.matmul %1, %115, %cst_55 {dimension_numbers = #tpu.dot_dimension_numbers<[1], [0], [0], [1], [0, 0, 1, 1], [], []>} : vector<8x128xbf16>, vector<128x128xbf16>, vector<8x128xf32> -> vector<8x128xf32>
    %c0_56 = arith.constant 0 : index
    %c0_57 = arith.constant 0 : index
    %117 = vector.load %arg15[%c0_56, %c0_57] : memref<1x128xf32, #tpu.memory_space<vmem>>, vector<1x128xf32>
    %118 = vector.broadcast %117 : vector<1x128xf32> to vector<8x128xf32>
    %119 = arith.addf %116, %118 : vector<8x128xf32>
    %c0_58 = arith.constant 0 : index
    %c0_59 = arith.constant 0 : index
    %c0_60 = arith.constant 0 : index
    %120 = vector.load %arg16[%c0_58, %c0_59, %c0_60] : memref<1x8x128xf32, #tpu.memory_space<vmem>>, vector<1x8x128xf32>
    %121 = vector.shape_cast %120 : vector<1x8x128xf32> to vector<8x128xf32>
    %122 = vector.shape_cast %79 : vector<8x128xf32> to vector<1x8x128xf32>
    tpu.vector_store %arg16[%c0_58, %c0_59, %c0_60], %122 {strides = array<i32>} : memref<1x8x128xf32, #tpu.memory_space<vmem>>, vector<1x8x128xf32>,
    %c0_61 = arith.constant 0 : index
    %c0_62 = arith.constant 0 : index
    %c0_63 = arith.constant 0 : index
    %123 = vector.load %arg17[%c0_61, %c0_62, %c0_63] : memref<1x8x128xf32, #tpu.memory_space<vmem>>, vector<1x8x128xf32>
    %124 = vector.shape_cast %123 : vector<1x8x128xf32> to vector<8x128xf32>
    %125 = vector.shape_cast %114 : vector<8x128xf32> to vector<1x8x128xf32>
    tpu.vector_store %arg17[%c0_61, %c0_62, %c0_63], %125 {strides = array<i32>} : memref<1x8x128xf32, #tpu.memory_space<vmem>>, vector<1x8x128xf32>,
    %c0_64 = arith.constant 0 : index
    %c0_65 = arith.constant 0 : index
    %c0_66 = arith.constant 0 : index
    %126 = vector.load %arg18[%c0_64, %c0_65, %c0_66] : memref<1x8x128xf32, #tpu.memory_space<vmem>>, vector<1x8x128xf32>
    %127 = vector.shape_cast %126 : vector<1x8x128xf32> to vector<8x128xf32>
    %128 = vector.shape_cast %119 : vector<8x128xf32> to vector<1x8x128xf32>
    tpu.vector_store %arg18[%c0_64, %c0_65, %c0_66], %128 {strides = array<i32>} : memref<1x8x128xf32, #tpu.memory_space<vmem>>, vector<1x8x128xf32>,
    return
  }
  func.func @transform_0(%arg0: i32) -> (i32, i32, i32) {
    %c0_i32 = arith.constant 0 : i32
    %c0_i32_0 = arith.constant 0 : i32
    %c0_i32_1 = arith.constant 0 : i32
    return %arg0, %c0_i32, %c0_i32_0 : i32, i32, i32
  }
  func.func @transform_1(%arg0: i32) -> (i32, i32) {
    %c0_i32 = arith.constant 0 : i32
    %c0_i32_0 = arith.constant 0 : i32
    %c0_i32_1 = arith.constant 0 : i32
    return %c0_i32, %c0_i32_0 : i32, i32
  }
  func.func @transform_2(%arg0: i32) -> (i32, i32) {
    %c0_i32 = arith.constant 0 : i32
    %c0_i32_0 = arith.constant 0 : i32
    %c0_i32_1 = arith.constant 0 : i32
    return %c0_i32, %c0_i32_0 : i32, i32
  }
  func.func @transform_3(%arg0: i32) -> (i32, i32) {
    %c0_i32 = arith.constant 0 : i32
    %c0_i32_0 = arith.constant 0 : i32
    %c0_i32_1 = arith.constant 0 : i32
    return %c0_i32, %c0_i32_0 : i32, i32
  }
  func.func @transform_4(%arg0: i32) -> (i32, i32) {
    %c0_i32 = arith.constant 0 : i32
    %c0_i32_0 = arith.constant 0 : i32
    %c0_i32_1 = arith.constant 0 : i32
    return %c0_i32, %c0_i32_0 : i32, i32
  }
  func.func @transform_5(%arg0: i32) -> (i32, i32) {
    %c0_i32 = arith.constant 0 : i32
    %c0_i32_0 = arith.constant 0 : i32
    %c0_i32_1 = arith.constant 0 : i32
    return %c0_i32, %c0_i32_0 : i32, i32
  }
  func.func @transform_6(%arg0: i32) -> (i32, i32) {
    %c0_i32 = arith.constant 0 : i32
    %c0_i32_0 = arith.constant 0 : i32
    %c0_i32_1 = arith.constant 0 : i32
    return %c0_i32, %c0_i32_0 : i32, i32
  }
  func.func @transform_7(%arg0: i32) -> (i32, i32) {
    %c0_i32 = arith.constant 0 : i32
    %c0_i32_0 = arith.constant 0 : i32
    %c0_i32_1 = arith.constant 0 : i32
    return %c0_i32, %c0_i32_0 : i32, i32
  }
  func.func @transform_8(%arg0: i32) -> (i32, i32) {
    %c0_i32 = arith.constant 0 : i32
    %c0_i32_0 = arith.constant 0 : i32
    %c0_i32_1 = arith.constant 0 : i32
    return %c0_i32, %c0_i32_0 : i32, i32
  }
  func.func @transform_9(%arg0: i32) -> (i32, i32) {
    %c0_i32 = arith.constant 0 : i32
    %c0_i32_0 = arith.constant 0 : i32
    %c0_i32_1 = arith.constant 0 : i32
    return %c0_i32, %c0_i32_0 : i32, i32
  }
  func.func @transform_10(%arg0: i32) -> (i32, i32) {
    %c0_i32 = arith.constant 0 : i32
    %c0_i32_0 = arith.constant 0 : i32
    %c0_i32_1 = arith.constant 0 : i32
    return %c0_i32, %c0_i32_0 : i32, i32
  }
  func.func @transform_11(%arg0: i32) -> (i32, i32) {
    %c0_i32 = arith.constant 0 : i32
    %c0_i32_0 = arith.constant 0 : i32
    %c0_i32_1 = arith.constant 0 : i32
    return %c0_i32, %c0_i32_0 : i32, i32
  }
  func.func @transform_12(%arg0: i32) -> (i32, i32) {
    %c0_i32 = arith.constant 0 : i32
    %c0_i32_0 = arith.constant 0 : i32
    %c0_i32_1 = arith.constant 0 : i32
    return %c0_i32, %c0_i32_0 : i32, i32
  }
  func.func @transform_13(%arg0: i32) -> (i32, i32) {
    %c0_i32 = arith.constant 0 : i32
    %c0_i32_0 = arith.constant 0 : i32
    %c0_i32_1 = arith.constant 0 : i32
    return %c0_i32, %c0_i32_0 : i32, i32
  }
  func.func @transform_14(%arg0: i32) -> (i32, i32) {
    %c0_i32 = arith.constant 0 : i32
    %c0_i32_0 = arith.constant 0 : i32
    %c0_i32_1 = arith.constant 0 : i32
    return %c0_i32, %c0_i32_0 : i32, i32
  }
  func.func @transform_15(%arg0: i32) -> (i32, i32, i32) {
    %c0_i32 = arith.constant 0 : i32
    %c0_i32_0 = arith.constant 0 : i32
    %c0_i32_1 = arith.constant 0 : i32
    return %arg0, %c0_i32, %c0_i32_0 : i32, i32, i32
  }
  func.func @transform_16(%arg0: i32) -> (i32, i32, i32) {
    %c0_i32 = arith.constant 0 : i32
    %c0_i32_0 = arith.constant 0 : i32
    %c0_i32_1 = arith.constant 0 : i32
    return %arg0, %c0_i32, %c0_i32_0 : i32, i32, i32
  }
  func.func @transform_17(%arg0: i32) -> (i32, i32, i32) {
    %c0_i32 = arith.constant 0 : i32
    %c0_i32_0 = arith.constant 0 : i32
    %c0_i32_1 = arith.constant 0 : i32
    return %arg0, %c0_i32, %c0_i32_0 : i32, i32, i32
  }
}

</mosaic_0001>

<llo_original>
// kernel: simsiam_forward.3
$region0: #{simsiam_forward.3}
  #allocation0 [shape = 'u32[]', space=smem, size = 0x4, offset = 0x4, fixed_abs, tag = 'smem constant byte address 0x4 - core index']
  #allocation1 [shape = 'u32[72,128]{1,0:T(1,128)}', space=vmem, size = 0x9000, scoped, tag = 'internal scratch']
  %s0 = inlined_call_operand.vmem [shape: bf16[2,8,128], index: 0, kind: input, shape index: {}]
  %s1 = inlined_call_operand.vmem [shape: bf16[128,128], index: 1, kind: input, shape index: {}]
  %s2 = inlined_call_operand.vmem [shape: f32[1,128], index: 2, kind: input, shape index: {}]
  %s3 = inlined_call_operand.vmem [shape: f32[1,128], index: 3, kind: input, shape index: {}]
  %s4 = inlined_call_operand.vmem [shape: bf16[128,128], index: 4, kind: input, shape index: {}]
  %s5 = inlined_call_operand.vmem [shape: f32[1,128], index: 5, kind: input, shape index: {}]
  %s6 = inlined_call_operand.vmem [shape: f32[1,128], index: 6, kind: input, shape index: {}]
  %s7 = inlined_call_operand.vmem [shape: bf16[128,128], index: 7, kind: input, shape index: {}]
  %s8 = inlined_call_operand.vmem [shape: bf16[128,128], index: 8, kind: input, shape index: {}]
  %s9 = inlined_call_operand.vmem [shape: f32[1,128], index: 9, kind: input, shape index: {}]
  %s10 = inlined_call_operand.vmem [shape: f32[1,128], index: 10, kind: input, shape index: {}]
  %s11 = inlined_call_operand.vmem [shape: bf16[128,128], index: 11, kind: input, shape index: {}]
  %s12 = inlined_call_operand.vmem [shape: f32[1,128], index: 12, kind: input, shape index: {}]
  %s13 = inlined_call_operand.vmem [shape: bf16[128,128], index: 13, kind: input, shape index: {}]
  %s14 = inlined_call_operand.vmem [shape: f32[1,128], index: 14, kind: input, shape index: {}]
  %s15 = inlined_call_operand.vmem [shape: f32[2,8,128], index: 15, kind: output, shape index: {0}]
  %s16 = inlined_call_operand.vmem [shape: f32[2,8,128], index: 16, kind: output, shape index: {1}]
  %s17 = inlined_call_operand.vmem [shape: f32[2,8,128], index: 17, kind: output, shape index: {2}]
  %18 = xla_tuple %s15, %s16, %s17
  %s19 = sld [smem:[#allocation0]]
  $region109: #{simsiam_forward.3} parent=0
    _
  %s21 = ssub.s32 1, %s19
  %s22 = scalar_select 0, %s21, %s19
  loop: start=0, step=1, limit=4
  $region2: #{simsiam_forward.3} parent=0 // loop_pre_header
    _
  $region3: #{simsiam_forward.3} parent=0 // loop_header
    %s24 = sphi 0, %s28
    %p25 = scmp.ge.s32.totalorder %s24, 4
    %s34 = sphi 0, %s36
    %s37 = sphi 0, %s34
    %s38 = sphi 0, %s37
    %s54 = sphi 0, %s38
    %s58 = sphi 0, %s58
    %s60 = sphi 0, %s58
    %s61 = sphi 0, %s60
    %s75 = sphi 0, %s61
    %s79 = sphi 0, %s79
    %s81 = sphi 0, %s79
    %s82 = sphi 0, %s81
    %s96 = sphi 0, %s82
    %s100 = sphi 0, %s100
    %s102 = sphi 0, %s100
    %s103 = sphi 0, %s102
    %s117 = sphi 0, %s103
    %s121 = sphi 0, %s121
    %s123 = sphi 0, %s121
    %s124 = sphi 0, %s123
    %s138 = sphi 0, %s124
    %s142 = sphi 0, %s142
    %s144 = sphi 0, %s142
    %s145 = sphi 0, %s144
    %s159 = sphi 0, %s145
    %s163 = sphi 0, %s163
    %s165 = sphi 0, %s163
    %s166 = sphi 0, %s165
    %s180 = sphi 0, %s166
    %s184 = sphi 0, %s184
    %s186 = sphi 0, %s184
    %s187 = sphi 0, %s186
    %s201 = sphi 0, %s187
    %s205 = sphi 0, %s205
    %s207 = sphi 0, %s205
    %s208 = sphi 0, %s207
    %s222 = sphi 0, %s208
    %s226 = sphi 0, %s226
    %s228 = sphi 0, %s226
    %s229 = sphi 0, %s228
    %s243 = sphi 0, %s229
    %s247 = sphi 0, %s247
    %s249 = sphi 0, %s247
    %s250 = sphi 0, %s249
    %s264 = sphi 0, %s250
    %s268 = sphi 0, %s268
    %s270 = sphi 0, %s268
    %s271 = sphi 0, %s270
    %s285 = sphi 0, %s271
    %s289 = sphi 0, %s289
    %s291 = sphi 0, %s289
    %s292 = sphi 0, %s291
    %s306 = sphi 0, %s292
    %s310 = sphi 0, %s310
    %s312 = sphi 0, %s310
    %s313 = sphi 0, %s312
    %s327 = sphi 0, %s313
    %s331 = sphi 0, %s331
    %s333 = sphi 0, %s331
    %s334 = sphi 0, %s333
    %s348 = sphi 0, %s334
    %s354 = sphi 0, %s356
    %s357 = sphi 0, %s354
    %s358 = sphi 0, %s357
    %s374 = sphi 0, %s358
    %s380 = sphi 0, %s382
    %s383 = sphi 0, %s380
    %s384 = sphi 0, %s383
    %s400 = sphi 0, %s384
    %s406 = sphi 0, %s408
    %s409 = sphi 0, %s406
    %s410 = sphi 0, %s409
    %s426 = sphi 0, %s410
  $region4: #{simsiam_forward.3} parent=0 // loop_header_branch
    %27 = sbr.rel (%p25) target = $region8
  $region5: #{simsiam_forward.3} parent=0 // loop_body
    %s29 = ssub.s32 %s24, 1
    %s30 = ssub.s32 %s24, 2
    %s31 = sadd.s32 %s24, 1
    %s32 = ssub.s32 %s24, %s31
    %p33 = scmp.eq.s32.totalorder %s32, 0
    %s35 = sadd.s32 %s34, 1
    %s36 = scalar_select %p33, %s34, %s35
    %p39 = pneg %p33
    %p40 = scmp.eq.s32.totalorder %s24, 1
    %p41 = por %p39, %p40
    %p42 = scmp.ne.s32.totalorder %s34, %s37
    %p43 = scmp.eq.s32.totalorder %s24, 0
    %p44 = por %p42, %p43
    %p45 = scmp.ne.s32.totalorder %s34, %s37
    %p46 = scmp.eq.s32.totalorder %s29, 1
    %p47 = por %p45, %p46
    %p48 = scmp.ne.s32.totalorder %s37, %s38
    %p49 = scmp.eq.s32.totalorder %s29, 0
    %p50 = por %p48, %p49
    %p51 = scmp.ne.s32.totalorder %s37, %s38
    %p52 = scmp.eq.s32.totalorder %s30, 1
    %p53 = por %p51, %p52
    %p55 = scmp.ne.s32.totalorder %s38, %s54
    %p56 = scmp.eq.s32.totalorder %s30, 0
    %p57 = por %p55, %p56
    %s59 = sadd.s32 %s58, 1
    %p62 = scmp.eq.s32.totalorder %s24, 1
    %p63 = scmp.ne.s32.totalorder %s58, %s60
    %p64 = scmp.eq.s32.totalorder %s24, 0
    %p65 = por %p63, %p64
    %p66 = scmp.ne.s32.totalorder %s58, %s60
    %p67 = scmp.eq.s32.totalorder %s29, 1
    %p68 = por %p66, %p67
    %p69 = scmp.ne.s32.totalorder %s60, %s61
    %p70 = scmp.eq.s32.totalorder %s29, 0
    %p71 = por %p69, %p70
    %p72 = scmp.ne.s32.totalorder %s60, %s61
    %p73 = scmp.eq.s32.totalorder %s30, 1
    %p74 = por %p72, %p73
    %p76 = scmp.ne.s32.totalorder %s61, %s75
    %p77 = scmp.eq.s32.totalorder %s30, 0
    %p78 = por %p76, %p77
    %s80 = sadd.s32 %s79, 1
    %p83 = scmp.eq.s32.totalorder %s24, 1
    %p84 = scmp.ne.s32.totalorder %s79, %s81
    %p85 = scmp.eq.s32.totalorder %s24, 0
    %p86 = por %p84, %p85
    %p87 = scmp.ne.s32.totalorder %s79, %s81
    %p88 = scmp.eq.s32.totalorder %s29, 1
    %p89 = por %p87, %p88
    %p90 = scmp.ne.s32.totalorder %s81, %s82
    %p91 = scmp.eq.s32.totalorder %s29, 0
    %p92 = por %p90, %p91
    %p93 = scmp.ne.s32.totalorder %s81, %s82
    %p94 = scmp.eq.s32.totalorder %s30, 1
    %p95 = por %p93, %p94
    %p97 = scmp.ne.s32.totalorder %s82, %s96
    %p98 = scmp.eq.s32.totalorder %s30, 0
    %p99 = por %p97, %p98
    %s101 = sadd.s32 %s100, 1
    %p104 = scmp.eq.s32.totalorder %s24, 1
    %p105 = scmp.ne.s32.totalorder %s100, %s102
    %p106 = scmp.eq.s32.totalorder %s24, 0
    %p107 = por %p105, %p106
    %p108 = scmp.ne.s32.totalorder %s100, %s102
    %p109 = scmp.eq.s32.totalorder %s29, 1
    %p110 = por %p108, %p109
    %p111 = scmp.ne.s32.totalorder %s102, %s103
    %p112 = scmp.eq.s32.totalorder %s29, 0
    %p113 = por %p111, %p112
    %p114 = scmp.ne.s32.totalorder %s102, %s103
    %p115 = scmp.eq.s32.totalorder %s30, 1
    %p116 = por %p114, %p115
    %p118 = scmp.ne.s32.totalorder %s103, %s117
    %p119 = scmp.eq.s32.totalorder %s30, 0
    %p120 = por %p118, %p119
    %s122 = sadd.s32 %s121, 1
    %p125 = scmp.eq.s32.totalorder %s24, 1
    %p126 = scmp.ne.s32.totalorder %s121, %s123
    %p127 = scmp.eq.s32.totalorder %s24, 0
    %p128 = por %p126, %p127
    %p129 = scmp.ne.s32.totalorder %s121, %s123
    %p130 = scmp.eq.s32.totalorder %s29, 1
    %p131 = por %p129, %p130
    %p132 = scmp.ne.s32.totalorder %s123, %s124
    %p133 = scmp.eq.s32.totalorder %s29, 0
    %p134 = por %p132, %p133
    %p135 = scmp.ne.s32.totalorder %s123, %s124
    %p136 = scmp.eq.s32.totalorder %s30, 1
    %p137 = por %p135, %p136
    %p139 = scmp.ne.s32.totalorder %s124, %s138
    %p140 = scmp.eq.s32.totalorder %s30, 0
    %p141 = por %p139, %p140
    %s143 = sadd.s32 %s142, 1
    %p146 = scmp.eq.s32.totalorder %s24, 1
    %p147 = scmp.ne.s32.totalorder %s142, %s144
    %p148 = scmp.eq.s32.totalorder %s24, 0
    %p149 = por %p147, %p148
    %p150 = scmp.ne.s32.totalorder %s142, %s144
    %p151 = scmp.eq.s32.totalorder %s29, 1
    %p152 = por %p150, %p151
    %p153 = scmp.ne.s32.totalorder %s144, %s145
    %p154 = scmp.eq.s32.totalorder %s29, 0
    %p155 = por %p153, %p154
    %p156 = scmp.ne.s32.totalorder %s144, %s145
    %p157 = scmp.eq.s32.totalorder %s30, 1
    %p158 = por %p156, %p157
    %p160 = scmp.ne.s32.totalorder %s145, %s159
    %p161 = scmp.eq.s32.totalorder %s30, 0
    %p162 = por %p160, %p161
    %s164 = sadd.s32 %s163, 1
    %p167 = scmp.eq.s32.totalorder %s24, 1
    %p168 = scmp.ne.s32.totalorder %s163, %s165
    %p169 = scmp.eq.s32.totalorder %s24, 0
    %p170 = por %p168, %p169
    %p171 = scmp.ne.s32.totalorder %s163, %s165
    %p172 = scmp.eq.s32.totalorder %s29, 1
    %p173 = por %p171, %p172
    %p174 = scmp.ne.s32.totalorder %s165, %s166
    %p175 = scmp.eq.s32.totalorder %s29, 0
    %p176 = por %p174, %p175
    %p177 = scmp.ne.s32.totalorder %s165, %s166
    %p178 = scmp.eq.s32.totalorder %s30, 1
    %p179 = por %p177, %p178
    %p181 = scmp.ne.s32.totalorder %s166, %s180
    %p182 = scmp.eq.s32.totalorder %s30, 0
    %p183 = por %p181, %p182
    %s185 = sadd.s32 %s184, 1
    %p188 = scmp.eq.s32.totalorder %s24, 1
    %p189 = scmp.ne.s32.totalorder %s184, %s186
    %p190 = scmp.eq.s32.totalorder %s24, 0
    %p191 = por %p189, %p190
    %p192 = scmp.ne.s32.totalorder %s184, %s186
    %p193 = scmp.eq.s32.totalorder %s29, 1
    %p194 = por %p192, %p193
    %p195 = scmp.ne.s32.totalorder %s186, %s187
    %p196 = scmp.eq.s32.totalorder %s29, 0
    %p197 = por %p195, %p196
    %p198 = scmp.ne.s32.totalorder %s186, %s187
    %p199 = scmp.eq.s32.totalorder %s30, 1
    %p200 = por %p198, %p199
    %p202 = scmp.ne.s32.totalorder %s187, %s201
    %p203 = scmp.eq.s32.totalorder %s30, 0
    %p204 = por %p202, %p203
    %s206 = sadd.s32 %s205, 1
    %p209 = scmp.eq.s32.totalorder %s24, 1
    %p210 = scmp.ne.s32.totalorder %s205, %s207
    %p211 = scmp.eq.s32.totalorder %s24, 0
    %p212 = por %p210, %p211
    %p213 = scmp.ne.s32.totalorder %s205, %s207
    %p214 = scmp.eq.s32.totalorder %s29, 1
    %p215 = por %p213, %p214
    %p216 = scmp.ne.s32.totalorder %s207, %s208
    %p217 = scmp.eq.s32.totalorder %s29, 0
    %p218 = por %p216, %p217
    %p219 = scmp.ne.s32.totalorder %s207, %s208
    %p220 = scmp.eq.s32.totalorder %s30, 1
    %p221 = por %p219, %p220
    %p223 = scmp.ne.s32.totalorder %s208, %s222
    %p224 = scmp.eq.s32.totalorder %s30, 0
    %p225 = por %p223, %p224
    %s227 = sadd.s32 %s226, 1
    %p230 = scmp.eq.s32.totalorder %s24, 1
    %p231 = scmp.ne.s32.totalorder %s226, %s228
    %p232 = scmp.eq.s32.totalorder %s24, 0
    %p233 = por %p231, %p232
    %p234 = scmp.ne.s32.totalorder %s226, %s228
    %p235 = scmp.eq.s32.totalorder %s29, 1
    %p236 = por %p234, %p235
    %p237 = scmp.ne.s32.totalorder %s228, %s229
    %p238 = scmp.eq.s32.totalorder %s29, 0
    %p239 = por %p237, %p238
    %p240 = scmp.ne.s32.totalorder %s228, %s229
    %p241 = scmp.eq.s32.totalorder %s30, 1
    %p242 = por %p240, %p241
    %p244 = scmp.ne.s32.totalorder %s229, %s243
    %p245 = scmp.eq.s32.totalorder %s30, 0
    %p246 = por %p244, %p245
    %s248 = sadd.s32 %s247, 1
    %p251 = scmp.eq.s32.totalorder %s24, 1
    %p252 = scmp.ne.s32.totalorder %s247, %s249
    %p253 = scmp.eq.s32.totalorder %s24, 0
    %p254 = por %p252, %p253
    %p255 = scmp.ne.s32.totalorder %s247, %s249
    %p256 = scmp.eq.s32.totalorder %s29, 1
    %p257 = por %p255, %p256
    %p258 = scmp.ne.s32.totalorder %s249, %s250
    %p259 = scmp.eq.s32.totalorder %s29, 0
    %p260 = por %p258, %p259
    %p261 = scmp.ne.s32.totalorder %s249, %s250
    %p262 = scmp.eq.s32.totalorder %s30, 1
    %p263 = por %p261, %p262
    %p265 = scmp.ne.s32.totalorder %s250, %s264
    %p266 = scmp.eq.s32.totalorder %s30, 0
    %p267 = por %p265, %p266
    %s269 = sadd.s32 %s268, 1
    %p272 = scmp.eq.s32.totalorder %s24, 1
    %p273 = scmp.ne.s32.totalorder %s268, %s270
    %p274 = scmp.eq.s32.totalorder %s24, 0
    %p275 = por %p273, %p274
    %p276 = scmp.ne.s32.totalorder %s268, %s270
    %p277 = scmp.eq.s32.totalorder %s29, 1
    %p278 = por %p276, %p277
    %p279 = scmp.ne.s32.totalorder %s270, %s271
    %p280 = scmp.eq.s32.totalorder %s29, 0
    %p281 = por %p279, %p280
    %p282 = scmp.ne.s32.totalorder %s270, %s271
    %p283 = scmp.eq.s32.totalorder %s30, 1
    %p284 = por %p282, %p283
    %p286 = scmp.ne.s32.totalorder %s271, %s285
    %p287 = scmp.eq.s32.totalorder %s30, 0
    %p288 = por %p286, %p287
    %s290 = sadd.s32 %s289, 1
    %p293 = scmp.eq.s32.totalorder %s24, 1
    %p294 = scmp.ne.s32.totalorder %s289, %s291
    %p295 = scmp.eq.s32.totalorder %s24, 0
    %p296 = por %p294, %p295
    %p297 = scmp.ne.s32.totalorder %s289, %s291
    %p298 = scmp.eq.s32.totalorder %s29, 1
    %p299 = por %p297, %p298
    %p300 = scmp.ne.s32.totalorder %s291, %s292
    %p301 = scmp.eq.s32.totalorder %s29, 0
    %p302 = por %p300, %p301
    %p303 = scmp.ne.s32.totalorder %s291, %s292
    %p304 = scmp.eq.s32.totalorder %s30, 1
    %p305 = por %p303, %p304
    %p307 = scmp.ne.s32.totalorder %s292, %s306
    %p308 = scmp.eq.s32.totalorder %s30, 0
    %p309 = por %p307, %p308
    %s311 = sadd.s32 %s310, 1
    %p314 = scmp.eq.s32.totalorder %s24, 1
    %p315 = scmp.ne.s32.totalorder %s310, %s312
    %p316 = scmp.eq.s32.totalorder %s24, 0
    %p317 = por %p315, %p316
    %p318 = scmp.ne.s32.totalorder %s310, %s312
    %p319 = scmp.eq.s32.totalorder %s29, 1
    %p320 = por %p318, %p319
    %p321 = scmp.ne.s32.totalorder %s312, %s313
    %p322 = scmp.eq.s32.totalorder %s29, 0
    %p323 = por %p321, %p322
    %p324 = scmp.ne.s32.totalorder %s312, %s313
    %p325 = scmp.eq.s32.totalorder %s30, 1
    %p326 = por %p324, %p325
    %p328 = scmp.ne.s32.totalorder %s313, %s327
    %p329 = scmp.eq.s32.totalorder %s30, 0
    %p330 = por %p328, %p329
    %s332 = sadd.s32 %s331, 1
    %p335 = scmp.eq.s32.totalorder %s24, 1
    %p336 = scmp.ne.s32.totalorder %s331, %s333
    %p337 = scmp.eq.s32.totalorder %s24, 0
    %p338 = por %p336, %p337
    %p339 = scmp.ne.s32.totalorder %s331, %s333
    %p340 = scmp.eq.s32.totalorder %s29, 1
    %p341 = por %p339, %p340
    %p342 = scmp.ne.s32.totalorder %s333, %s334
    %p343 = scmp.eq.s32.totalorder %s29, 0
    %p344 = por %p342, %p343
    %p345 = scmp.ne.s32.totalorder %s333, %s334
    %p346 = scmp.eq.s32.totalorder %s30, 1
    %p347 = por %p345, %p346
    %p349 = scmp.ne.s32.totalorder %s334, %s348
    %p350 = scmp.eq.s32.totalorder %s30, 0
    %p351 = por %p349, %p350
    %s352 = ssub.s32 %s24, %s31
    %p353 = scmp.eq.s32.totalorder %s352, 0
    %s355 = sadd.s32 %s354, 1
    %s356 = scalar_select %p353, %s354, %s355
    %p359 = pneg %p353
    %p360 = scmp.eq.s32.totalorder %s24, 1
    %p361 = por %p359, %p360
    %p362 = scmp.ne.s32.totalorder %s354, %s357
    %p363 = scmp.eq.s32.totalorder %s24, 0
    %p364 = por %p362, %p363
    %p365 = scmp.ne.s32.totalorder %s354, %s357
    %p366 = scmp.eq.s32.totalorder %s29, 1
    %p367 = por %p365, %p366
    %p368 = scmp.ne.s32.totalorder %s357, %s358
    %p369 = scmp.eq.s32.totalorder %s29, 0
    %p370 = por %p368, %p369
    %p371 = scmp.ne.s32.totalorder %s357, %s358
    %p372 = scmp.eq.s32.totalorder %s30, 1
    %p373 = por %p371, %p372
    %p375 = scmp.ne.s32.totalorder %s358, %s374
    %p376 = scmp.eq.s32.totalorder %s30, 0
    %p377 = por %p375, %p376
    %s378 = ssub.s32 %s24, %s31
    %p379 = scmp.eq.s32.totalorder %s378, 0
    %s381 = sadd.s32 %s380, 1
    %s382 = scalar_select %p379, %s380, %s381
    %p385 = pneg %p379
    %p386 = scmp.eq.s32.totalorder %s24, 1
    %p387 = por %p385, %p386
    %p388 = scmp.ne.s32.totalorder %s380, %s383
    %p389 = scmp.eq.s32.totalorder %s24, 0
    %p390 = por %p388, %p389
    %p391 = scmp.ne.s32.totalorder %s380, %s383
    %p392 = scmp.eq.s32.totalorder %s29, 1
    %p393 = por %p391, %p392
    %p394 = scmp.ne.s32.totalorder %s383, %s384
    %p395 = scmp.eq.s32.totalorder %s29, 0
    %p396 = por %p394, %p395
    %p397 = scmp.ne.s32.totalorder %s383, %s384
    %p398 = scmp.eq.s32.totalorder %s30, 1
    %p399 = por %p397, %p398
    %p401 = scmp.ne.s32.totalorder %s384, %s400
    %p402 = scmp.eq.s32.totalorder %s30, 0
    %p403 = por %p401, %p402
    %s404 = ssub.s32 %s24, %s31
    %p405 = scmp.eq.s32.totalorder %s404, 0
    %s407 = sadd.s32 %s406, 1
    %s408 = scalar_select %p405, %s406, %s407
    %p411 = pneg %p405
    %p412 = scmp.eq.s32.totalorder %s24, 1
    %p413 = por %p411, %p412
    %p414 = scmp.ne.s32.totalorder %s406, %s409
    %p415 = scmp.eq.s32.totalorder %s24, 0
    %p416 = por %p414, %p415
    %p417 = scmp.ne.s32.totalorder %s406, %s409
    %p418 = scmp.eq.s32.totalorder %s29, 1
    %p419 = por %p417, %p418
    %p420 = scmp.ne.s32.totalorder %s409, %s410
    %p421 = scmp.eq.s32.totalorder %s29, 0
    %p422 = por %p420, %p421
    %p423 = scmp.ne.s32.totalorder %s409, %s410
    %p424 = scmp.eq.s32.totalorder %s30, 1
    %p425 = por %p423, %p424
    %p427 = scmp.ne.s32.totalorder %s410, %s426
    %p428 = scmp.eq.s32.totalorder %s30, 0
    %p429 = por %p427, %p428
    %p430 = scmp.le.s32.totalorder 1, %s24
    %p431 = scmp.lt.s32.totalorder %s24, 3
    %p432 = pnand %p430, %p431
    %p433 = pneg %p432
    // Predicated region
    $region9: #{simsiam_forward.3} parent=5 // pred_check
      _
    $region10: #{simsiam_forward.3} parent=5 // pred_check_branch
      %435 = sbr.rel (%p432) target = $region12
    $region11: #{simsiam_forward.3} parent=5 // pred_region
      %s436 = ssub.s32 %s24, 1
      // Predicated region
      $region13: #{simsiam_forward.3} parent=11 // pred_check
        %p437 = pneg %p71
      $region14: #{simsiam_forward.3} parent=11 // pred_check_branch
        %439 = sbr.rel (%p437) target = $region16
      $region15: #{simsiam_forward.3} parent=11 // pred_region
        _
      $region16: #{simsiam_forward.3} parent=11 // pred_fallthru
        _
      // Predicated region
      $region17: #{simsiam_forward.3} parent=11 // pred_check
        %p440 = pneg %p92
      $region18: #{simsiam_forward.3} parent=11 // pred_check_branch
        %442 = sbr.rel (%p440) target = $region20
      $region19: #{simsiam_forward.3} parent=11 // pred_region
        _
      $region20: #{simsiam_forward.3} parent=11 // pred_fallthru
        _
      // Predicated region
      $region21: #{simsiam_forward.3} parent=11 // pred_check
        %p443 = pneg %p113
      $region22: #{simsiam_forward.3} parent=11 // pred_check_branch
        %445 = sbr.rel (%p443) target = $region24
      $region23: #{simsiam_forward.3} parent=11 // pred_region
        _
      $region24: #{simsiam_forward.3} parent=11 // pred_fallthru
        _
      // Predicated region
      $region25: #{simsiam_forward.3} parent=11 // pred_check
        %p446 = pneg %p134
      $region26: #{simsiam_forward.3} parent=11 // pred_check_branch
        %448 = sbr.rel (%p446) target = $region28
      $region27: #{simsiam_forward.3} parent=11 // pred_region
        _
      $region28: #{simsiam_forward.3} parent=11 // pred_fallthru
        _
      // Predicated region
      $region29: #{simsiam_forward.3} parent=11 // pred_check
        %p449 = pneg %p155
      $region30: #{simsiam_forward.3} parent=11 // pred_check_branch
        %451 = sbr.rel (%p449) target = $region32
      $region31: #{simsiam_forward.3} parent=11 // pred_region
        _
      $region32: #{simsiam_forward.3} parent=11 // pred_fallthru
        _
      // Predicated region
      $region33: #{simsiam_forward.3} parent=11 // pred_check
        %p452 = pneg %p176
      $region34: #{simsiam_forward.3} parent=11 // pred_check_branch
        %454 = sbr.rel (%p452) target = $region36
      $region35: #{simsiam_forward.3} parent=11 // pred_region
        _
      $region36: #{simsiam_forward.3} parent=11 // pred_fallthru
        _
      // Predicated region
      $region37: #{simsiam_forward.3} parent=11 // pred_check
        %p455 = pneg %p197
      $region38: #{simsiam_forward.3} parent=11 // pred_check_branch
        %457 = sbr.rel (%p455) target = $region40
      $region39: #{simsiam_forward.3} parent=11 // pred_region
        _
      $region40: #{simsiam_forward.3} parent=11 // pred_fallthru
        _
      // Predicated region
      $region41: #{simsiam_forward.3} parent=11 // pred_check
        %p458 = pneg %p218
      $region42: #{simsiam_forward.3} parent=11 // pred_check_branch
        %460 = sbr.rel (%p458) target = $region44
      $region43: #{simsiam_forward.3} parent=11 // pred_region
        _
      $region44: #{simsiam_forward.3} parent=11 // pred_fallthru
        _
      // Predicated region
      $region45: #{simsiam_forward.3} parent=11 // pred_check
        %p461 = pneg %p239
      $region46: #{simsiam_forward.3} parent=11 // pred_check_branch
        %463 = sbr.rel (%p461) target = $region48
      $region47: #{simsiam_forward.3} parent=11 // pred_region
        _
      $region48: #{simsiam_forward.3} parent=11 // pred_fallthru
        _
      // Predicated region
      $region49: #{simsiam_forward.3} parent=11 // pred_check
        %p464 = pneg %p260
      $region50: #{simsiam_forward.3} parent=11 // pred_check_branch
        %466 = sbr.rel (%p464) target = $region52
      $region51: #{simsiam_forward.3} parent=11 // pred_region
        _
      $region52: #{simsiam_forward.3} parent=11 // pred_fallthru
        _
      // Predicated region
      $region53: #{simsiam_forward.3} parent=11 // pred_check
        %p467 = pneg %p281
      $region54: #{simsiam_forward.3} parent=11 // pred_check_branch
        %469 = sbr.rel (%p467) target = $region56
      $region55: #{simsiam_forward.3} parent=11 // pred_region
        _
      $region56: #{simsiam_forward.3} parent=11 // pred_fallthru
        _
      // Predicated region
      $region57: #{simsiam_forward.3} parent=11 // pred_check
        %p470 = pneg %p302
      $region58: #{simsiam_forward.3} parent=11 // pred_check_branch
        %472 = sbr.rel (%p470) target = $region60
      $region59: #{simsiam_forward.3} parent=11 // pred_region
        _
      $region60: #{simsiam_forward.3} parent=11 // pred_fallthru
        _
      // Predicated region
      $region61: #{simsiam_forward.3} parent=11 // pred_check
        %p473 = pneg %p323
      $region62: #{simsiam_forward.3} parent=11 // pred_check_branch
        %475 = sbr.rel (%p473) target = $region64
      $region63: #{simsiam_forward.3} parent=11 // pred_region
        _
      $region64: #{simsiam_forward.3} parent=11 // pred_fallthru
        _
      // Predicated region
      $region65: #{simsiam_forward.3} parent=11 // pred_check
        %p476 = pneg %p344
      $region66: #{simsiam_forward.3} parent=11 // pred_check_branch
        %478 = sbr.rel (%p476) target = $region68
      $region67: #{simsiam_forward.3} parent=11 // pred_region
        _
      $region68: #{simsiam_forward.3} parent=11 // pred_fallthru
        _
    $region12: #{simsiam_forward.3} parent=5 // pred_fallthru
      _
    %p479 = scmp.lt.s32.totalorder %s24, 2
    // Predicated region
    $region69: #{simsiam_forward.3} parent=5 // pred_check
      %p480 = pneg %p479
    $region70: #{simsiam_forward.3} parent=5 // pred_check_branch
      %482 = sbr.rel (%p480) target = $region72
    $region71: #{simsiam_forward.3} parent=5 // pred_region
      // Predicated region
      $region73: #{simsiam_forward.3} parent=71 // pred_check
        %p483 = pneg %p44
      $region74: #{simsiam_forward.3} parent=71 // pred_check_branch
        %485 = sbr.rel (%p483) target = $region76
      $region75: #{simsiam_forward.3} parent=71 // pred_region
        %p486 = scmp.lt.s32.totalorder %s24, 1
        %s487 = scalar_select %p486, %s24, 1
        %s488 = smul.addr %s487, 4
        %s489 = scalar_lea.vmem %s0, %s488
      $region76: #{simsiam_forward.3} parent=71 // pred_fallthru
        _
    $region72: #{simsiam_forward.3} parent=5 // pred_fallthru
      _
    %p490 = scmp.le.s32.totalorder 1, %s24
    %p491 = scmp.lt.s32.totalorder %s24, 3
    %p492 = pnand %p490, %p491
    %p493 = pneg %p492
    // Predicated region
    $region77: #{simsiam_forward.3} parent=5 // pred_check
      _
    $region78: #{simsiam_forward.3} parent=5 // pred_check_branch
      %495 = sbr.rel (%p492) target = $region80
    $region79: #{simsiam_forward.3} parent=5 // pred_region
      %s496 = ssub.s32 %s24, 1
      %p497 = scmp.lt.s32.totalorder %s29, 1
      %s498 = scalar_select %p497, %s29, 1
      %s499 = smul.addr %s498, 4
      %s500 = scalar_lea.vmem %s0, %s499
      %p501 = pneg %p50
      %p502 = pneg %p47
      %p503 = pneg %p71
      %p504 = pneg %p68
      %p505 = pneg %p92
      %p506 = pneg %p89
      %p507 = pneg %p113
      %p508 = pneg %p110
      %p509 = pneg %p134
      %p510 = pneg %p131
      %p511 = pneg %p155
      %p512 = pneg %p152
      %p513 = pneg %p176
      %p514 = pneg %p173
      %p515 = pneg %p197
      %p516 = pneg %p194
      %p517 = pneg %p218
      %p518 = pneg %p215
      %p519 = pneg %p239
      %p520 = pneg %p236
      %p521 = pneg %p260
      %p522 = pneg %p257
      %p523 = pneg %p281
      %p524 = pneg %p278
      %p525 = pneg %p302
      %p526 = pneg %p299
      %p527 = pneg %p323
      %p528 = pneg %p320
      %p529 = pneg %p344
      %p530 = pneg %p341
      %p531 = pneg %p370
      %p532 = pneg %p367
      %p533 = scmp.lt.s32.totalorder %s29, 1
      %s534 = scalar_select %p533, %s29, 1
      %s535 = smul.addr %s534, 8
      %s536 = scalar_lea.vmem %s15, %s535
      %p537 = pneg %p396
      %p538 = pneg %p393
      %p539 = scmp.lt.s32.totalorder %s29, 1
      %s540 = scalar_select %p539, %s29, 1
      %s541 = smul.addr %s540, 8
      %s542 = scalar_lea.vmem %s16, %s541
      %p543 = pneg %p422
      %p544 = pneg %p419
      %p545 = scmp.lt.s32.totalorder %s29, 1
      %s546 = scalar_select %p545, %s29, 1
      %s547 = smul.addr %s546, 8
      %s548 = scalar_lea.vmem %s17, %s547
      %p549 = scmp.lt.s32.totalorder %s29, 1
      %s550 = scalar_select %p549, %s29, 1
      %s551 = smul.addr %s550, 4
      %s552 = scalar_lea.vmem %s0, %s551
      %p553 = scmp.lt.s32.totalorder %s29, 1
      %s554 = scalar_select %p553, %s29, 1
      %s555 = smul.addr %s554, 8
      %s556 = scalar_lea.vmem %s15, %s555
      %p557 = scmp.lt.s32.totalorder %s29, 1
      %s558 = scalar_select %p557, %s29, 1
      %s559 = smul.addr %s558, 8
      %s560 = scalar_lea.vmem %s16, %s559
      %p561 = scmp.lt.s32.totalorder %s29, 1
      %s562 = scalar_select %p561, %s29, 1
      %s563 = smul.addr %s562, 8
      %s564 = scalar_lea.vmem %s17, %s563
      %v565 = vld [vmem:[%s552] sm:$0xf]
      %v566 = vld [vmem:[%s1] sm:$0xf]
      %v567 = vld [vmem:[%s1 + $0x4] sm:$0xf]
      %v568 = vld [vmem:[%s1 + $0x8] sm:$0xf]
      %v569 = vld [vmem:[%s1 + $0xc] sm:$0xf]
      %v570 = vld [vmem:[%s1 + $0x10] sm:$0xf]
      %v571 = vld [vmem:[%s1 + $0x14] sm:$0xf]
      %v572 = vld [vmem:[%s1 + $0x18] sm:$0xf]
      %v573 = vld [vmem:[%s1 + $0x1c] sm:$0xf]
      %v574 = vld [vmem:[%s1 + $0x20] sm:$0xf]
      %v575 = vld [vmem:[%s1 + $0x24] sm:$0xf]
      %v576 = vld [vmem:[%s1 + $0x28] sm:$0xf]
      %v577 = vld [vmem:[%s1 + $0x2c] sm:$0xf]
      %v578 = vld [vmem:[%s1 + $0x30] sm:$0xf]
      %v579 = vld [vmem:[%s1 + $0x34] sm:$0xf]
      %v580 = vld [vmem:[%s1 + $0x38] sm:$0xf]
      %v581 = vld [vmem:[%s1 + $0x3c] sm:$0xf]
      %v598 = vunpack.c.l.b16 %v566
      %v599 = vunpack.c.l.b16 %v567
      %v600 = vunpack.c.l.b16 %v568
      %v601 = vunpack.c.l.b16 %v569
      %v602 = vunpack.c.l.b16 %v570
      %v603 = vunpack.c.l.b16 %v571
      %v604 = vunpack.c.l.b16 %v572
      %v605 = vunpack.c.l.b16 %v573
      %v606 = vunpack.c.l.b16 %v574
      %v607 = vunpack.c.l.b16 %v575
      %v608 = vunpack.c.l.b16 %v576
      %v609 = vunpack.c.l.b16 %v577
      %v610 = vunpack.c.l.b16 %v578
      %v611 = vunpack.c.l.b16 %v579
      %v612 = vunpack.c.l.b16 %v580
      %v613 = vunpack.c.l.b16 %v581
      %v614 = vpack.c.b16 %v599, %v598
      %v615 = vpack.c.b16 %v601, %v600
      %v616 = vpack.c.b16 %v603, %v602
      %v617 = vpack.c.b16 %v605, %v604
      %v618 = vpack.c.b16 %v607, %v606
      %v619 = vpack.c.b16 %v609, %v608
      %v620 = vpack.c.b16 %v611, %v610
      %v621 = vpack.c.b16 %v613, %v612
      %630 = vmatpush.bf16.msra.mxu0 %v621
      %631 = vmatpush.bf16.msra.mxu0 %v620
      %632 = vmatpush.bf16.msra.mxu0 %v619
      %633 = vmatpush.bf16.msra.mxu0 %v618
      %634 = vmatpush.bf16.msra.mxu0 %v617
      %635 = vmatpush.bf16.msra.mxu0 %v616
      %636 = vmatpush.bf16.msra.mxu0 %v615
      %637 = vmatpush.bf16.msra.mxu0 %v614
      %638 = vmatmul.bf16.gmra.mxu0 %v565
      %v639 = vpop.f32.mrf.mxu0
      %v640 = vadd.f32 0.0, %v639
      %v641 = vpop.f32.mrf.mxu0
      %642 = vdwg.mxu0
      %v643 = vrot.slane %v640, 4
      %v644 = vadd.f32 %v640, %v643
      %v645 = vrot.slane %v644, 2
      %v646 = vadd.f32 %v644, %v645
      %v647 = vrot.slane %v646, 1
      %v648 = vadd.f32 %v646, %v647
      %v649 = vrcp.pop 8.0
      %v650 = vmul.f32 8.0, %v649
      %v651 = vsub.f32 1.0, %v650
      %v652 = vmul.f32 %v649, %v651
      %v653 = vadd.f32 %v649, %v652
      %vm654 = vweird.f32 %v649
      %v655 = vsel %vm654, %v649, %v653
      %v656 = vmul.f32 %v648, %v655
      %v657 = vsub.f32 %v640, %v656
      %v658 = vmul.f32 %v657, %v657
      %v659 = vrot.slane %v658, 4
      %v660 = vadd.f32 %v658, %v659
      %v661 = vrot.slane %v660, 2
      %v662 = vadd.f32 %v660, %v661
      %v663 = vrot.slane %v662, 1
      %v664 = vadd.f32 %v662, %v663
      %v665 = vmul.f32 %v664, %v655
      %v666 = vadd.f32 %v665, 1e-05
      %v667 = vrsqrt.pop %v666
      %v668 = vmul.f32 %v667, %v666
      %v669 = vmul.f32 %v668, %v667
      %v670 = vmul.f32 0.5, %v669
      %v671 = vsub.f32 1.5, %v670
      %v672 = vmul.f32 %v667, %v671
      %vm673 = vweird.f32 %v666
      %vm674 = vweird.f32 %v667
      %vm675 = vmor %vm673, %vm674
      %v676 = vsel %vm675, %v667, %v672
      %v677 = vmul.f32 %v657, %v676
      %v678 = vld [vmem:[%s2] sm:$0x1]
      %v680 = vperm.slane %v678, 0
      %v682 = vmul.f32 %v677, %v680
      %v683 = vld [vmem:[%s3] sm:$0x1]
      %v685 = vperm.slane %v683, 0
      %v687 = vadd.f32 %v682, %v685
      %v688 = vmax.f32 %v687, 0.0
      %v689 = vpack.c.bf16 %v688, %v688
      %v690 = vld [vmem:[%s4] sm:$0xf]
      %v691 = vld [vmem:[%s4 + $0x4] sm:$0xf]
      %v692 = vld [vmem:[%s4 + $0x8] sm:$0xf]
      %v693 = vld [vmem:[%s4 + $0xc] sm:$0xf]
      %v694 = vld [vmem:[%s4 + $0x10] sm:$0xf]
      %v695 = vld [vmem:[%s4 + $0x14] sm:$0xf]
      %v696 = vld [vmem:[%s4 + $0x18] sm:$0xf]
      %v697 = vld [vmem:[%s4 + $0x1c] sm:$0xf]
      %v698 = vld [vmem:[%s4 + $0x20] sm:$0xf]
      %v699 = vld [vmem:[%s4 + $0x24] sm:$0xf]
      %v700 = vld [vmem:[%s4 + $0x28] sm:$0xf]
      %v701 = vld [vmem:[%s4 + $0x2c] sm:$0xf]
      %v702 = vld [vmem:[%s4 + $0x30] sm:$0xf]
      %v703 = vld [vmem:[%s4 + $0x34] sm:$0xf]
      %v704 = vld [vmem:[%s4 + $0x38] sm:$0xf]
      %v705 = vld [vmem:[%s4 + $0x3c] sm:$0xf]
      %v722 = vunpack.c.l.b16 %v690
      %v723 = vunpack.c.l.b16 %v691
      %v724 = vunpack.c.l.b16 %v692
      %v725 = vunpack.c.l.b16 %v693
      %v726 = vunpack.c.l.b16 %v694
      %v727 = vunpack.c.l.b16 %v695
      %v728 = vunpack.c.l.b16 %v696
      %v729 = vunpack.c.l.b16 %v697
      %v730 = vunpack.c.l.b16 %v698
      %v731 = vunpack.c.l.b16 %v699
      %v732 = vunpack.c.l.b16 %v700
      %v733 = vunpack.c.l.b16 %v701
      %v734 = vunpack.c.l.b16 %v702
      %v735 = vunpack.c.l.b16 %v703
      %v736 = vunpack.c.l.b16 %v704
      %v737 = vunpack.c.l.b16 %v705
      %v738 = vpack.c.b16 %v723, %v722
      %v739 = vpack.c.b16 %v725, %v724
      %v740 = vpack.c.b16 %v727, %v726
      %v741 = vpack.c.b16 %v729, %v728
      %v742 = vpack.c.b16 %v731, %v730
      %v743 = vpack.c.b16 %v733, %v732
      %v744 = vpack.c.b16 %v735, %v734
      %v745 = vpack.c.b16 %v737, %v736
      %754 = vmatpush.bf16.msra.mxu0 %v745
      %755 = vmatpush.bf16.msra.mxu0 %v744
      %756 = vmatpush.bf16.msra.mxu0 %v743
      %757 = vmatpush.bf16.msra.mxu0 %v742
      %758 = vmatpush.bf16.msra.mxu0 %v741
      %759 = vmatpush.bf16.msra.mxu0 %v740
      %760 = vmatpush.bf16.msra.mxu0 %v739
      %761 = vmatpush.bf16.msra.mxu0 %v738
      %762 = vmatmul.bf16.gmra.mxu0 %v689
      %v763 = vpop.f32.mrf.mxu0
      %v764 = vadd.f32 0.0, %v763
      %v765 = vpop.f32.mrf.mxu0
      %766 = vdwg.mxu0
      %v767 = vrot.slane %v764, 4
      %v768 = vadd.f32 %v764, %v767
      %v769 = vrot.slane %v768, 2
      %v770 = vadd.f32 %v768, %v769
      %v771 = vrot.slane %v770, 1
      %v772 = vadd.f32 %v770, %v771
      %v773 = vmul.f32 %v772, %v655
      %v774 = vsub.f32 %v764, %v773
      %v775 = vmul.f32 %v774, %v774
      %v776 = vrot.slane %v775, 4
      %v777 = vadd.f32 %v775, %v776
      %v778 = vrot.slane %v777, 2
      %v779 = vadd.f32 %v777, %v778
      %v780 = vrot.slane %v779, 1
      %v781 = vadd.f32 %v779, %v780
      %v782 = vmul.f32 %v781, %v655
      %v783 = vadd.f32 %v782, 1e-05
      %v784 = vrsqrt.pop %v783
      %v785 = vmul.f32 %v784, %v783
      %v786 = vmul.f32 %v785, %v784
      %v787 = vmul.f32 0.5, %v786
      %v788 = vsub.f32 1.5, %v787
      %v789 = vmul.f32 %v784, %v788
      %vm790 = vweird.f32 %v783
      %vm791 = vweird.f32 %v784
      %vm792 = vmor %vm790, %vm791
      %v793 = vsel %vm792, %v784, %v789
      %v794 = vmul.f32 %v774, %v793
      %v795 = vld [vmem:[%s5] sm:$0x1]
      %v797 = vperm.slane %v795, 0
      %v799 = vmul.f32 %v794, %v797
      %v800 = vld [vmem:[%s6] sm:$0x1]
      %v802 = vperm.slane %v800, 0
      %v804 = vadd.f32 %v799, %v802
      %v805 = vmax.f32 %v804, 0.0
      %v806 = vpack.c.bf16 %v805, %v805
      %v807 = vld [vmem:[%s7] sm:$0xf]
      %v808 = vld [vmem:[%s7 + $0x4] sm:$0xf]
      %v809 = vld [vmem:[%s7 + $0x8] sm:$0xf]
      %v810 = vld [vmem:[%s7 + $0xc] sm:$0xf]
      %v811 = vld [vmem:[%s7 + $0x10] sm:$0xf]
      %v812 = vld [vmem:[%s7 + $0x14] sm:$0xf]
      %v813 = vld [vmem:[%s7 + $0x18] sm:$0xf]
      %v814 = vld [vmem:[%s7 + $0x1c] sm:$0xf]
      %v815 = vld [vmem:[%s7 + $0x20] sm:$0xf]
      %v816 = vld [vmem:[%s7 + $0x24] sm:$0xf]
      %v817 = vld [vmem:[%s7 + $0x28] sm:$0xf]
      %v818 = vld [vmem:[%s7 + $0x2c] sm:$0xf]
      %v819 = vld [vmem:[%s7 + $0x30] sm:$0xf]
      %v820 = vld [vmem:[%s7 + $0x34] sm:$0xf]
      %v821 = vld [vmem:[%s7 + $0x38] sm:$0xf]
      %v822 = vld [vmem:[%s7 + $0x3c] sm:$0xf]
      %v839 = vunpack.c.l.b16 %v807
      %v840 = vunpack.c.l.b16 %v808
      %v841 = vunpack.c.l.b16 %v809
      %v842 = vunpack.c.l.b16 %v810
      %v843 = vunpack.c.l.b16 %v811
      %v844 = vunpack.c.l.b16 %v812
      %v845 = vunpack.c.l.b16 %v813
      %v846 = vunpack.c.l.b16 %v814
      %v847 = vunpack.c.l.b16 %v815
      %v848 = vunpack.c.l.b16 %v816
      %v849 = vunpack.c.l.b16 %v817
      %v850 = vunpack.c.l.b16 %v818
      %v851 = vunpack.c.l.b16 %v819
      %v852 = vunpack.c.l.b16 %v820
      %v853 = vunpack.c.l.b16 %v821
      %v854 = vunpack.c.l.b16 %v822
      %v855 = vpack.c.b16 %v840, %v839
      %v856 = vpack.c.b16 %v842, %v841
      %v857 = vpack.c.b16 %v844, %v843
      %v858 = vpack.c.b16 %v846, %v845
      %v859 = vpack.c.b16 %v848, %v847
      %v860 = vpack.c.b16 %v850, %v849
      %v861 = vpack.c.b16 %v852, %v851
      %v862 = vpack.c.b16 %v854, %v853
      %871 = vmatpush.bf16.msra.mxu0 %v862
      %872 = vmatpush.bf16.msra.mxu0 %v861
      %873 = vmatpush.bf16.msra.mxu0 %v860
      %874 = vmatpush.bf16.msra.mxu0 %v859
      %875 = vmatpush.bf16.msra.mxu0 %v858
      %876 = vmatpush.bf16.msra.mxu0 %v857
      %877 = vmatpush.bf16.msra.mxu0 %v856
      %878 = vmatpush.bf16.msra.mxu0 %v855
      %879 = vmatmul.bf16.gmra.mxu0 %v806
      %v880 = vpop.f32.mrf.mxu0
      %v881 = vadd.f32 0.0, %v880
      %v882 = vpop.f32.mrf.mxu0
      %883 = vdwg.mxu0
      %v884 = vrot.slane %v881, 4
      %v885 = vadd.f32 %v881, %v884
      %v886 = vrot.slane %v885, 2
      %v887 = vadd.f32 %v885, %v886
      %v888 = vrot.slane %v887, 1
      %v889 = vadd.f32 %v887, %v888
      %v890 = vmul.f32 %v889, %v655
      %v891 = vsub.f32 %v881, %v890
      %v892 = vmul.f32 %v891, %v891
      %v893 = vrot.slane %v892, 4
      %v894 = vadd.f32 %v892, %v893
      %v895 = vrot.slane %v894, 2
      %v896 = vadd.f32 %v894, %v895
      %v897 = vrot.slane %v896, 1
      %v898 = vadd.f32 %v896, %v897
      %v899 = vmul.f32 %v898, %v655
      %v900 = vadd.f32 %v899, 1e-05
      %v901 = vrsqrt.pop %v900
      %v902 = vmul.f32 %v901, %v900
      %v903 = vmul.f32 %v902, %v901
      %v904 = vmul.f32 0.5, %v903
      %v905 = vsub.f32 1.5, %v904
      %v906 = vmul.f32 %v901, %v905
      %vm907 = vweird.f32 %v900
      %vm908 = vweird.f32 %v901
      %vm909 = vmor %vm907, %vm908
      %v910 = vsel %vm909, %v901, %v906
      %v911 = vmul.f32 %v891, %v910
      %v912 = vpack.c.bf16 %v911, %v911
      %v913 = vld [vmem:[%s8] sm:$0xf]
      %v914 = vld [vmem:[%s8 + $0x4] sm:$0xf]
      %v915 = vld [vmem:[%s8 + $0x8] sm:$0xf]
      %v916 = vld [vmem:[%s8 + $0xc] sm:$0xf]
      %v917 = vld [vmem:[%s8 + $0x10] sm:$0xf]
      %v918 = vld [vmem:[%s8 + $0x14] sm:$0xf]
      %v919 = vld [vmem:[%s8 + $0x18] sm:$0xf]
      %v920 = vld [vmem:[%s8 + $0x1c] sm:$0xf]
      %v921 = vld [vmem:[%s8 + $0x20] sm:$0xf]
      %v922 = vld [vmem:[%s8 + $0x24] sm:$0xf]
      %v923 = vld [vmem:[%s8 + $0x28] sm:$0xf]
      %v924 = vld [vmem:[%s8 + $0x2c] sm:$0xf]
      %v925 = vld [vmem:[%s8 + $0x30] sm:$0xf]
      %v926 = vld [vmem:[%s8 + $0x34] sm:$0xf]
      %v927 = vld [vmem:[%s8 + $0x38] sm:$0xf]
      %v928 = vld [vmem:[%s8 + $0x3c] sm:$0xf]
      %v945 = vunpack.c.l.b16 %v913
      %v946 = vunpack.c.l.b16 %v914
      %v947 = vunpack.c.l.b16 %v915
      %v948 = vunpack.c.l.b16 %v916
      %v949 = vunpack.c.l.b16 %v917
      %v950 = vunpack.c.l.b16 %v918
      %v951 = vunpack.c.l.b16 %v919
      %v952 = vunpack.c.l.b16 %v920
      %v953 = vunpack.c.l.b16 %v921
      %v954 = vunpack.c.l.b16 %v922
      %v955 = vunpack.c.l.b16 %v923
      %v956 = vunpack.c.l.b16 %v924
      %v957 = vunpack.c.l.b16 %v925
      %v958 = vunpack.c.l.b16 %v926
      %v959 = vunpack.c.l.b16 %v927
      %v960 = vunpack.c.l.b16 %v928
      %v961 = vpack.c.b16 %v946, %v945
      %v962 = vpack.c.b16 %v948, %v947
      %v963 = vpack.c.b16 %v950, %v949
      %v964 = vpack.c.b16 %v952, %v951
      %v965 = vpack.c.b16 %v954, %v953
      %v966 = vpack.c.b16 %v956, %v955
      %v967 = vpack.c.b16 %v958, %v957
      %v968 = vpack.c.b16 %v960, %v959
      %977 = vmatpush.bf16.msra.mxu0 %v968
      %978 = vmatpush.bf16.msra.mxu0 %v967
      %979 = vmatpush.bf16.msra.mxu0 %v966
      %980 = vmatpush.bf16.msra.mxu0 %v965
      %981 = vmatpush.bf16.msra.mxu0 %v964
      %982 = vmatpush.bf16.msra.mxu0 %v963
      %983 = vmatpush.bf16.msra.mxu0 %v962
      %984 = vmatpush.bf16.msra.mxu0 %v961
      %985 = vmatmul.bf16.gmra.mxu0 %v912
      %v986 = vpop.f32.mrf.mxu0
      %v987 = vadd.f32 0.0, %v986
      %v988 = vpop.f32.mrf.mxu0
      %989 = vdwg.mxu0
      %v990 = vrot.slane %v987, 4
      %v991 = vadd.f32 %v987, %v990
      %v992 = vrot.slane %v991, 2
      %v993 = vadd.f32 %v991, %v992
      %v994 = vrot.slane %v993, 1
      %v995 = vadd.f32 %v993, %v994
      %v996 = vmul.f32 %v995, %v655
      %v997 = vsub.f32 %v987, %v996
      %v998 = vmul.f32 %v997, %v997
      %v999 = vrot.slane %v998, 4
      %v1000 = vadd.f32 %v998, %v999
      %v1001 = vrot.slane %v1000, 2
      %v1002 = vadd.f32 %v1000, %v1001
      %v1003 = vrot.slane %v1002, 1
      %v1004 = vadd.f32 %v1002, %v1003
      %v1005 = vmul.f32 %v1004, %v655
      %v1006 = vadd.f32 %v1005, 1e-05
      %v1007 = vrsqrt.pop %v1006
      %v1008 = vmul.f32 %v1007, %v1006
      %v1009 = vmul.f32 %v1008, %v1007
      %v1010 = vmul.f32 0.5, %v1009
      %v1011 = vsub.f32 1.5, %v1010
      %v1012 = vmul.f32 %v1007, %v1011
      %vm1013 = vweird.f32 %v1006
      %vm1014 = vweird.f32 %v1007
      %vm1015 = vmor %vm1013, %vm1014
      %v1016 = vsel %vm1015, %v1007, %v1012
      %v1017 = vmul.f32 %v997, %v1016
      %v1018 = vld [vmem:[%s9] sm:$0x1]
      %v1020 = vperm.slane %v1018, 0
      %v1022 = vmul.f32 %v1017, %v1020
      %v1023 = vld [vmem:[%s10] sm:$0x1]
      %v1025 = vperm.slane %v1023, 0
      %v1027 = vadd.f32 %v1022, %v1025
      %v1028 = vmax.f32 %v1027, 0.0
      %v1029 = vpack.c.bf16 %v1028, %v1028
      %v1030 = vld [vmem:[%s11] sm:$0xf]
      %v1031 = vld [vmem:[%s11 + $0x4] sm:$0xf]
      %v1032 = vld [vmem:[%s11 + $0x8] sm:$0xf]
      %v1033 = vld [vmem:[%s11 + $0xc] sm:$0xf]
      %v1034 = vld [vmem:[%s11 + $0x10] sm:$0xf]
      %v1035 = vld [vmem:[%s11 + $0x14] sm:$0xf]
      %v1036 = vld [vmem:[%s11 + $0x18] sm:$0xf]
      %v1037 = vld [vmem:[%s11 + $0x1c] sm:$0xf]
      %v1038 = vld [vmem:[%s11 + $0x20] sm:$0xf]
      %v1039 = vld [vmem:[%s11 + $0x24] sm:$0xf]
      %v1040 = vld [vmem:[%s11 + $0x28] sm:$0xf]
      %v1041 = vld [vmem:[%s11 + $0x2c] sm:$0xf]
      %v1042 = vld [vmem:[%s11 + $0x30] sm:$0xf]
      %v1043 = vld [vmem:[%s11 + $0x34] sm:$0xf]
      %v1044 = vld [vmem:[%s11 + $0x38] sm:$0xf]
      %v1045 = vld [vmem:[%s11 + $0x3c] sm:$0xf]
      %v1046 = vld [vmem:[%s12] sm:$0x1]
      %v1048 = vperm.slane %v1046, 0
      %v1066 = vunpack.c.l.b16 %v1030
      %v1067 = vunpack.c.l.b16 %v1031
      %v1068 = vunpack.c.l.b16 %v1032
      %v1069 = vunpack.c.l.b16 %v1033
      %v1070 = vunpack.c.l.b16 %v1034
      %v1071 = vunpack.c.l.b16 %v1035
      %v1072 = vunpack.c.l.b16 %v1036
      %v1073 = vunpack.c.l.b16 %v1037
      %v1074 = vunpack.c.l.b16 %v1038
      %v1075 = vunpack.c.l.b16 %v1039
      %v1076 = vunpack.c.l.b16 %v1040
      %v1077 = vunpack.c.l.b16 %v1041
      %v1078 = vunpack.c.l.b16 %v1042
      %v1079 = vunpack.c.l.b16 %v1043
      %v1080 = vunpack.c.l.b16 %v1044
      %v1081 = vunpack.c.l.b16 %v1045
      %v1082 = vpack.c.b16 %v1067, %v1066
      %v1083 = vpack.c.b16 %v1069, %v1068
      %v1084 = vpack.c.b16 %v1071, %v1070
      %v1085 = vpack.c.b16 %v1073, %v1072
      %v1086 = vpack.c.b16 %v1075, %v1074
      %v1087 = vpack.c.b16 %v1077, %v1076
      %v1088 = vpack.c.b16 %v1079, %v1078
      %v1089 = vpack.c.b16 %v1081, %v1080
      %1098 = vmatpush.bf16.msra.mxu0 %v1089
      %1099 = vmatpush.bf16.msra.mxu0 %v1088
      %1100 = vmatpush.bf16.msra.mxu0 %v1087
      %1101 = vmatpush.bf16.msra.mxu0 %v1086
      %1102 = vmatpush.bf16.msra.mxu0 %v1085
      %1103 = vmatpush.bf16.msra.mxu0 %v1084
      %1104 = vmatpush.bf16.msra.mxu0 %v1083
      %1105 = vmatpush.bf16.msra.mxu0 %v1082
      %1106 = vmatmul.bf16.gmra.mxu0 %v1029
      %v1107 = vpop.f32.mrf.mxu0
      %v1108 = vadd.f32 %v1048, %v1107
      %v1109 = vpop.f32.mrf.mxu0
      %1110 = vdwg.mxu0
      %v1111 = vld [vmem:[%s13] sm:$0xf]
      %v1112 = vld [vmem:[%s13 + $0x4] sm:$0xf]
      %v1113 = vld [vmem:[%s13 + $0x8] sm:$0xf]
      %v1114 = vld [vmem:[%s13 + $0xc] sm:$0xf]
      %v1115 = vld [vmem:[%s13 + $0x10] sm:$0xf]
      %v1116 = vld [vmem:[%s13 + $0x14] sm:$0xf]
      %v1117 = vld [vmem:[%s13 + $0x18] sm:$0xf]
      %v1118 = vld [vmem:[%s13 + $0x1c] sm:$0xf]
      %v1119 = vld [vmem:[%s13 + $0x20] sm:$0xf]
      %v1120 = vld [vmem:[%s13 + $0x24] sm:$0xf]
      %v1121 = vld [vmem:[%s13 + $0x28] sm:$0xf]
      %v1122 = vld [vmem:[%s13 + $0x2c] sm:$0xf]
      %v1123 = vld [vmem:[%s13 + $0x30] sm:$0xf]
      %v1124 = vld [vmem:[%s13 + $0x34] sm:$0xf]
      %v1125 = vld [vmem:[%s13 + $0x38] sm:$0xf]
      %v1126 = vld [vmem:[%s13 + $0x3c] sm:$0xf]
      %v1127 = vld [vmem:[%s14] sm:$0x1]
      %v1129 = vperm.slane %v1127, 0
      %v1147 = vunpack.c.l.b16 %v1111
      %v1148 = vunpack.c.l.b16 %v1112
      %v1149 = vunpack.c.l.b16 %v1113
      %v1150 = vunpack.c.l.b16 %v1114
      %v1151 = vunpack.c.l.b16 %v1115
      %v1152 = vunpack.c.l.b16 %v1116
      %v1153 = vunpack.c.l.b16 %v1117
      %v1154 = vunpack.c.l.b16 %v1118
      %v1155 = vunpack.c.l.b16 %v1119
      %v1156 = vunpack.c.l.b16 %v1120
      %v1157 = vunpack.c.l.b16 %v1121
      %v1158 = vunpack.c.l.b16 %v1122
      %v1159 = vunpack.c.l.b16 %v1123
      %v1160 = vunpack.c.l.b16 %v1124
      %v1161 = vunpack.c.l.b16 %v1125
      %v1162 = vunpack.c.l.b16 %v1126
      %v1163 = vpack.c.b16 %v1148, %v1147
      %v1164 = vpack.c.b16 %v1150, %v1149
      %v1165 = vpack.c.b16 %v1152, %v1151
      %v1166 = vpack.c.b16 %v1154, %v1153
      %v1167 = vpack.c.b16 %v1156, %v1155
      %v1168 = vpack.c.b16 %v1158, %v1157
      %v1169 = vpack.c.b16 %v1160, %v1159
      %v1170 = vpack.c.b16 %v1162, %v1161
      %1179 = vmatpush.bf16.msra.mxu0 %v1170
      %1180 = vmatpush.bf16.msra.mxu0 %v1169
      %1181 = vmatpush.bf16.msra.mxu0 %v1168
      %1182 = vmatpush.bf16.msra.mxu0 %v1167
      %1183 = vmatpush.bf16.msra.mxu0 %v1166
      %1184 = vmatpush.bf16.msra.mxu0 %v1165
      %1185 = vmatpush.bf16.msra.mxu0 %v1164
      %1186 = vmatpush.bf16.msra.mxu0 %v1163
      %1187 = vmatmul.bf16.gmra.mxu0 %v565
      %v1188 = vpop.f32.mrf.mxu0
      %v1189 = vadd.f32 %v1129, %v1188
      %v1190 = vpop.f32.mrf.mxu0
      %1191 = vdwg.mxu0
      %1192 = vst [vmem:[%s556] sm:$0xff] %v911
      %1193 = vst [vmem:[%s560] sm:$0xff] %v1108
      %1194 = vst [vmem:[%s564] sm:$0xff] %v1189
      %p1195 = scmp.lt.s32.totalorder %s29, 1
      %s1196 = scalar_select %p1195, %s29, 1
      %s1197 = smul.addr %s1196, 8
      %s1198 = scalar_lea.vmem %s15, %s1197
      %p1199 = scmp.lt.s32.totalorder %s29, 1
      %s1200 = scalar_select %p1199, %s29, 1
      %s1201 = smul.addr %s1200, 8
      %s1202 = scalar_lea.vmem %s16, %s1201
      %p1203 = scmp.lt.s32.totalorder %s29, 1
      %s1204 = scalar_select %p1203, %s29, 1
      %s1205 = smul.addr %s1204, 8
      %s1206 = scalar_lea.vmem %s17, %s1205
      // Predicated region
      $region81: #{simsiam_forward.3} parent=79 // pred_check
        %p1207 = pneg %p367
      $region82: #{simsiam_forward.3} parent=79 // pred_check_branch
        %1209 = sbr.rel (%p1207) target = $region84
      $region83: #{simsiam_forward.3} parent=79 // pred_region
        _
      $region84: #{simsiam_forward.3} parent=79 // pred_fallthru
        _
      // Predicated region
      $region85: #{simsiam_forward.3} parent=79 // pred_check
        %p1210 = pneg %p393
      $region86: #{simsiam_forward.3} parent=79 // pred_check_branch
        %1212 = sbr.rel (%p1210) target = $region88
      $region87: #{simsiam_forward.3} parent=79 // pred_region
        _
      $region88: #{simsiam_forward.3} parent=79 // pred_fallthru
        _
      // Predicated region
      $region89: #{simsiam_forward.3} parent=79 // pred_check
        %p1213 = pneg %p419
      $region90: #{simsiam_forward.3} parent=79 // pred_check_branch
        %1215 = sbr.rel (%p1213) target = $region92
      $region91: #{simsiam_forward.3} parent=79 // pred_region
        _
      $region92: #{simsiam_forward.3} parent=79 // pred_fallthru
        _
    $region80: #{simsiam_forward.3} parent=5 // pred_fallthru
      _
    %p1216 = scmp.le.s32.totalorder 2, %s24
    // Predicated region
    $region93: #{simsiam_forward.3} parent=5 // pred_check
      %p1217 = pneg %p1216
    $region94: #{simsiam_forward.3} parent=5 // pred_check_branch
      %1219 = sbr.rel (%p1217) target = $region96
    $region95: #{simsiam_forward.3} parent=5 // pred_region
      %s1220 = ssub.s32 %s24, 2
      // Predicated region
      $region97: #{simsiam_forward.3} parent=95 // pred_check
        %p1221 = pneg %p373
      $region98: #{simsiam_forward.3} parent=95 // pred_check_branch
        %1223 = sbr.rel (%p1221) target = $region100
      $region99: #{simsiam_forward.3} parent=95 // pred_region
        %p1224 = scmp.lt.s32.totalorder %s30, 1
        %s1225 = scalar_select %p1224, %s30, 1
        %s1226 = smul.addr %s1225, 8
        %s1227 = scalar_lea.vmem %s15, %s1226
      $region100: #{simsiam_forward.3} parent=95 // pred_fallthru
        _
      // Predicated region
      $region101: #{simsiam_forward.3} parent=95 // pred_check
        %p1228 = pneg %p399
      $region102: #{simsiam_forward.3} parent=95 // pred_check_branch
        %1230 = sbr.rel (%p1228) target = $region104
      $region103: #{simsiam_forward.3} parent=95 // pred_region
        %p1231 = scmp.lt.s32.totalorder %s30, 1
        %s1232 = scalar_select %p1231, %s30, 1
        %s1233 = smul.addr %s1232, 8
        %s1234 = scalar_lea.vmem %s16, %s1233
      $region104: #{simsiam_forward.3} parent=95 // pred_fallthru
        _
      // Predicated region
      $region105: #{simsiam_forward.3} parent=95 // pred_check
        %p1235 = pneg %p425
      $region106: #{simsiam_forward.3} parent=95 // pred_check_branch
        %1237 = sbr.rel (%p1235) target = $region108
      $region107: #{simsiam_forward.3} parent=95 // pred_region
        %p1238 = scmp.lt.s32.totalorder %s30, 1
        %s1239 = scalar_select %p1238, %s30, 1
        %s1240 = smul.addr %s1239, 8
        %s1241 = scalar_lea.vmem %s17, %s1240
      $region108: #{simsiam_forward.3} parent=95 // pred_fallthru
        _
    $region96: #{simsiam_forward.3} parent=5 // pred_fallthru
      _
  $region6: #{simsiam_forward.3} parent=0 // loop_footer
    %s28 = sadd.s32 1, %s24
  $region7: #{simsiam_forward.3} parent=0 // loop_footer_branch
    %23 = sbr.rel target = $region3
  $region8: #{simsiam_forward.3} parent=0 // loop_exit
    _

// kernel: simsiam_forward.2
$region0: #{simsiam_forward.2}
  #allocation0 [shape = 'u32[]', space=smem, size = 0x4, offset = 0x4, fixed_abs, tag = 'smem constant byte address 0x4 - core index']
  #allocation1 [shape = 'u32[72,128]{1,0:T(1,128)}', space=vmem, size = 0x9000, scoped, tag = 'internal scratch']
  %s0 = inlined_call_operand.vmem [shape: bf16[2,2048,128], index: 0, kind: input, shape index: {}]
  %s1 = inlined_call_operand.vmem [shape: bf16[128,128], index: 1, kind: input, shape index: {}]
  %s2 = inlined_call_operand.vmem [shape: f32[1,128], index: 2, kind: input, shape index: {}]
  %s3 = inlined_call_operand.vmem [shape: f32[1,128], index: 3, kind: input, shape index: {}]
  %s4 = inlined_call_operand.vmem [shape: bf16[8,2048], index: 4, kind: input, shape index: {}]
  %s5 = inlined_call_operand.vmem [shape: bf16[2,8,128], index: 5, kind: output, shape index: {}]
  %s6 = sld [smem:[#allocation0]]
  $region53: #{simsiam_forward.2} parent=0
    _
  %s8 = ssub.s32 1, %s6
  %s9 = scalar_select 0, %s8, %s6
  loop: start=0, step=1, limit=4
  $region2: #{simsiam_forward.2} parent=0 // loop_pre_header
    _
  $region3: #{simsiam_forward.2} parent=0 // loop_header
    %s11 = sphi 0, %s15
    %p12 = scmp.ge.s32.totalorder %s11, 4
    %s21 = sphi 0, %s23
    %s24 = sphi 0, %s21
    %s25 = sphi 0, %s24
    %s41 = sphi 0, %s25
    %s45 = sphi 0, %s45
    %s47 = sphi 0, %s45
    %s48 = sphi 0, %s47
    %s62 = sphi 0, %s48
    %s66 = sphi 0, %s66
    %s68 = sphi 0, %s66
    %s69 = sphi 0, %s68
    %s83 = sphi 0, %s69
    %s87 = sphi 0, %s87
    %s89 = sphi 0, %s87
    %s90 = sphi 0, %s89
    %s104 = sphi 0, %s90
    %s108 = sphi 0, %s108
    %s110 = sphi 0, %s108
    %s111 = sphi 0, %s110
    %s125 = sphi 0, %s111
    %s131 = sphi 0, %s133
    %s134 = sphi 0, %s131
    %s135 = sphi 0, %s134
    %s151 = sphi 0, %s135
  $region4: #{simsiam_forward.2} parent=0 // loop_header_branch
    %14 = sbr.rel (%p12) target = $region8
  $region5: #{simsiam_forward.2} parent=0 // loop_body
    %s16 = ssub.s32 %s11, 1
    %s17 = ssub.s32 %s11, 2
    %s18 = sadd.s32 %s11, 1
    %s19 = ssub.s32 %s11, %s18
    %p20 = scmp.eq.s32.totalorder %s19, 0
    %s22 = sadd.s32 %s21, 1
    %s23 = scalar_select %p20, %s21, %s22
    %p26 = pneg %p20
    %p27 = scmp.eq.s32.totalorder %s11, 1
    %p28 = por %p26, %p27
    %p29 = scmp.ne.s32.totalorder %s21, %s24
    %p30 = scmp.eq.s32.totalorder %s11, 0
    %p31 = por %p29, %p30
    %p32 = scmp.ne.s32.totalorder %s21, %s24
    %p33 = scmp.eq.s32.totalorder %s16, 1
    %p34 = por %p32, %p33
    %p35 = scmp.ne.s32.totalorder %s24, %s25
    %p36 = scmp.eq.s32.totalorder %s16, 0
    %p37 = por %p35, %p36
    %p38 = scmp.ne.s32.totalorder %s24, %s25
    %p39 = scmp.eq.s32.totalorder %s17, 1
    %p40 = por %p38, %p39
    %p42 = scmp.ne.s32.totalorder %s25, %s41
    %p43 = scmp.eq.s32.totalorder %s17, 0
    %p44 = por %p42, %p43
    %s46 = sadd.s32 %s45, 1
    %p49 = scmp.eq.s32.totalorder %s11, 1
    %p50 = scmp.ne.s32.totalorder %s45, %s47
    %p51 = scmp.eq.s32.totalorder %s11, 0
    %p52 = por %p50, %p51
    %p53 = scmp.ne.s32.totalorder %s45, %s47
    %p54 = scmp.eq.s32.totalorder %s16, 1
    %p55 = por %p53, %p54
    %p56 = scmp.ne.s32.totalorder %s47, %s48
    %p57 = scmp.eq.s32.totalorder %s16, 0
    %p58 = por %p56, %p57
    %p59 = scmp.ne.s32.totalorder %s47, %s48
    %p60 = scmp.eq.s32.totalorder %s17, 1
    %p61 = por %p59, %p60
    %p63 = scmp.ne.s32.totalorder %s48, %s62
    %p64 = scmp.eq.s32.totalorder %s17, 0
    %p65 = por %p63, %p64
    %s67 = sadd.s32 %s66, 1
    %p70 = scmp.eq.s32.totalorder %s11, 1
    %p71 = scmp.ne.s32.totalorder %s66, %s68
    %p72 = scmp.eq.s32.totalorder %s11, 0
    %p73 = por %p71, %p72
    %p74 = scmp.ne.s32.totalorder %s66, %s68
    %p75 = scmp.eq.s32.totalorder %s16, 1
    %p76 = por %p74, %p75
    %p77 = scmp.ne.s32.totalorder %s68, %s69
    %p78 = scmp.eq.s32.totalorder %s16, 0
    %p79 = por %p77, %p78
    %p80 = scmp.ne.s32.totalorder %s68, %s69
    %p81 = scmp.eq.s32.totalorder %s17, 1
    %p82 = por %p80, %p81
    %p84 = scmp.ne.s32.totalorder %s69, %s83
    %p85 = scmp.eq.s32.totalorder %s17, 0
    %p86 = por %p84, %p85
    %s88 = sadd.s32 %s87, 1
    %p91 = scmp.eq.s32.totalorder %s11, 1
    %p92 = scmp.ne.s32.totalorder %s87, %s89
    %p93 = scmp.eq.s32.totalorder %s11, 0
    %p94 = por %p92, %p93
    %p95 = scmp.ne.s32.totalorder %s87, %s89
    %p96 = scmp.eq.s32.totalorder %s16, 1
    %p97 = por %p95, %p96
    %p98 = scmp.ne.s32.totalorder %s89, %s90
    %p99 = scmp.eq.s32.totalorder %s16, 0
    %p100 = por %p98, %p99
    %p101 = scmp.ne.s32.totalorder %s89, %s90
    %p102 = scmp.eq.s32.totalorder %s17, 1
    %p103 = por %p101, %p102
    %p105 = scmp.ne.s32.totalorder %s90, %s104
    %p106 = scmp.eq.s32.totalorder %s17, 0
    %p107 = por %p105, %p106
    %s109 = sadd.s32 %s108, 1
    %p112 = scmp.eq.s32.totalorder %s11, 1
    %p113 = scmp.ne.s32.totalorder %s108, %s110
    %p114 = scmp.eq.s32.totalorder %s11, 0
    %p115 = por %p113, %p114
    %p116 = scmp.ne.s32.totalorder %s108, %s110
    %p117 = scmp.eq.s32.totalorder %s16, 1
    %p118 = por %p116, %p117
    %p119 = scmp.ne.s32.totalorder %s110, %s111
    %p120 = scmp.eq.s32.totalorder %s16, 0
    %p121 = por %p119, %p120
    %p122 = scmp.ne.s32.totalorder %s110, %s111
    %p123 = scmp.eq.s32.totalorder %s17, 1
    %p124 = por %p122, %p123
    %p126 = scmp.ne.s32.totalorder %s111, %s125
    %p127 = scmp.eq.s32.totalorder %s17, 0
    %p128 = por %p126, %p127
    %s129 = ssub.s32 %s11, %s18
    %p130 = scmp.eq.s32.totalorder %s129, 0
    %s132 = sadd.s32 %s131, 1
    %s133 = scalar_select %p130, %s131, %s132
    %p136 = pneg %p130
    %p137 = scmp.eq.s32.totalorder %s11, 1
    %p138 = por %p136, %p137
    %p139 = scmp.ne.s32.totalorder %s131, %s134
    %p140 = scmp.eq.s32.totalorder %s11, 0
    %p141 = por %p139, %p140
    %p142 = scmp.ne.s32.totalorder %s131, %s134
    %p143 = scmp.eq.s32.totalorder %s16, 1
    %p144 = por %p142, %p143
    %p145 = scmp.ne.s32.totalorder %s134, %s135
    %p146 = scmp.eq.s32.totalorder %s16, 0
    %p147 = por %p145, %p146
    %p148 = scmp.ne.s32.totalorder %s134, %s135
    %p149 = scmp.eq.s32.totalorder %s17, 1
    %p150 = por %p148, %p149
    %p152 = scmp.ne.s32.totalorder %s135, %s151
    %p153 = scmp.eq.s32.totalorder %s17, 0
    %p154 = por %p152, %p153
    %p155 = scmp.le.s32.totalorder 1, %s11
    %p156 = scmp.lt.s32.totalorder %s11, 3
    %p157 = pnand %p155, %p156
    %p158 = pneg %p157
    // Predicated region
    $region9: #{simsiam_forward.2} parent=5 // pred_check
      _
    $region10: #{simsiam_forward.2} parent=5 // pred_check_branch
      %160 = sbr.rel (%p157) target = $region12
    $region11: #{simsiam_forward.2} parent=5 // pred_region
      %s161 = ssub.s32 %s11, 1
      // Predicated region
      $region13: #{simsiam_forward.2} parent=11 // pred_check
        %p162 = pneg %p58
      $region14: #{simsiam_forward.2} parent=11 // pred_check_branch
        %164 = sbr.rel (%p162) target = $region16
      $region15: #{simsiam_forward.2} parent=11 // pred_region
        _
      $region16: #{simsiam_forward.2} parent=11 // pred_fallthru
        _
      // Predicated region
      $region17: #{simsiam_forward.2} parent=11 // pred_check
        %p165 = pneg %p79
      $region18: #{simsiam_forward.2} parent=11 // pred_check_branch
        %167 = sbr.rel (%p165) target = $region20
      $region19: #{simsiam_forward.2} parent=11 // pred_region
        _
      $region20: #{simsiam_forward.2} parent=11 // pred_fallthru
        _
      // Predicated region
      $region21: #{simsiam_forward.2} parent=11 // pred_check
        %p168 = pneg %p100
      $region22: #{simsiam_forward.2} parent=11 // pred_check_branch
        %170 = sbr.rel (%p168) target = $region24
      $region23: #{simsiam_forward.2} parent=11 // pred_region
        _
      $region24: #{simsiam_forward.2} parent=11 // pred_fallthru
        _
      // Predicated region
      $region25: #{simsiam_forward.2} parent=11 // pred_check
        %p171 = pneg %p121
      $region26: #{simsiam_forward.2} parent=11 // pred_check_branch
        %173 = sbr.rel (%p171) target = $region28
      $region27: #{simsiam_forward.2} parent=11 // pred_region
        _
      $region28: #{simsiam_forward.2} parent=11 // pred_fallthru
        _
    $region12: #{simsiam_forward.2} parent=5 // pred_fallthru
      _
    %p174 = scmp.lt.s32.totalorder %s11, 2
    // Predicated region
    $region29: #{simsiam_forward.2} parent=5 // pred_check
      %p175 = pneg %p174
    $region30: #{simsiam_forward.2} parent=5 // pred_check_branch
      %177 = sbr.rel (%p175) target = $region32
    $region31: #{simsiam_forward.2} parent=5 // pred_region
      // Predicated region
      $region33: #{simsiam_forward.2} parent=31 // pred_check
        %p178 = pneg %p31
      $region34: #{simsiam_forward.2} parent=31 // pred_check_branch
        %180 = sbr.rel (%p178) target = $region36
      $region35: #{simsiam_forward.2} parent=31 // pred_region
        %p181 = scmp.lt.s32.totalorder %s11, 1
        %s182 = scalar_select %p181, %s11, 1
        %s183 = smul.addr %s182, 256
        %s184 = smul.addr %s183, 4
        %s185 = scalar_lea.vmem %s0, %s184
      $region36: #{simsiam_forward.2} parent=31 // pred_fallthru
        _
    $region32: #{simsiam_forward.2} parent=5 // pred_fallthru
      _
    %p186 = scmp.le.s32.totalorder 1, %s11
    %p187 = scmp.lt.s32.totalorder %s11, 3
    %p188 = pnand %p186, %p187
    %p189 = pneg %p188
    // Predicated region
    $region37: #{simsiam_forward.2} parent=5 // pred_check
      _
    $region38: #{simsiam_forward.2} parent=5 // pred_check_branch
      %191 = sbr.rel (%p188) target = $region40
    $region39: #{simsiam_forward.2} parent=5 // pred_region
      %s192 = ssub.s32 %s11, 1
      %p193 = scmp.lt.s32.totalorder %s16, 1
      %s194 = scalar_select %p193, %s16, 1
      %s195 = smul.addr %s194, 256
      %s196 = smul.addr %s195, 4
      %s197 = scalar_lea.vmem %s0, %s196
      %p198 = pneg %p37
      %p199 = pneg %p34
      %p200 = pneg %p58
      %p201 = pneg %p55
      %p202 = pneg %p79
      %p203 = pneg %p76
      %p204 = pneg %p100
      %p205 = pneg %p97
      %p206 = pneg %p121
      %p207 = pneg %p118
      %p208 = pneg %p147
      %p209 = pneg %p144
      %p210 = scmp.lt.s32.totalorder %s16, 1
      %s211 = scalar_select %p210, %s16, 1
      %s212 = smul.addr %s211, 4
      %s213 = scalar_lea.vmem %s5, %s212
      %p214 = scmp.lt.s32.totalorder %s16, 1
      %s215 = scalar_select %p214, %s16, 1
      %s216 = smul.addr %s215, 256
      %s217 = smul.addr %s216, 4
      %s218 = scalar_lea.vmem %s0, %s217
      %p219 = scmp.lt.s32.totalorder %s16, 1
      %s220 = scalar_select %p219, %s16, 1
      %s221 = smul.addr %s220, 4
      %s222 = scalar_lea.vmem %s5, %s221
      %v223 = vld [vmem:[%s218] sm:$0xf]
      %v224 = vld [vmem:[%s218 + $0x4] sm:$0xf]
      %v225 = vld [vmem:[%s218 + $0x8] sm:$0xf]
      %v226 = vld [vmem:[%s218 + $0xc] sm:$0xf]
      %v227 = vld [vmem:[%s218 + $0x10] sm:$0xf]
      %v228 = vld [vmem:[%s218 + $0x14] sm:$0xf]
      %v229 = vld [vmem:[%s218 + $0x18] sm:$0xf]
      %v230 = vld [vmem:[%s218 + $0x1c] sm:$0xf]
      %v231 = vld [vmem:[%s218 + $0x20] sm:$0xf]
      %v232 = vld [vmem:[%s218 + $0x24] sm:$0xf]
      %v233 = vld [vmem:[%s218 + $0x28] sm:$0xf]
      %v234 = vld [vmem:[%s218 + $0x2c] sm:$0xf]
      %v235 = vld [vmem:[%s218 + $0x30] sm:$0xf]
      %v236 = vld [vmem:[%s218 + $0x34] sm:$0xf]
      %v237 = vld [vmem:[%s218 + $0x38] sm:$0xf]
      %v238 = vld [vmem:[%s218 + $0x3c] sm:$0xf]
      %v239 = vld [vmem:[%s218 + $0x40] sm:$0xf]
      %v240 = vld [vmem:[%s218 + $0x44] sm:$0xf]
      %v241 = vld [vmem:[%s218 + $0x48] sm:$0xf]
      %v242 = vld [vmem:[%s218 + $0x4c] sm:$0xf]
      %v243 = vld [vmem:[%s218 + $0x50] sm:$0xf]
      %v244 = vld [vmem:[%s218 + $0x54] sm:$0xf]
      %v245 = vld [vmem:[%s218 + $0x58] sm:$0xf]
      %v246 = vld [vmem:[%s218 + $0x5c] sm:$0xf]
      %v247 = vld [vmem:[%s218 + $0x60] sm:$0xf]
      %v248 = vld [vmem:[%s218 + $0x64] sm:$0xf]
      %v249 = vld [vmem:[%s218 + $0x68] sm:$0xf]
      %v250 = vld [vmem:[%s218 + $0x6c] sm:$0xf]
      %v251 = vld [vmem:[%s218 + $0x70] sm:$0xf]
      %v252 = vld [vmem:[%s218 + $0x74] sm:$0xf]
      %v253 = vld [vmem:[%s218 + $0x78] sm:$0xf]
      %v254 = vld [vmem:[%s218 + $0x7c] sm:$0xf]
      %v255 = vld [vmem:[%s218 + $0x80] sm:$0xf]
      %v256 = vld [vmem:[%s218 + $0x84] sm:$0xf]
      %v257 = vld [vmem:[%s218 + $0x88] sm:$0xf]
      %v258 = vld [vmem:[%s218 + $0x8c] sm:$0xf]
      %v259 = vld [vmem:[%s218 + $0x90] sm:$0xf]
      %v260 = vld [vmem:[%s218 + $0x94] sm:$0xf]
      %v261 = vld [vmem:[%s218 + $0x98] sm:$0xf]
      %v262 = vld [vmem:[%s218 + $0x9c] sm:$0xf]
      %v263 = vld [vmem:[%s218 + $0xa0] sm:$0xf]
      %v264 = vld [vmem:[%s218 + $0xa4] sm:$0xf]
      %v265 = vld [vmem:[%s218 + $0xa8] sm:$0xf]
      %v266 = vld [vmem:[%s218 + $0xac] sm:$0xf]
      %v267 = vld [vmem:[%s218 + $0xb0] sm:$0xf]
      %v268 = vld [vmem:[%s218 + $0xb4] sm:$0xf]
      %v269 = vld [vmem:[%s218 + $0xb8] sm:$0xf]
      %v270 = vld [vmem:[%s218 + $0xbc] sm:$0xf]
      %v271 = vld [vmem:[%s218 + $0xc0] sm:$0xf]
      %v272 = vld [vmem:[%s218 + $0xc4] sm:$0xf]
      %v273 = vld [vmem:[%s218 + $0xc8] sm:$0xf]
      %v274 = vld [vmem:[%s218 + $0xcc] sm:$0xf]
      %v275 = vld [vmem:[%s218 + $0xd0] sm:$0xf]
      %v276 = vld [vmem:[%s218 + $0xd4] sm:$0xf]
      %v277 = vld [vmem:[%s218 + $0xd8] sm:$0xf]
      %v278 = vld [vmem:[%s218 + $0xdc] sm:$0xf]
      %v279 = vld [vmem:[%s218 + $0xe0] sm:$0xf]
      %v280 = vld [vmem:[%s218 + $0xe4] sm:$0xf]
      %v281 = vld [vmem:[%s218 + $0xe8] sm:$0xf]
      %v282 = vld [vmem:[%s218 + $0xec] sm:$0xf]
      %v283 = vld [vmem:[%s218 + $0xf0] sm:$0xf]
      %v284 = vld [vmem:[%s218 + $0xf4] sm:$0xf]
      %v285 = vld [vmem:[%s218 + $0xf8] sm:$0xf]
      %v286 = vld [vmem:[%s218 + $0xfc] sm:$0xf]
      %v287 = vld [vmem:[%s218 + $0x100] sm:$0xf]
      %v288 = vld [vmem:[%s218 + $0x104] sm:$0xf]
      %v289 = vld [vmem:[%s218 + $0x108] sm:$0xf]
      %v290 = vld [vmem:[%s218 + $0x10c] sm:$0xf]
      %v291 = vld [vmem:[%s218 + $0x110] sm:$0xf]
      %v292 = vld [vmem:[%s218 + $0x114] sm:$0xf]
      %v293 = vld [vmem:[%s218 + $0x118] sm:$0xf]
      %v294 = vld [vmem:[%s218 + $0x11c] sm:$0xf]
      %v295 = vld [vmem:[%s218 + $0x120] sm:$0xf]
      %v296 = vld [vmem:[%s218 + $0x124] sm:$0xf]
      %v297 = vld [vmem:[%s218 + $0x128] sm:$0xf]
      %v298 = vld [vmem:[%s218 + $0x12c] sm:$0xf]
      %v299 = vld [vmem:[%s218 + $0x130] sm:$0xf]
      %v300 = vld [vmem:[%s218 + $0x134] sm:$0xf]
      %v301 = vld [vmem:[%s218 + $0x138] sm:$0xf]
      %v302 = vld [vmem:[%s218 + $0x13c] sm:$0xf]
      %v303 = vld [vmem:[%s218 + $0x140] sm:$0xf]
      %v304 = vld [vmem:[%s218 + $0x144] sm:$0xf]
      %v305 = vld [vmem:[%s218 + $0x148] sm:$0xf]
      %v306 = vld [vmem:[%s218 + $0x14c] sm:$0xf]
      %v307 = vld [vmem:[%s218 + $0x150] sm:$0xf]
      %v308 = vld [vmem:[%s218 + $0x154] sm:$0xf]
      %v309 = vld [vmem:[%s218 + $0x158] sm:$0xf]
      %v310 = vld [vmem:[%s218 + $0x15c] sm:$0xf]
      %v311 = vld [vmem:[%s218 + $0x160] sm:$0xf]
      %v312 = vld [vmem:[%s218 + $0x164] sm:$0xf]
      %v313 = vld [vmem:[%s218 + $0x168] sm:$0xf]
      %v314 = vld [vmem:[%s218 + $0x16c] sm:$0xf]
      %v315 = vld [vmem:[%s218 + $0x170] sm:$0xf]
      %v316 = vld [vmem:[%s218 + $0x174] sm:$0xf]
      %v317 = vld [vmem:[%s218 + $0x178] sm:$0xf]
      %v318 = vld [vmem:[%s218 + $0x17c] sm:$0xf]
      %v319 = vld [vmem:[%s218 + $0x180] sm:$0xf]
      %v320 = vld [vmem:[%s218 + $0x184] sm:$0xf]
      %v321 = vld [vmem:[%s218 + $0x188] sm:$0xf]
      %v322 = vld [vmem:[%s218 + $0x18c] sm:$0xf]
      %v323 = vld [vmem:[%s218 + $0x190] sm:$0xf]
      %v324 = vld [vmem:[%s218 + $0x194] sm:$0xf]
      %v325 = vld [vmem:[%s218 + $0x198] sm:$0xf]
      %v326 = vld [vmem:[%s218 + $0x19c] sm:$0xf]
      %v327 = vld [vmem:[%s218 + $0x1a0] sm:$0xf]
      %v328 = vld [vmem:[%s218 + $0x1a4] sm:$0xf]
      %v329 = vld [vmem:[%s218 + $0x1a8] sm:$0xf]
      %v330 = vld [vmem:[%s218 + $0x1ac] sm:$0xf]
      %v331 = vld [vmem:[%s218 + $0x1b0] sm:$0xf]
      %v332 = vld [vmem:[%s218 + $0x1b4] sm:$0xf]
      %v333 = vld [vmem:[%s218 + $0x1b8] sm:$0xf]
      %v334 = vld [vmem:[%s218 + $0x1bc] sm:$0xf]
      %v335 = vld [vmem:[%s218 + $0x1c0] sm:$0xf]
      %v336 = vld [vmem:[%s218 + $0x1c4] sm:$0xf]
      %v337 = vld [vmem:[%s218 + $0x1c8] sm:$0xf]
      %v338 = vld [vmem:[%s218 + $0x1cc] sm:$0xf]
      %v339 = vld [vmem:[%s218 + $0x1d0] sm:$0xf]
      %v340 = vld [vmem:[%s218 + $0x1d4] sm:$0xf]
      %v341 = vld [vmem:[%s218 + $0x1d8] sm:$0xf]
      %v342 = vld [vmem:[%s218 + $0x1dc] sm:$0xf]
      %v343 = vld [vmem:[%s218 + $0x1e0] sm:$0xf]
      %v344 = vld [vmem:[%s218 + $0x1e4] sm:$0xf]
      %v345 = vld [vmem:[%s218 + $0x1e8] sm:$0xf]
      %v346 = vld [vmem:[%s218 + $0x1ec] sm:$0xf]
      %v347 = vld [vmem:[%s218 + $0x1f0] sm:$0xf]
      %v348 = vld [vmem:[%s218 + $0x1f4] sm:$0xf]
      %v349 = vld [vmem:[%s218 + $0x1f8] sm:$0xf]
      %v350 = vld [vmem:[%s218 + $0x1fc] sm:$0xf]
      %v351 = vld [vmem:[%s218 + $0x200] sm:$0xf]
      %v352 = vld [vmem:[%s218 + $0x204] sm:$0xf]
      %v353 = vld [vmem:[%s218 + $0x208] sm:$0xf]
      %v354 = vld [vmem:[%s218 + $0x20c] sm:$0xf]
      %v355 = vld [vmem:[%s218 + $0x210] sm:$0xf]
      %v356 = vld [vmem:[%s218 + $0x214] sm:$0xf]
      %v357 = vld [vmem:[%s218 + $0x218] sm:$0xf]
      %v358 = vld [vmem:[%s218 + $0x21c] sm:$0xf]
      %v359 = vld [vmem:[%s218 + $0x220] sm:$0xf]
      %v360 = vld [vmem:[%s218 + $0x224] sm:$0xf]
      %v361 = vld [vmem:[%s218 + $0x228] sm:$0xf]
      %v362 = vld [vmem:[%s218 + $0x22c] sm:$0xf]
      %v363 = vld [vmem:[%s218 + $0x230] sm:$0xf]
      %v364 = vld [vmem:[%s218 + $0x234] sm:$0xf]
      %v365 = vld [vmem:[%s218 + $0x238] sm:$0xf]
      %v366 = vld [vmem:[%s218 + $0x23c] sm:$0xf]
      %v367 = vld [vmem:[%s218 + $0x240] sm:$0xf]
      %v368 = vld [vmem:[%s218 + $0x244] sm:$0xf]
      %v369 = vld [vmem:[%s218 + $0x248] sm:$0xf]
      %v370 = vld [vmem:[%s218 + $0x24c] sm:$0xf]
      %v371 = vld [vmem:[%s218 + $0x250] sm:$0xf]
      %v372 = vld [vmem:[%s218 + $0x254] sm:$0xf]
      %v373 = vld [vmem:[%s218 + $0x258] sm:$0xf]
      %v374 = vld [vmem:[%s218 + $0x25c] sm:$0xf]
      %v375 = vld [vmem:[%s218 + $0x260] sm:$0xf]
      %v376 = vld [vmem:[%s218 + $0x264] sm:$0xf]
      %v377 = vld [vmem:[%s218 + $0x268] sm:$0xf]
      %v378 = vld [vmem:[%s218 + $0x26c] sm:$0xf]
      %v379 = vld [vmem:[%s218 + $0x270] sm:$0xf]
      %v380 = vld [vmem:[%s218 + $0x274] sm:$0xf]
      %v381 = vld [vmem:[%s218 + $0x278] sm:$0xf]
      %v382 = vld [vmem:[%s218 + $0x27c] sm:$0xf]
      %v383 = vld [vmem:[%s218 + $0x280] sm:$0xf]
      %v384 = vld [vmem:[%s218 + $0x284] sm:$0xf]
      %v385 = vld [vmem:[%s218 + $0x288] sm:$0xf]
      %v386 = vld [vmem:[%s218 + $0x28c] sm:$0xf]
      %v387 = vld [vmem:[%s218 + $0x290] sm:$0xf]
      %v388 = vld [vmem:[%s218 + $0x294] sm:$0xf]
      %v389 = vld [vmem:[%s218 + $0x298] sm:$0xf]
      %v390 = vld [vmem:[%s218 + $0x29c] sm:$0xf]
      %v391 = vld [vmem:[%s218 + $0x2a0] sm:$0xf]
      %v392 = vld [vmem:[%s218 + $0x2a4] sm:$0xf]
      %v393 = vld [vmem:[%s218 + $0x2a8] sm:$0xf]
      %v394 = vld [vmem:[%s218 + $0x2ac] sm:$0xf]
      %v395 = vld [vmem:[%s218 + $0x2b0] sm:$0xf]
      %v396 = vld [vmem:[%s218 + $0x2b4] sm:$0xf]
      %v397 = vld [vmem:[%s218 + $0x2b8] sm:$0xf]
      %v398 = vld [vmem:[%s218 + $0x2bc] sm:$0xf]
      %v399 = vld [vmem:[%s218 + $0x2c0] sm:$0xf]
      %v400 = vld [vmem:[%s218 + $0x2c4] sm:$0xf]
      %v401 = vld [vmem:[%s218 + $0x2c8] sm:$0xf]
      %v402 = vld [vmem:[%s218 + $0x2cc] sm:$0xf]
      %v403 = vld [vmem:[%s218 + $0x2d0] sm:$0xf]
      %v404 = vld [vmem:[%s218 + $0x2d4] sm:$0xf]
      %v405 = vld [vmem:[%s218 + $0x2d8] sm:$0xf]
      %v406 = vld [vmem:[%s218 + $0x2dc] sm:$0xf]
      %v407 = vld [vmem:[%s218 + $0x2e0] sm:$0xf]
      %v408 = vld [vmem:[%s218 + $0x2e4] sm:$0xf]
      %v409 = vld [vmem:[%s218 + $0x2e8] sm:$0xf]
      %v410 = vld [vmem:[%s218 + $0x2ec] sm:$0xf]
      %v411 = vld [vmem:[%s218 + $0x2f0] sm:$0xf]
      %v412 = vld [vmem:[%s218 + $0x2f4] sm:$0xf]
      %v413 = vld [vmem:[%s218 + $0x2f8] sm:$0xf]
      %v414 = vld [vmem:[%s218 + $0x2fc] sm:$0xf]
      %v415 = vld [vmem:[%s218 + $0x300] sm:$0xf]
      %v416 = vld [vmem:[%s218 + $0x304] sm:$0xf]
      %v417 = vld [vmem:[%s218 + $0x308] sm:$0xf]
      %v418 = vld [vmem:[%s218 + $0x30c] sm:$0xf]
      %v419 = vld [vmem:[%s218 + $0x310] sm:$0xf]
      %v420 = vld [vmem:[%s218 + $0x314] sm:$0xf]
      %v421 = vld [vmem:[%s218 + $0x318] sm:$0xf]
      %v422 = vld [vmem:[%s218 + $0x31c] sm:$0xf]
      %v423 = vld [vmem:[%s218 + $0x320] sm:$0xf]
      %v424 = vld [vmem:[%s218 + $0x324] sm:$0xf]
      %v425 = vld [vmem:[%s218 + $0x328] sm:$0xf]
      %v426 = vld [vmem:[%s218 + $0x32c] sm:$0xf]
      %v427 = vld [vmem:[%s218 + $0x330] sm:$0xf]
      %v428 = vld [vmem:[%s218 + $0x334] sm:$0xf]
      %v429 = vld [vmem:[%s218 + $0x338] sm:$0xf]
      %v430 = vld [vmem:[%s218 + $0x33c] sm:$0xf]
      %v431 = vld [vmem:[%s218 + $0x340] sm:$0xf]
      %v432 = vld [vmem:[%s218 + $0x344] sm:$0xf]
      %v433 = vld [vmem:[%s218 + $0x348] sm:$0xf]
      %v434 = vld [vmem:[%s218 + $0x34c] sm:$0xf]
      %v435 = vld [vmem:[%s218 + $0x350] sm:$0xf]
      %v436 = vld [vmem:[%s218 + $0x354] sm:$0xf]
      %v437 = vld [vmem:[%s218 + $0x358] sm:$0xf]
      %v438 = vld [vmem:[%s218 + $0x35c] sm:$0xf]
      %v439 = vld [vmem:[%s218 + $0x360] sm:$0xf]
      %v440 = vld [vmem:[%s218 + $0x364] sm:$0xf]
      %v441 = vld [vmem:[%s218 + $0x368] sm:$0xf]
      %v442 = vld [vmem:[%s218 + $0x36c] sm:$0xf]
      %v443 = vld [vmem:[%s218 + $0x370] sm:$0xf]
      %v444 = vld [vmem:[%s218 + $0x374] sm:$0xf]
      %v445 = vld [vmem:[%s218 + $0x378] sm:$0xf]
      %v446 = vld [vmem:[%s218 + $0x37c] sm:$0xf]
      %v447 = vld [vmem:[%s218 + $0x380] sm:$0xf]
      %v448 = vld [vmem:[%s218 + $0x384] sm:$0xf]
      %v449 = vld [vmem:[%s218 + $0x388] sm:$0xf]
      %v450 = vld [vmem:[%s218 + $0x38c] sm:$0xf]
      %v451 = vld [vmem:[%s218 + $0x390] sm:$0xf]
      %v452 = vld [vmem:[%s218 + $0x394] sm:$0xf]
      %v453 = vld [vmem:[%s218 + $0x398] sm:$0xf]
      %v454 = vld [vmem:[%s218 + $0x39c] sm:$0xf]
      %v455 = vld [vmem:[%s218 + $0x3a0] sm:$0xf]
      %v456 = vld [vmem:[%s218 + $0x3a4] sm:$0xf]
      %v457 = vld [vmem:[%s218 + $0x3a8] sm:$0xf]
      %v458 = vld [vmem:[%s218 + $0x3ac] sm:$0xf]
      %v459 = vld [vmem:[%s218 + $0x3b0] sm:$0xf]
      %v460 = vld [vmem:[%s218 + $0x3b4] sm:$0xf]
      %v461 = vld [vmem:[%s218 + $0x3b8] sm:$0xf]
      %v462 = vld [vmem:[%s218 + $0x3bc] sm:$0xf]
      %v463 = vld [vmem:[%s218 + $0x3c0] sm:$0xf]
      %v464 = vld [vmem:[%s218 + $0x3c4] sm:$0xf]
      %v465 = vld [vmem:[%s218 + $0x3c8] sm:$0xf]
      %v466 = vld [vmem:[%s218 + $0x3cc] sm:$0xf]
      %v467 = vld [vmem:[%s218 + $0x3d0] sm:$0xf]
      %v468 = vld [vmem:[%s218 + $0x3d4] sm:$0xf]
      %v469 = vld [vmem:[%s218 + $0x3d8] sm:$0xf]
      %v470 = vld [vmem:[%s218 + $0x3dc] sm:$0xf]
      %v471 = vld [vmem:[%s218 + $0x3e0] sm:$0xf]
      %v472 = vld [vmem:[%s218 + $0x3e4] sm:$0xf]
      %v473 = vld [vmem:[%s218 + $0x3e8] sm:$0xf]
      %v474 = vld [vmem:[%s218 + $0x3ec] sm:$0xf]
      %v475 = vld [vmem:[%s218 + $0x3f0] sm:$0xf]
      %v476 = vld [vmem:[%s218 + $0x3f4] sm:$0xf]
      %v477 = vld [vmem:[%s218 + $0x3f8] sm:$0xf]
      %v478 = vld [vmem:[%s218 + $0x3fc] sm:$0xf]
      %v479 = vld [vmem:[%s1] sm:$0xf]
      %v480 = vld [vmem:[%s1 + $0x4] sm:$0xf]
      %v481 = vld [vmem:[%s1 + $0x8] sm:$0xf]
      %v482 = vld [vmem:[%s1 + $0xc] sm:$0xf]
      %v483 = vld [vmem:[%s1 + $0x10] sm:$0xf]
      %v484 = vld [vmem:[%s1 + $0x14] sm:$0xf]
      %v485 = vld [vmem:[%s1 + $0x18] sm:$0xf]
      %v486 = vld [vmem:[%s1 + $0x1c] sm:$0xf]
      %v487 = vld [vmem:[%s1 + $0x20] sm:$0xf]
      %v488 = vld [vmem:[%s1 + $0x24] sm:$0xf]
      %v489 = vld [vmem:[%s1 + $0x28] sm:$0xf]
      %v490 = vld [vmem:[%s1 + $0x2c] sm:$0xf]
      %v491 = vld [vmem:[%s1 + $0x30] sm:$0xf]
      %v492 = vld [vmem:[%s1 + $0x34] sm:$0xf]
      %v493 = vld [vmem:[%s1 + $0x38] sm:$0xf]
      %v494 = vld [vmem:[%s1 + $0x3c] sm:$0xf]
      %v751 = vunpack.c.l.b16 %v223
      %v752 = vunpack.c.l.b16 %v224
      %v753 = vunpack.c.l.b16 %v225
      %v754 = vunpack.c.l.b16 %v226
      %v755 = vunpack.c.l.b16 %v227
      %v756 = vunpack.c.l.b16 %v228
      %v757 = vunpack.c.l.b16 %v229
      %v758 = vunpack.c.l.b16 %v230
      %v759 = vunpack.c.l.b16 %v231
      %v760 = vunpack.c.l.b16 %v232
      %v761 = vunpack.c.l.b16 %v233
      %v762 = vunpack.c.l.b16 %v234
      %v763 = vunpack.c.l.b16 %v235
      %v764 = vunpack.c.l.b16 %v236
      %v765 = vunpack.c.l.b16 %v237
      %v766 = vunpack.c.l.b16 %v238
      %v767 = vunpack.c.l.b16 %v239
      %v768 = vunpack.c.l.b16 %v240
      %v769 = vunpack.c.l.b16 %v241
      %v770 = vunpack.c.l.b16 %v242
      %v771 = vunpack.c.l.b16 %v243
      %v772 = vunpack.c.l.b16 %v244
      %v773 = vunpack.c.l.b16 %v245
      %v774 = vunpack.c.l.b16 %v246
      %v775 = vunpack.c.l.b16 %v247
      %v776 = vunpack.c.l.b16 %v248
      %v777 = vunpack.c.l.b16 %v249
      %v778 = vunpack.c.l.b16 %v250
      %v779 = vunpack.c.l.b16 %v251
      %v780 = vunpack.c.l.b16 %v252
      %v781 = vunpack.c.l.b16 %v253
      %v782 = vunpack.c.l.b16 %v254
      %v783 = vunpack.c.l.b16 %v255
      %v784 = vunpack.c.l.b16 %v256
      %v785 = vunpack.c.l.b16 %v257
      %v786 = vunpack.c.l.b16 %v258
      %v787 = vunpack.c.l.b16 %v259
      %v788 = vunpack.c.l.b16 %v260
      %v789 = vunpack.c.l.b16 %v261
      %v790 = vunpack.c.l.b16 %v262
      %v791 = vunpack.c.l.b16 %v263
      %v792 = vunpack.c.l.b16 %v264
      %v793 = vunpack.c.l.b16 %v265
      %v794 = vunpack.c.l.b16 %v266
      %v795 = vunpack.c.l.b16 %v267
      %v796 = vunpack.c.l.b16 %v268
      %v797 = vunpack.c.l.b16 %v269
      %v798 = vunpack.c.l.b16 %v270
      %v799 = vunpack.c.l.b16 %v271
      %v800 = vunpack.c.l.b16 %v272
      %v801 = vunpack.c.l.b16 %v273
      %v802 = vunpack.c.l.b16 %v274
      %v803 = vunpack.c.l.b16 %v275
      %v804 = vunpack.c.l.b16 %v276
      %v805 = vunpack.c.l.b16 %v277
      %v806 = vunpack.c.l.b16 %v278
      %v807 = vunpack.c.l.b16 %v279
      %v808 = vunpack.c.l.b16 %v280
      %v809 = vunpack.c.l.b16 %v281
      %v810 = vunpack.c.l.b16 %v282
      %v811 = vunpack.c.l.b16 %v283
      %v812 = vunpack.c.l.b16 %v284
      %v813 = vunpack.c.l.b16 %v285
      %v814 = vunpack.c.l.b16 %v286
      %v815 = vunpack.c.l.b16 %v287
      %v816 = vunpack.c.l.b16 %v288
      %v817 = vunpack.c.l.b16 %v289
      %v818 = vunpack.c.l.b16 %v290
      %v819 = vunpack.c.l.b16 %v291
      %v820 = vunpack.c.l.b16 %v292
      %v821 = vunpack.c.l.b16 %v293
      %v822 = vunpack.c.l.b16 %v294
      %v823 = vunpack.c.l.b16 %v295
      %v824 = vunpack.c.l.b16 %v296
      %v825 = vunpack.c.l.b16 %v297
      %v826 = vunpack.c.l.b16 %v298
      %v827 = vunpack.c.l.b16 %v299
      %v828 = vunpack.c.l.b16 %v300
      %v829 = vunpack.c.l.b16 %v301
      %v830 = vunpack.c.l.b16 %v302
      %v831 = vunpack.c.l.b16 %v303
      %v832 = vunpack.c.l.b16 %v304
      %v833 = vunpack.c.l.b16 %v305
      %v834 = vunpack.c.l.b16 %v306
      %v835 = vunpack.c.l.b16 %v307
      %v836 = vunpack.c.l.b16 %v308
      %v837 = vunpack.c.l.b16 %v309
      %v838 = vunpack.c.l.b16 %v310
      %v839 = vunpack.c.l.b16 %v311
      %v840 = vunpack.c.l.b16 %v312
      %v841 = vunpack.c.l.b16 %v313
      %v842 = vunpack.c.l.b16 %v314
      %v843 = vunpack.c.l.b16 %v315
      %v844 = vunpack.c.l.b16 %v316
      %v845 = vunpack.c.l.b16 %v317
      %v846 = vunpack.c.l.b16 %v318
      %v847 = vunpack.c.l.b16 %v319
      %v848 = vunpack.c.l.b16 %v320
      %v849 = vunpack.c.l.b16 %v321
      %v850 = vunpack.c.l.b16 %v322
      %v851 = vunpack.c.l.b16 %v323
      %v852 = vunpack.c.l.b16 %v324
      %v853 = vunpack.c.l.b16 %v325
      %v854 = vunpack.c.l.b16 %v326
      %v855 = vunpack.c.l.b16 %v327
      %v856 = vunpack.c.l.b16 %v328
      %v857 = vunpack.c.l.b16 %v329
      %v858 = vunpack.c.l.b16 %v330
      %v859 = vunpack.c.l.b16 %v331
      %v860 = vunpack.c.l.b16 %v332
      %v861 = vunpack.c.l.b16 %v333
      %v862 = vunpack.c.l.b16 %v334
      %v863 = vunpack.c.l.b16 %v335
      %v864 = vunpack.c.l.b16 %v336
      %v865 = vunpack.c.l.b16 %v337
      %v866 = vunpack.c.l.b16 %v338
      %v867 = vunpack.c.l.b16 %v339
      %v868 = vunpack.c.l.b16 %v340
      %v869 = vunpack.c.l.b16 %v341
      %v870 = vunpack.c.l.b16 %v342
      %v871 = vunpack.c.l.b16 %v343
      %v872 = vunpack.c.l.b16 %v344
      %v873 = vunpack.c.l.b16 %v345
      %v874 = vunpack.c.l.b16 %v346
      %v875 = vunpack.c.l.b16 %v347
      %v876 = vunpack.c.l.b16 %v348
      %v877 = vunpack.c.l.b16 %v349
      %v878 = vunpack.c.l.b16 %v350
      %v879 = vunpack.c.l.b16 %v351
      %v880 = vunpack.c.l.b16 %v352
      %v881 = vunpack.c.l.b16 %v353
      %v882 = vunpack.c.l.b16 %v354
      %v883 = vunpack.c.l.b16 %v355
      %v884 = vunpack.c.l.b16 %v356
      %v885 = vunpack.c.l.b16 %v357
      %v886 = vunpack.c.l.b16 %v358
      %v887 = vunpack.c.l.b16 %v359
      %v888 = vunpack.c.l.b16 %v360
      %v889 = vunpack.c.l.b16 %v361
      %v890 = vunpack.c.l.b16 %v362
      %v891 = vunpack.c.l.b16 %v363
      %v892 = vunpack.c.l.b16 %v364
      %v893 = vunpack.c.l.b16 %v365
      %v894 = vunpack.c.l.b16 %v366
      %v895 = vunpack.c.l.b16 %v367
      %v896 = vunpack.c.l.b16 %v368
      %v897 = vunpack.c.l.b16 %v369
      %v898 = vunpack.c.l.b16 %v370
      %v899 = vunpack.c.l.b16 %v371
      %v900 = vunpack.c.l.b16 %v372
      %v901 = vunpack.c.l.b16 %v373
      %v902 = vunpack.c.l.b16 %v374
      %v903 = vunpack.c.l.b16 %v375
      %v904 = vunpack.c.l.b16 %v376
      %v905 = vunpack.c.l.b16 %v377
      %v906 = vunpack.c.l.b16 %v378
      %v907 = vunpack.c.l.b16 %v379
      %v908 = vunpack.c.l.b16 %v380
      %v909 = vunpack.c.l.b16 %v381
      %v910 = vunpack.c.l.b16 %v382
      %v911 = vunpack.c.l.b16 %v383
      %v912 = vunpack.c.l.b16 %v384
      %v913 = vunpack.c.l.b16 %v385
      %v914 = vunpack.c.l.b16 %v386
      %v915 = vunpack.c.l.b16 %v387
      %v916 = vunpack.c.l.b16 %v388
      %v917 = vunpack.c.l.b16 %v389
      %v918 = vunpack.c.l.b16 %v390
      %v919 = vunpack.c.l.b16 %v391
      %v920 = vunpack.c.l.b16 %v392
      %v921 = vunpack.c.l.b16 %v393
      %v922 = vunpack.c.l.b16 %v394
      %v923 = vunpack.c.l.b16 %v395
      %v924 = vunpack.c.l.b16 %v396
      %v925 = vunpack.c.l.b16 %v397
      %v926 = vunpack.c.l.b16 %v398
      %v927 = vunpack.c.l.b16 %v399
      %v928 = vunpack.c.l.b16 %v400
      %v929 = vunpack.c.l.b16 %v401
      %v930 = vunpack.c.l.b16 %v402
      %v931 = vunpack.c.l.b16 %v403
      %v932 = vunpack.c.l.b16 %v404
      %v933 = vunpack.c.l.b16 %v405
      %v934 = vunpack.c.l.b16 %v406
      %v935 = vunpack.c.l.b16 %v407
      %v936 = vunpack.c.l.b16 %v408
      %v937 = vunpack.c.l.b16 %v409
      %v938 = vunpack.c.l.b16 %v410
      %v939 = vunpack.c.l.b16 %v411
      %v940 = vunpack.c.l.b16 %v412
      %v941 = vunpack.c.l.b16 %v413
      %v942 = vunpack.c.l.b16 %v414
      %v943 = vunpack.c.l.b16 %v415
      %v944 = vunpack.c.l.b16 %v416
      %v945 = vunpack.c.l.b16 %v417
      %v946 = vunpack.c.l.b16 %v418
      %v947 = vunpack.c.l.b16 %v419
      %v948 = vunpack.c.l.b16 %v420
      %v949 = vunpack.c.l.b16 %v421
      %v950 = vunpack.c.l.b16 %v422
      %v951 = vunpack.c.l.b16 %v423
      %v952 = vunpack.c.l.b16 %v424
      %v953 = vunpack.c.l.b16 %v425
      %v954 = vunpack.c.l.b16 %v426
      %v955 = vunpack.c.l.b16 %v427
      %v956 = vunpack.c.l.b16 %v428
      %v957 = vunpack.c.l.b16 %v429
      %v958 = vunpack.c.l.b16 %v430
      %v959 = vunpack.c.l.b16 %v431
      %v960 = vunpack.c.l.b16 %v432
      %v961 = vunpack.c.l.b16 %v433
      %v962 = vunpack.c.l.b16 %v434
      %v963 = vunpack.c.l.b16 %v435
      %v964 = vunpack.c.l.b16 %v436
      %v965 = vunpack.c.l.b16 %v437
      %v966 = vunpack.c.l.b16 %v438
      %v967 = vunpack.c.l.b16 %v439
      %v968 = vunpack.c.l.b16 %v440
      %v969 = vunpack.c.l.b16 %v441
      %v970 = vunpack.c.l.b16 %v442
      %v971 = vunpack.c.l.b16 %v443
      %v972 = vunpack.c.l.b16 %v444
      %v973 = vunpack.c.l.b16 %v445
      %v974 = vunpack.c.l.b16 %v446
      %v975 = vunpack.c.l.b16 %v447
      %v976 = vunpack.c.l.b16 %v448
      %v977 = vunpack.c.l.b16 %v449
      %v978 = vunpack.c.l.b16 %v450
      %v979 = vunpack.c.l.b16 %v451
      %v980 = vunpack.c.l.b16 %v452
      %v981 = vunpack.c.l.b16 %v453
      %v982 = vunpack.c.l.b16 %v454
      %v983 = vunpack.c.l.b16 %v455
      %v984 = vunpack.c.l.b16 %v456
      %v985 = vunpack.c.l.b16 %v457
      %v986 = vunpack.c.l.b16 %v458
      %v987 = vunpack.c.l.b16 %v459
      %v988 = vunpack.c.l.b16 %v460
      %v989 = vunpack.c.l.b16 %v461
      %v990 = vunpack.c.l.b16 %v462
      %v991 = vunpack.c.l.b16 %v463
      %v992 = vunpack.c.l.b16 %v464
      %v993 = vunpack.c.l.b16 %v465
      %v994 = vunpack.c.l.b16 %v466
      %v995 = vunpack.c.l.b16 %v467
      %v996 = vunpack.c.l.b16 %v468
      %v997 = vunpack.c.l.b16 %v469
      %v998 = vunpack.c.l.b16 %v470
      %v999 = vunpack.c.l.b16 %v471
      %v1000 = vunpack.c.l.b16 %v472
      %v1001 = vunpack.c.l.b16 %v473
      %v1002 = vunpack.c.l.b16 %v474
      %v1003 = vunpack.c.l.b16 %v475
      %v1004 = vunpack.c.l.b16 %v476
      %v1005 = vunpack.c.l.b16 %v477
      %v1006 = vunpack.c.l.b16 %v478
      %v1007 = vpack.c.b16 %v752, %v751
      %v1008 = vpack.c.b16 %v754, %v753
      %v1009 = vpack.c.b16 %v756, %v755
      %v1010 = vpack.c.b16 %v758, %v757
      %v1011 = vpack.c.b16 %v760, %v759
      %v1012 = vpack.c.b16 %v762, %v761
      %v1013 = vpack.c.b16 %v764, %v763
      %v1014 = vpack.c.b16 %v766, %v765
      %v1015 = vpack.c.b16 %v768, %v767
      %v1016 = vpack.c.b16 %v770, %v769
      %v1017 = vpack.c.b16 %v772, %v771
      %v1018 = vpack.c.b16 %v774, %v773
      %v1019 = vpack.c.b16 %v776, %v775
      %v1020 = vpack.c.b16 %v778, %v777
      %v1021 = vpack.c.b16 %v780, %v779
      %v1022 = vpack.c.b16 %v782, %v781
      %v1023 = vpack.c.b16 %v784, %v783
      %v1024 = vpack.c.b16 %v786, %v785
      %v1025 = vpack.c.b16 %v788, %v787
      %v1026 = vpack.c.b16 %v790, %v789
      %v1027 = vpack.c.b16 %v792, %v791
      %v1028 = vpack.c.b16 %v794, %v793
      %v1029 = vpack.c.b16 %v796, %v795
      %v1030 = vpack.c.b16 %v798, %v797
      %v1031 = vpack.c.b16 %v800, %v799
      %v1032 = vpack.c.b16 %v802, %v801
      %v1033 = vpack.c.b16 %v804, %v803
      %v1034 = vpack.c.b16 %v806, %v805
      %v1035 = vpack.c.b16 %v808, %v807
      %v1036 = vpack.c.b16 %v810, %v809
      %v1037 = vpack.c.b16 %v812, %v811
      %v1038 = vpack.c.b16 %v814, %v813
      %v1039 = vpack.c.b16 %v816, %v815
      %v1040 = vpack.c.b16 %v818, %v817
      %v1041 = vpack.c.b16 %v820, %v819
      %v1042 = vpack.c.b16 %v822, %v821
      %v1043 = vpack.c.b16 %v824, %v823
      %v1044 = vpack.c.b16 %v826, %v825
      %v1045 = vpack.c.b16 %v828, %v827
      %v1046 = vpack.c.b16 %v830, %v829
      %v1047 = vpack.c.b16 %v832, %v831
      %v1048 = vpack.c.b16 %v834, %v833
      %v1049 = vpack.c.b16 %v836, %v835
      %v1050 = vpack.c.b16 %v838, %v837
      %v1051 = vpack.c.b16 %v840, %v839
      %v1052 = vpack.c.b16 %v842, %v841
      %v1053 = vpack.c.b16 %v844, %v843
      %v1054 = vpack.c.b16 %v846, %v845
      %v1055 = vpack.c.b16 %v848, %v847
      %v1056 = vpack.c.b16 %v850, %v849
      %v1057 = vpack.c.b16 %v852, %v851
      %v1058 = vpack.c.b16 %v854, %v853
      %v1059 = vpack.c.b16 %v856, %v855
      %v1060 = vpack.c.b16 %v858, %v857
      %v1061 = vpack.c.b16 %v860, %v859
      %v1062 = vpack.c.b16 %v862, %v861
      %v1063 = vpack.c.b16 %v864, %v863
      %v1064 = vpack.c.b16 %v866, %v865
      %v1065 = vpack.c.b16 %v868, %v867
      %v1066 = vpack.c.b16 %v870, %v869
      %v1067 = vpack.c.b16 %v872, %v871
      %v1068 = vpack.c.b16 %v874, %v873
      %v1069 = vpack.c.b16 %v876, %v875
      %v1070 = vpack.c.b16 %v878, %v877
      %v1071 = vpack.c.b16 %v880, %v879
      %v1072 = vpack.c.b16 %v882, %v881
      %v1073 = vpack.c.b16 %v884, %v883
      %v1074 = vpack.c.b16 %v886, %v885
      %v1075 = vpack.c.b16 %v888, %v887
      %v1076 = vpack.c.b16 %v890, %v889
      %v1077 = vpack.c.b16 %v892, %v891
      %v1078 = vpack.c.b16 %v894, %v893
      %v1079 = vpack.c.b16 %v896, %v895
      %v1080 = vpack.c.b16 %v898, %v897
      %v1081 = vpack.c.b16 %v900, %v899
      %v1082 = vpack.c.b16 %v902, %v901
      %v1083 = vpack.c.b16 %v904, %v903
      %v1084 = vpack.c.b16 %v906, %v905
      %v1085 = vpack.c.b16 %v908, %v907
      %v1086 = vpack.c.b16 %v910, %v909
      %v1087 = vpack.c.b16 %v912, %v911
      %v1088 = vpack.c.b16 %v914, %v913
      %v1089 = vpack.c.b16 %v916, %v915
      %v1090 = vpack.c.b16 %v918, %v917
      %v1091 = vpack.c.b16 %v920, %v919
      %v1092 = vpack.c.b16 %v922, %v921
      %v1093 = vpack.c.b16 %v924, %v923
      %v1094 = vpack.c.b16 %v926, %v925
      %v1095 = vpack.c.b16 %v928, %v927
      %v1096 = vpack.c.b16 %v930, %v929
      %v1097 = vpack.c.b16 %v932, %v931
      %v1098 = vpack.c.b16 %v934, %v933
      %v1099 = vpack.c.b16 %v936, %v935
      %v1100 = vpack.c.b16 %v938, %v937
      %v1101 = vpack.c.b16 %v940, %v939
      %v1102 = vpack.c.b16 %v942, %v941
      %v1103 = vpack.c.b16 %v944, %v943
      %v1104 = vpack.c.b16 %v946, %v945
      %v1105 = vpack.c.b16 %v948, %v947
      %v1106 = vpack.c.b16 %v950, %v949
      %v1107 = vpack.c.b16 %v952, %v951
      %v1108 = vpack.c.b16 %v954, %v953
      %v1109 = vpack.c.b16 %v956, %v955
      %v1110 = vpack.c.b16 %v958, %v957
      %v1111 = vpack.c.b16 %v960, %v959
      %v1112 = vpack.c.b16 %v962, %v961
      %v1113 = vpack.c.b16 %v964, %v963
      %v1114 = vpack.c.b16 %v966, %v965
      %v1115 = vpack.c.b16 %v968, %v967
      %v1116 = vpack.c.b16 %v970, %v969
      %v1117 = vpack.c.b16 %v972, %v971
      %v1118 = vpack.c.b16 %v974, %v973
      %v1119 = vpack.c.b16 %v976, %v975
      %v1120 = vpack.c.b16 %v978, %v977
      %v1121 = vpack.c.b16 %v980, %v979
      %v1122 = vpack.c.b16 %v982, %v981
      %v1123 = vpack.c.b16 %v984, %v983
      %v1124 = vpack.c.b16 %v986, %v985
      %v1125 = vpack.c.b16 %v988, %v987
      %v1126 = vpack.c.b16 %v990, %v989
      %v1127 = vpack.c.b16 %v992, %v991
      %v1128 = vpack.c.b16 %v994, %v993
      %v1129 = vpack.c.b16 %v996, %v995
      %v1130 = vpack.c.b16 %v998, %v997
      %v1131 = vpack.c.b16 %v1000, %v999
      %v1132 = vpack.c.b16 %v1002, %v1001
      %v1133 = vpack.c.b16 %v1004, %v1003
      %v1134 = vpack.c.b16 %v1006, %v1005
      %v1279 = vunpack.c.l.b16 %v479
      %v1280 = vunpack.c.l.b16 %v480
      %v1281 = vunpack.c.l.b16 %v481
      %v1282 = vunpack.c.l.b16 %v482
      %v1283 = vunpack.c.l.b16 %v483
      %v1284 = vunpack.c.l.b16 %v484
      %v1285 = vunpack.c.l.b16 %v485
      %v1286 = vunpack.c.l.b16 %v486
      %v1287 = vunpack.c.l.b16 %v487
      %v1288 = vunpack.c.l.b16 %v488
      %v1289 = vunpack.c.l.b16 %v489
      %v1290 = vunpack.c.l.b16 %v490
      %v1291 = vunpack.c.l.b16 %v491
      %v1292 = vunpack.c.l.b16 %v492
      %v1293 = vunpack.c.l.b16 %v493
      %v1294 = vunpack.c.l.b16 %v494
      %v1295 = vpack.c.b16 %v1280, %v1279
      %v1296 = vpack.c.b16 %v1282, %v1281
      %v1297 = vpack.c.b16 %v1284, %v1283
      %v1298 = vpack.c.b16 %v1286, %v1285
      %v1299 = vpack.c.b16 %v1288, %v1287
      %v1300 = vpack.c.b16 %v1290, %v1289
      %v1301 = vpack.c.b16 %v1292, %v1291
      %v1302 = vpack.c.b16 %v1294, %v1293
      %1311 = vmatpush.bf16.msra.mxu0 %v1302
      %1312 = vmatpush.bf16.msra.mxu0 %v1301
      %1313 = vmatpush.bf16.msra.mxu0 %v1300
      %1314 = vmatpush.bf16.msra.mxu0 %v1299
      %1315 = vmatpush.bf16.msra.mxu0 %v1298
      %1316 = vmatpush.bf16.msra.mxu0 %v1297
      %1317 = vmatpush.bf16.msra.mxu0 %v1296
      %1318 = vmatpush.bf16.msra.mxu0 %v1295
      %1319 = vmatmul.bf16.gmra.mxu0 %v1007
      %v1320 = vpop.f32.mrf.mxu0
      %v1321 = vadd.f32 0.0, %v1320
      %v1322 = vpop.f32.mrf.mxu0
      %v1323 = vadd.f32 0.0, %v1322
      %1324 = vmatmul.bf16.gmra.mxu0 %v1008
      %v1325 = vpop.f32.mrf.mxu0
      %v1326 = vadd.f32 0.0, %v1325
      %v1327 = vpop.f32.mrf.mxu0
      %v1328 = vadd.f32 0.0, %v1327
      %1329 = vmatmul.bf16.gmra.mxu0 %v1009
      %v1330 = vpop.f32.mrf.mxu0
      %v1331 = vadd.f32 0.0, %v1330
      %v1332 = vpop.f32.mrf.mxu0
      %v1333 = vadd.f32 0.0, %v1332
      %1334 = vmatmul.bf16.gmra.mxu0 %v1010
      %v1335 = vpop.f32.mrf.mxu0
      %v1336 = vadd.f32 0.0, %v1335
      %v1337 = vpop.f32.mrf.mxu0
      %v1338 = vadd.f32 0.0, %v1337
      %1339 = vmatmul.bf16.gmra.mxu0 %v1011
      %v1340 = vpop.f32.mrf.mxu0
      %v1341 = vadd.f32 0.0, %v1340
      %v1342 = vpop.f32.mrf.mxu0
      %v1343 = vadd.f32 0.0, %v1342
      %1344 = vmatmul.bf16.gmra.mxu0 %v1012
      %v1345 = vpop.f32.mrf.mxu0
      %v1346 = vadd.f32 0.0, %v1345
      %v1347 = vpop.f32.mrf.mxu0
      %v1348 = vadd.f32 0.0, %v1347
      %1349 = vmatmul.bf16.gmra.mxu0 %v1013
      %v1350 = vpop.f32.mrf.mxu0
      %v1351 = vadd.f32 0.0, %v1350
      %v1352 = vpop.f32.mrf.mxu0
      %v1353 = vadd.f32 0.0, %v1352
      %1354 = vmatmul.bf16.gmra.mxu0 %v1014
      %v1355 = vpop.f32.mrf.mxu0
      %v1356 = vadd.f32 0.0, %v1355
      %v1357 = vpop.f32.mrf.mxu0
      %v1358 = vadd.f32 0.0, %v1357
      %1359 = vmatmul.bf16.gmra.mxu0 %v1015
      %v1360 = vpop.f32.mrf.mxu0
      %v1361 = vadd.f32 0.0, %v1360
      %v1362 = vpop.f32.mrf.mxu0
      %v1363 = vadd.f32 0.0, %v1362
      %1364 = vmatmul.bf16.gmra.mxu0 %v1016
      %v1365 = vpop.f32.mrf.mxu0
      %v1366 = vadd.f32 0.0, %v1365
      %v1367 = vpop.f32.mrf.mxu0
      %v1368 = vadd.f32 0.0, %v1367
      %1369 = vmatmul.bf16.gmra.mxu0 %v1017
      %v1370 = vpop.f32.mrf.mxu0
      %v1371 = vadd.f32 0.0, %v1370
      %v1372 = vpop.f32.mrf.mxu0
      %v1373 = vadd.f32 0.0, %v1372
      %1374 = vmatmul.bf16.gmra.mxu0 %v1018
      %v1375 = vpop.f32.mrf.mxu0
      %v1376 = vadd.f32 0.0, %v1375
      %v1377 = vpop.f32.mrf.mxu0
      %v1378 = vadd.f32 0.0, %v1377
      %1379 = vmatmul.bf16.gmra.mxu0 %v1019
      %v1380 = vpop.f32.mrf.mxu0
      %v1381 = vadd.f32 0.0, %v1380
      %v1382 = vpop.f32.mrf.mxu0
      %v1383 = vadd.f32 0.0, %v1382
      %1384 = vmatmul.bf16.gmra.mxu0 %v1020
      %v1385 = vpop.f32.mrf.mxu0
      %v1386 = vadd.f32 0.0, %v1385
      %v1387 = vpop.f32.mrf.mxu0
      %v1388 = vadd.f32 0.0, %v1387
      %1389 = vmatmul.bf16.gmra.mxu0 %v1021
      %v1390 = vpop.f32.mrf.mxu0
      %v1391 = vadd.f32 0.0, %v1390
      %v1392 = vpop.f32.mrf.mxu0
      %v1393 = vadd.f32 0.0, %v1392
      %1394 = vmatmul.bf16.gmra.mxu0 %v1022
      %v1395 = vpop.f32.mrf.mxu0
      %v1396 = vadd.f32 0.0, %v1395
      %v1397 = vpop.f32.mrf.mxu0
      %v1398 = vadd.f32 0.0, %v1397
      %1399 = vmatmul.bf16.gmra.mxu0 %v1023
      %v1400 = vpop.f32.mrf.mxu0
      %v1401 = vadd.f32 0.0, %v1400
      %v1402 = vpop.f32.mrf.mxu0
      %v1403 = vadd.f32 0.0, %v1402
      %1404 = vmatmul.bf16.gmra.mxu0 %v1024
      %v1405 = vpop.f32.mrf.mxu0
      %v1406 = vadd.f32 0.0, %v1405
      %v1407 = vpop.f32.mrf.mxu0
      %v1408 = vadd.f32 0.0, %v1407
      %1409 = vmatmul.bf16.gmra.mxu0 %v1025
      %v1410 = vpop.f32.mrf.mxu0
      %v1411 = vadd.f32 0.0, %v1410
      %v1412 = vpop.f32.mrf.mxu0
      %v1413 = vadd.f32 0.0, %v1412
      %1414 = vmatmul.bf16.gmra.mxu0 %v1026
      %v1415 = vpop.f32.mrf.mxu0
      %v1416 = vadd.f32 0.0, %v1415
      %v1417 = vpop.f32.mrf.mxu0
      %v1418 = vadd.f32 0.0, %v1417
      %1419 = vmatmul.bf16.gmra.mxu0 %v1027
      %v1420 = vpop.f32.mrf.mxu0
      %v1421 = vadd.f32 0.0, %v1420
      %v1422 = vpop.f32.mrf.mxu0
      %v1423 = vadd.f32 0.0, %v1422
      %1424 = vmatmul.bf16.gmra.mxu0 %v1028
      %v1425 = vpop.f32.mrf.mxu0
      %v1426 = vadd.f32 0.0, %v1425
      %v1427 = vpop.f32.mrf.mxu0
      %v1428 = vadd.f32 0.0, %v1427
      %1429 = vmatmul.bf16.gmra.mxu0 %v1029
      %v1430 = vpop.f32.mrf.mxu0
      %v1431 = vadd.f32 0.0, %v1430
      %v1432 = vpop.f32.mrf.mxu0
      %v1433 = vadd.f32 0.0, %v1432
      %1434 = vmatmul.bf16.gmra.mxu0 %v1030
      %v1435 = vpop.f32.mrf.mxu0
      %v1436 = vadd.f32 0.0, %v1435
      %v1437 = vpop.f32.mrf.mxu0
      %v1438 = vadd.f32 0.0, %v1437
      %1439 = vmatmul.bf16.gmra.mxu0 %v1031
      %v1440 = vpop.f32.mrf.mxu0
      %v1441 = vadd.f32 0.0, %v1440
      %v1442 = vpop.f32.mrf.mxu0
      %v1443 = vadd.f32 0.0, %v1442
      %1444 = vmatmul.bf16.gmra.mxu0 %v1032
      %v1445 = vpop.f32.mrf.mxu0
      %v1446 = vadd.f32 0.0, %v1445
      %v1447 = vpop.f32.mrf.mxu0
      %v1448 = vadd.f32 0.0, %v1447
      %1449 = vmatmul.bf16.gmra.mxu0 %v1033
      %v1450 = vpop.f32.mrf.mxu0
      %v1451 = vadd.f32 0.0, %v1450
      %v1452 = vpop.f32.mrf.mxu0
      %v1453 = vadd.f32 0.0, %v1452
      %1454 = vmatmul.bf16.gmra.mxu0 %v1034
      %v1455 = vpop.f32.mrf.mxu0
      %v1456 = vadd.f32 0.0, %v1455
      %v1457 = vpop.f32.mrf.mxu0
      %v1458 = vadd.f32 0.0, %v1457
      %1459 = vmatmul.bf16.gmra.mxu0 %v1035
      %v1460 = vpop.f32.mrf.mxu0
      %v1461 = vadd.f32 0.0, %v1460
      %v1462 = vpop.f32.mrf.mxu0
      %v1463 = vadd.f32 0.0, %v1462
      %1464 = vmatmul.bf16.gmra.mxu0 %v1036
      %v1465 = vpop.f32.mrf.mxu0
      %v1466 = vadd.f32 0.0, %v1465
      %v1467 = vpop.f32.mrf.mxu0
      %v1468 = vadd.f32 0.0, %v1467
      %1469 = vmatmul.bf16.gmra.mxu0 %v1037
      %v1470 = vpop.f32.mrf.mxu0
      %v1471 = vadd.f32 0.0, %v1470
      %v1472 = vpop.f32.mrf.mxu0
      %v1473 = vadd.f32 0.0, %v1472
      %1474 = vmatmul.bf16.gmra.mxu0 %v1038
      %v1475 = vpop.f32.mrf.mxu0
      %v1476 = vadd.f32 0.0, %v1475
      %v1477 = vpop.f32.mrf.mxu0
      %v1478 = vadd.f32 0.0, %v1477
      %1479 = vmatmul.bf16.gmra.mxu0 %v1039
      %v1480 = vpop.f32.mrf.mxu0
      %v1481 = vadd.f32 0.0, %v1480
      %v1482 = vpop.f32.mrf.mxu0
      %v1483 = vadd.f32 0.0, %v1482
      %1484 = vmatmul.bf16.gmra.mxu0 %v1040
      %v1485 = vpop.f32.mrf.mxu0
      %v1486 = vadd.f32 0.0, %v1485
      %v1487 = vpop.f32.mrf.mxu0
      %v1488 = vadd.f32 0.0, %v1487
      %1489 = vmatmul.bf16.gmra.mxu0 %v1041
      %v1490 = vpop.f32.mrf.mxu0
      %v1491 = vadd.f32 0.0, %v1490
      %v1492 = vpop.f32.mrf.mxu0
      %v1493 = vadd.f32 0.0, %v1492
      %1494 = vmatmul.bf16.gmra.mxu0 %v1042
      %v1495 = vpop.f32.mrf.mxu0
      %v1496 = vadd.f32 0.0, %v1495
      %v1497 = vpop.f32.mrf.mxu0
      %v1498 = vadd.f32 0.0, %v1497
      %1499 = vmatmul.bf16.gmra.mxu0 %v1043
      %v1500 = vpop.f32.mrf.mxu0
      %v1501 = vadd.f32 0.0, %v1500
      %v1502 = vpop.f32.mrf.mxu0
      %v1503 = vadd.f32 0.0, %v1502
      %1504 = vmatmul.bf16.gmra.mxu0 %v1044
      %v1505 = vpop.f32.mrf.mxu0
      %v1506 = vadd.f32 0.0, %v1505
      %v1507 = vpop.f32.mrf.mxu0
      %v1508 = vadd.f32 0.0, %v1507
      %1509 = vmatmul.bf16.gmra.mxu0 %v1045
      %v1510 = vpop.f32.mrf.mxu0
      %v1511 = vadd.f32 0.0, %v1510
      %v1512 = vpop.f32.mrf.mxu0
      %v1513 = vadd.f32 0.0, %v1512
      %1514 = vmatmul.bf16.gmra.mxu0 %v1046
      %v1515 = vpop.f32.mrf.mxu0
      %v1516 = vadd.f32 0.0, %v1515
      %v1517 = vpop.f32.mrf.mxu0
      %v1518 = vadd.f32 0.0, %v1517
      %1519 = vmatmul.bf16.gmra.mxu0 %v1047
      %v1520 = vpop.f32.mrf.mxu0
      %v1521 = vadd.f32 0.0, %v1520
      %v1522 = vpop.f32.mrf.mxu0
      %v1523 = vadd.f32 0.0, %v1522
      %1524 = vmatmul.bf16.gmra.mxu0 %v1048
      %v1525 = vpop.f32.mrf.mxu0
      %v1526 = vadd.f32 0.0, %v1525
      %v1527 = vpop.f32.mrf.mxu0
      %v1528 = vadd.f32 0.0, %v1527
      %1529 = vmatmul.bf16.gmra.mxu0 %v1049
      %v1530 = vpop.f32.mrf.mxu0
      %v1531 = vadd.f32 0.0, %v1530
      %v1532 = vpop.f32.mrf.mxu0
      %v1533 = vadd.f32 0.0, %v1532
      %1534 = vmatmul.bf16.gmra.mxu0 %v1050
      %v1535 = vpop.f32.mrf.mxu0
      %v1536 = vadd.f32 0.0, %v1535
      %v1537 = vpop.f32.mrf.mxu0
      %v1538 = vadd.f32 0.0, %v1537
      %1539 = vmatmul.bf16.gmra.mxu0 %v1051
      %v1540 = vpop.f32.mrf.mxu0
      %v1541 = vadd.f32 0.0, %v1540
      %v1542 = vpop.f32.mrf.mxu0
      %v1543 = vadd.f32 0.0, %v1542
      %1544 = vmatmul.bf16.gmra.mxu0 %v1052
      %v1545 = vpop.f32.mrf.mxu0
      %v1546 = vadd.f32 0.0, %v1545
      %v1547 = vpop.f32.mrf.mxu0
      %v1548 = vadd.f32 0.0, %v1547
      %1549 = vmatmul.bf16.gmra.mxu0 %v1053
      %v1550 = vpop.f32.mrf.mxu0
      %v1551 = vadd.f32 0.0, %v1550
      %v1552 = vpop.f32.mrf.mxu0
      %v1553 = vadd.f32 0.0, %v1552
      %1554 = vmatmul.bf16.gmra.mxu0 %v1054
      %v1555 = vpop.f32.mrf.mxu0
      %v1556 = vadd.f32 0.0, %v1555
      %v1557 = vpop.f32.mrf.mxu0
      %v1558 = vadd.f32 0.0, %v1557
      %1559 = vmatmul.bf16.gmra.mxu0 %v1055
      %v1560 = vpop.f32.mrf.mxu0
      %v1561 = vadd.f32 0.0, %v1560
      %v1562 = vpop.f32.mrf.mxu0
      %v1563 = vadd.f32 0.0, %v1562
      %1564 = vmatmul.bf16.gmra.mxu0 %v1056
      %v1565 = vpop.f32.mrf.mxu0
      %v1566 = vadd.f32 0.0, %v1565
      %v1567 = vpop.f32.mrf.mxu0
      %v1568 = vadd.f32 0.0, %v1567
      %1569 = vmatmul.bf16.gmra.mxu0 %v1057
      %v1570 = vpop.f32.mrf.mxu0
      %v1571 = vadd.f32 0.0, %v1570
      %v1572 = vpop.f32.mrf.mxu0
      %v1573 = vadd.f32 0.0, %v1572
      %1574 = vmatmul.bf16.gmra.mxu0 %v1058
      %v1575 = vpop.f32.mrf.mxu0
      %v1576 = vadd.f32 0.0, %v1575
      %v1577 = vpop.f32.mrf.mxu0
      %v1578 = vadd.f32 0.0, %v1577
      %1579 = vmatmul.bf16.gmra.mxu0 %v1059
      %v1580 = vpop.f32.mrf.mxu0
      %v1581 = vadd.f32 0.0, %v1580
      %v1582 = vpop.f32.mrf.mxu0
      %v1583 = vadd.f32 0.0, %v1582
      %1584 = vmatmul.bf16.gmra.mxu0 %v1060
      %v1585 = vpop.f32.mrf.mxu0
      %v1586 = vadd.f32 0.0, %v1585
      %v1587 = vpop.f32.mrf.mxu0
      %v1588 = vadd.f32 0.0, %v1587
      %1589 = vmatmul.bf16.gmra.mxu0 %v1061
      %v1590 = vpop.f32.mrf.mxu0
      %v1591 = vadd.f32 0.0, %v1590
      %v1592 = vpop.f32.mrf.mxu0
      %v1593 = vadd.f32 0.0, %v1592
      %1594 = vmatmul.bf16.gmra.mxu0 %v1062
      %v1595 = vpop.f32.mrf.mxu0
      %v1596 = vadd.f32 0.0, %v1595
      %v1597 = vpop.f32.mrf.mxu0
      %v1598 = vadd.f32 0.0, %v1597
      %1599 = vmatmul.bf16.gmra.mxu0 %v1063
      %v1600 = vpop.f32.mrf.mxu0
      %v1601 = vadd.f32 0.0, %v1600
      %v1602 = vpop.f32.mrf.mxu0
      %v1603 = vadd.f32 0.0, %v1602
      %1604 = vmatmul.bf16.gmra.mxu0 %v1064
      %v1605 = vpop.f32.mrf.mxu0
      %v1606 = vadd.f32 0.0, %v1605
      %v1607 = vpop.f32.mrf.mxu0
      %v1608 = vadd.f32 0.0, %v1607
      %1609 = vmatmul.bf16.gmra.mxu0 %v1065
      %v1610 = vpop.f32.mrf.mxu0
      %v1611 = vadd.f32 0.0, %v1610
      %v1612 = vpop.f32.mrf.mxu0
      %v1613 = vadd.f32 0.0, %v1612
      %1614 = vmatmul.bf16.gmra.mxu0 %v1066
      %v1615 = vpop.f32.mrf.mxu0
      %v1616 = vadd.f32 0.0, %v1615
      %v1617 = vpop.f32.mrf.mxu0
      %v1618 = vadd.f32 0.0, %v1617
      %1619 = vmatmul.bf16.gmra.mxu0 %v1067
      %v1620 = vpop.f32.mrf.mxu0
      %v1621 = vadd.f32 0.0, %v1620
      %v1622 = vpop.f32.mrf.mxu0
      %v1623 = vadd.f32 0.0, %v1622
      %1624 = vmatmul.bf16.gmra.mxu0 %v1068
      %v1625 = vpop.f32.mrf.mxu0
      %v1626 = vadd.f32 0.0, %v1625
      %v1627 = vpop.f32.mrf.mxu0
      %v1628 = vadd.f32 0.0, %v1627
      %1629 = vmatmul.bf16.gmra.mxu0 %v1069
      %v1630 = vpop.f32.mrf.mxu0
      %v1631 = vadd.f32 0.0, %v1630
      %v1632 = vpop.f32.mrf.mxu0
      %v1633 = vadd.f32 0.0, %v1632
      %1634 = vmatmul.bf16.gmra.mxu0 %v1070
      %v1635 = vpop.f32.mrf.mxu0
      %v1636 = vadd.f32 0.0, %v1635
      %v1637 = vpop.f32.mrf.mxu0
      %v1638 = vadd.f32 0.0, %v1637
      %1639 = vmatmul.bf16.gmra.mxu0 %v1071
      %v1640 = vpop.f32.mrf.mxu0
      %v1641 = vadd.f32 0.0, %v1640
      %v1642 = vpop.f32.mrf.mxu0
      %v1643 = vadd.f32 0.0, %v1642
      %1644 = vmatmul.bf16.gmra.mxu0 %v1072
      %v1645 = vpop.f32.mrf.mxu0
      %v1646 = vadd.f32 0.0, %v1645
      %v1647 = vpop.f32.mrf.mxu0
      %v1648 = vadd.f32 0.0, %v1647
      %1649 = vmatmul.bf16.gmra.mxu0 %v1073
      %v1650 = vpop.f32.mrf.mxu0
      %v1651 = vadd.f32 0.0, %v1650
      %v1652 = vpop.f32.mrf.mxu0
      %v1653 = vadd.f32 0.0, %v1652
      %1654 = vmatmul.bf16.gmra.mxu0 %v1074
      %v1655 = vpop.f32.mrf.mxu0
      %v1656 = vadd.f32 0.0, %v1655
      %v1657 = vpop.f32.mrf.mxu0
      %v1658 = vadd.f32 0.0, %v1657
      %1659 = vmatmul.bf16.gmra.mxu0 %v1075
      %v1660 = vpop.f32.mrf.mxu0
      %v1661 = vadd.f32 0.0, %v1660
      %v1662 = vpop.f32.mrf.mxu0
      %v1663 = vadd.f32 0.0, %v1662
      %1664 = vmatmul.bf16.gmra.mxu0 %v1076
      %v1665 = vpop.f32.mrf.mxu0
      %v1666 = vadd.f32 0.0, %v1665
      %v1667 = vpop.f32.mrf.mxu0
      %v1668 = vadd.f32 0.0, %v1667
      %1669 = vmatmul.bf16.gmra.mxu0 %v1077
      %v1670 = vpop.f32.mrf.mxu0
      %v1671 = vadd.f32 0.0, %v1670
      %v1672 = vpop.f32.mrf.mxu0
      %v1673 = vadd.f32 0.0, %v1672
      %1674 = vmatmul.bf16.gmra.mxu0 %v1078
      %v1675 = vpop.f32.mrf.mxu0
      %v1676 = vadd.f32 0.0, %v1675
      %v1677 = vpop.f32.mrf.mxu0
      %v1678 = vadd.f32 0.0, %v1677
      %1679 = vmatmul.bf16.gmra.mxu0 %v1079
      %v1680 = vpop.f32.mrf.mxu0
      %v1681 = vadd.f32 0.0, %v1680
      %v1682 = vpop.f32.mrf.mxu0
      %v1683 = vadd.f32 0.0, %v1682
      %1684 = vmatmul.bf16.gmra.mxu0 %v1080
      %v1685 = vpop.f32.mrf.mxu0
      %v1686 = vadd.f32 0.0, %v1685
      %v1687 = vpop.f32.mrf.mxu0
      %v1688 = vadd.f32 0.0, %v1687
      %1689 = vmatmul.bf16.gmra.mxu0 %v1081
      %v1690 = vpop.f32.mrf.mxu0
      %v1691 = vadd.f32 0.0, %v1690
      %v1692 = vpop.f32.mrf.mxu0
      %v1693 = vadd.f32 0.0, %v1692
      %1694 = vmatmul.bf16.gmra.mxu0 %v1082
      %v1695 = vpop.f32.mrf.mxu0
      %v1696 = vadd.f32 0.0, %v1695
      %v1697 = vpop.f32.mrf.mxu0
      %v1698 = vadd.f32 0.0, %v1697
      %1699 = vmatmul.bf16.gmra.mxu0 %v1083
      %v1700 = vpop.f32.mrf.mxu0
      %v1701 = vadd.f32 0.0, %v1700
      %v1702 = vpop.f32.mrf.mxu0
      %v1703 = vadd.f32 0.0, %v1702
      %1704 = vmatmul.bf16.gmra.mxu0 %v1084
      %v1705 = vpop.f32.mrf.mxu0
      %v1706 = vadd.f32 0.0, %v1705
      %v1707 = vpop.f32.mrf.mxu0
      %v1708 = vadd.f32 0.0, %v1707
      %1709 = vmatmul.bf16.gmra.mxu0 %v1085
      %v1710 = vpop.f32.mrf.mxu0
      %v1711 = vadd.f32 0.0, %v1710
      %v1712 = vpop.f32.mrf.mxu0
      %v1713 = vadd.f32 0.0, %v1712
      %1714 = vmatmul.bf16.gmra.mxu0 %v1086
      %v1715 = vpop.f32.mrf.mxu0
      %v1716 = vadd.f32 0.0, %v1715
      %v1717 = vpop.f32.mrf.mxu0
      %v1718 = vadd.f32 0.0, %v1717
      %1719 = vmatmul.bf16.gmra.mxu0 %v1087
      %v1720 = vpop.f32.mrf.mxu0
      %v1721 = vadd.f32 0.0, %v1720
      %v1722 = vpop.f32.mrf.mxu0
      %v1723 = vadd.f32 0.0, %v1722
      %1724 = vmatmul.bf16.gmra.mxu0 %v1088
      %v1725 = vpop.f32.mrf.mxu0
      %v1726 = vadd.f32 0.0, %v1725
      %v1727 = vpop.f32.mrf.mxu0
      %v1728 = vadd.f32 0.0, %v1727
      %1729 = vmatmul.bf16.gmra.mxu0 %v1089
      %v1730 = vpop.f32.mrf.mxu0
      %v1731 = vadd.f32 0.0, %v1730
      %v1732 = vpop.f32.mrf.mxu0
      %v1733 = vadd.f32 0.0, %v1732
      %1734 = vmatmul.bf16.gmra.mxu0 %v1090
      %v1735 = vpop.f32.mrf.mxu0
      %v1736 = vadd.f32 0.0, %v1735
      %v1737 = vpop.f32.mrf.mxu0
      %v1738 = vadd.f32 0.0, %v1737
      %1739 = vmatmul.bf16.gmra.mxu0 %v1091
      %v1740 = vpop.f32.mrf.mxu0
      %v1741 = vadd.f32 0.0, %v1740
      %v1742 = vpop.f32.mrf.mxu0
      %v1743 = vadd.f32 0.0, %v1742
      %1744 = vmatmul.bf16.gmra.mxu0 %v1092
      %v1745 = vpop.f32.mrf.mxu0
      %v1746 = vadd.f32 0.0, %v1745
      %v1747 = vpop.f32.mrf.mxu0
      %v1748 = vadd.f32 0.0, %v1747
      %1749 = vmatmul.bf16.gmra.mxu0 %v1093
      %v1750 = vpop.f32.mrf.mxu0
      %v1751 = vadd.f32 0.0, %v1750
      %v1752 = vpop.f32.mrf.mxu0
      %v1753 = vadd.f32 0.0, %v1752
      %1754 = vmatmul.bf16.gmra.mxu0 %v1094
      %v1755 = vpop.f32.mrf.mxu0
      %v1756 = vadd.f32 0.0, %v1755
      %v1757 = vpop.f32.mrf.mxu0
      %v1758 = vadd.f32 0.0, %v1757
      %1759 = vmatmul.bf16.gmra.mxu0 %v1095
      %v1760 = vpop.f32.mrf.mxu0
      %v1761 = vadd.f32 0.0, %v1760
      %v1762 = vpop.f32.mrf.mxu0
      %v1763 = vadd.f32 0.0, %v1762
      %1764 = vmatmul.bf16.gmra.mxu0 %v1096
      %v1765 = vpop.f32.mrf.mxu0
      %v1766 = vadd.f32 0.0, %v1765
      %v1767 = vpop.f32.mrf.mxu0
      %v1768 = vadd.f32 0.0, %v1767
      %1769 = vmatmul.bf16.gmra.mxu0 %v1097
      %v1770 = vpop.f32.mrf.mxu0
      %v1771 = vadd.f32 0.0, %v1770
      %v1772 = vpop.f32.mrf.mxu0
      %v1773 = vadd.f32 0.0, %v1772
      %1774 = vmatmul.bf16.gmra.mxu0 %v1098
      %v1775 = vpop.f32.mrf.mxu0
      %v1776 = vadd.f32 0.0, %v1775
      %v1777 = vpop.f32.mrf.mxu0
      %v1778 = vadd.f32 0.0, %v1777
      %1779 = vmatmul.bf16.gmra.mxu0 %v1099
      %v1780 = vpop.f32.mrf.mxu0
      %v1781 = vadd.f32 0.0, %v1780
      %v1782 = vpop.f32.mrf.mxu0
      %v1783 = vadd.f32 0.0, %v1782
      %1784 = vmatmul.bf16.gmra.mxu0 %v1100
      %v1785 = vpop.f32.mrf.mxu0
      %v1786 = vadd.f32 0.0, %v1785
      %v1787 = vpop.f32.mrf.mxu0
      %v1788 = vadd.f32 0.0, %v1787
      %1789 = vmatmul.bf16.gmra.mxu0 %v1101
      %v1790 = vpop.f32.mrf.mxu0
      %v1791 = vadd.f32 0.0, %v1790
      %v1792 = vpop.f32.mrf.mxu0
      %v1793 = vadd.f32 0.0, %v1792
      %1794 = vmatmul.bf16.gmra.mxu0 %v1102
      %v1795 = vpop.f32.mrf.mxu0
      %v1796 = vadd.f32 0.0, %v1795
      %v1797 = vpop.f32.mrf.mxu0
      %v1798 = vadd.f32 0.0, %v1797
      %1799 = vmatmul.bf16.gmra.mxu0 %v1103
      %v1800 = vpop.f32.mrf.mxu0
      %v1801 = vadd.f32 0.0, %v1800
      %v1802 = vpop.f32.mrf.mxu0
      %v1803 = vadd.f32 0.0, %v1802
      %1804 = vmatmul.bf16.gmra.mxu0 %v1104
      %v1805 = vpop.f32.mrf.mxu0
      %v1806 = vadd.f32 0.0, %v1805
      %v1807 = vpop.f32.mrf.mxu0
      %v1808 = vadd.f32 0.0, %v1807
      %1809 = vmatmul.bf16.gmra.mxu0 %v1105
      %v1810 = vpop.f32.mrf.mxu0
      %v1811 = vadd.f32 0.0, %v1810
      %v1812 = vpop.f32.mrf.mxu0
      %v1813 = vadd.f32 0.0, %v1812
      %1814 = vmatmul.bf16.gmra.mxu0 %v1106
      %v1815 = vpop.f32.mrf.mxu0
      %v1816 = vadd.f32 0.0, %v1815
      %v1817 = vpop.f32.mrf.mxu0
      %v1818 = vadd.f32 0.0, %v1817
      %1819 = vmatmul.bf16.gmra.mxu0 %v1107
      %v1820 = vpop.f32.mrf.mxu0
      %v1821 = vadd.f32 0.0, %v1820
      %v1822 = vpop.f32.mrf.mxu0
      %v1823 = vadd.f32 0.0, %v1822
      %1824 = vmatmul.bf16.gmra.mxu0 %v1108
      %v1825 = vpop.f32.mrf.mxu0
      %v1826 = vadd.f32 0.0, %v1825
      %v1827 = vpop.f32.mrf.mxu0
      %v1828 = vadd.f32 0.0, %v1827
      %1829 = vmatmul.bf16.gmra.mxu0 %v1109
      %v1830 = vpop.f32.mrf.mxu0
      %v1831 = vadd.f32 0.0, %v1830
      %v1832 = vpop.f32.mrf.mxu0
      %v1833 = vadd.f32 0.0, %v1832
      %1834 = vmatmul.bf16.gmra.mxu0 %v1110
      %v1835 = vpop.f32.mrf.mxu0
      %v1836 = vadd.f32 0.0, %v1835
      %v1837 = vpop.f32.mrf.mxu0
      %v1838 = vadd.f32 0.0, %v1837
      %1839 = vmatmul.bf16.gmra.mxu0 %v1111
      %v1840 = vpop.f32.mrf.mxu0
      %v1841 = vadd.f32 0.0, %v1840
      %v1842 = vpop.f32.mrf.mxu0
      %v1843 = vadd.f32 0.0, %v1842
      %1844 = vmatmul.bf16.gmra.mxu0 %v1112
      %v1845 = vpop.f32.mrf.mxu0
      %v1846 = vadd.f32 0.0, %v1845
      %v1847 = vpop.f32.mrf.mxu0
      %v1848 = vadd.f32 0.0, %v1847
      %1849 = vmatmul.bf16.gmra.mxu0 %v1113
      %v1850 = vpop.f32.mrf.mxu0
      %v1851 = vadd.f32 0.0, %v1850
      %v1852 = vpop.f32.mrf.mxu0
      %v1853 = vadd.f32 0.0, %v1852
      %1854 = vmatmul.bf16.gmra.mxu0 %v1114
      %v1855 = vpop.f32.mrf.mxu0
      %v1856 = vadd.f32 0.0, %v1855
      %v1857 = vpop.f32.mrf.mxu0
      %v1858 = vadd.f32 0.0, %v1857
      %1859 = vmatmul.bf16.gmra.mxu0 %v1115
      %v1860 = vpop.f32.mrf.mxu0
      %v1861 = vadd.f32 0.0, %v1860
      %v1862 = vpop.f32.mrf.mxu0
      %v1863 = vadd.f32 0.0, %v1862
      %1864 = vmatmul.bf16.gmra.mxu0 %v1116
      %v1865 = vpop.f32.mrf.mxu0
      %v1866 = vadd.f32 0.0, %v1865
      %v1867 = vpop.f32.mrf.mxu0
      %v1868 = vadd.f32 0.0, %v1867
      %1869 = vmatmul.bf16.gmra.mxu0 %v1117
      %v1870 = vpop.f32.mrf.mxu0
      %v1871 = vadd.f32 0.0, %v1870
      %v1872 = vpop.f32.mrf.mxu0
      %v1873 = vadd.f32 0.0, %v1872
      %1874 = vmatmul.bf16.gmra.mxu0 %v1118
      %v1875 = vpop.f32.mrf.mxu0
      %v1876 = vadd.f32 0.0, %v1875
      %v1877 = vpop.f32.mrf.mxu0
      %v1878 = vadd.f32 0.0, %v1877
      %1879 = vmatmul.bf16.gmra.mxu0 %v1119
      %v1880 = vpop.f32.mrf.mxu0
      %v1881 = vadd.f32 0.0, %v1880
      %v1882 = vpop.f32.mrf.mxu0
      %v1883 = vadd.f32 0.0, %v1882
      %1884 = vmatmul.bf16.gmra.mxu0 %v1120
      %v1885 = vpop.f32.mrf.mxu0
      %v1886 = vadd.f32 0.0, %v1885
      %v1887 = vpop.f32.mrf.mxu0
      %v1888 = vadd.f32 0.0, %v1887
      %1889 = vmatmul.bf16.gmra.mxu0 %v1121
      %v1890 = vpop.f32.mrf.mxu0
      %v1891 = vadd.f32 0.0, %v1890
      %v1892 = vpop.f32.mrf.mxu0
      %v1893 = vadd.f32 0.0, %v1892
      %1894 = vmatmul.bf16.gmra.mxu0 %v1122
      %v1895 = vpop.f32.mrf.mxu0
      %v1896 = vadd.f32 0.0, %v1895
      %v1897 = vpop.f32.mrf.mxu0
      %v1898 = vadd.f32 0.0, %v1897
      %1899 = vmatmul.bf16.gmra.mxu0 %v1123
      %v1900 = vpop.f32.mrf.mxu0
      %v1901 = vadd.f32 0.0, %v1900
      %v1902 = vpop.f32.mrf.mxu0
      %v1903 = vadd.f32 0.0, %v1902
      %1904 = vmatmul.bf16.gmra.mxu0 %v1124
      %v1905 = vpop.f32.mrf.mxu0
      %v1906 = vadd.f32 0.0, %v1905
      %v1907 = vpop.f32.mrf.mxu0
      %v1908 = vadd.f32 0.0, %v1907
      %1909 = vmatmul.bf16.gmra.mxu0 %v1125
      %v1910 = vpop.f32.mrf.mxu0
      %v1911 = vadd.f32 0.0, %v1910
      %v1912 = vpop.f32.mrf.mxu0
      %v1913 = vadd.f32 0.0, %v1912
      %1914 = vmatmul.bf16.gmra.mxu0 %v1126
      %v1915 = vpop.f32.mrf.mxu0
      %v1916 = vadd.f32 0.0, %v1915
      %v1917 = vpop.f32.mrf.mxu0
      %v1918 = vadd.f32 0.0, %v1917
      %1919 = vmatmul.bf16.gmra.mxu0 %v1127
      %v1920 = vpop.f32.mrf.mxu0
      %v1921 = vadd.f32 0.0, %v1920
      %v1922 = vpop.f32.mrf.mxu0
      %v1923 = vadd.f32 0.0, %v1922
      %1924 = vmatmul.bf16.gmra.mxu0 %v1128
      %v1925 = vpop.f32.mrf.mxu0
      %v1926 = vadd.f32 0.0, %v1925
      %v1927 = vpop.f32.mrf.mxu0
      %v1928 = vadd.f32 0.0, %v1927
      %1929 = vmatmul.bf16.gmra.mxu0 %v1129
      %v1930 = vpop.f32.mrf.mxu0
      %v1931 = vadd.f32 0.0, %v1930
      %v1932 = vpop.f32.mrf.mxu0
      %v1933 = vadd.f32 0.0, %v1932
      %1934 = vmatmul.bf16.gmra.mxu0 %v1130
      %v1935 = vpop.f32.mrf.mxu0
      %v1936 = vadd.f32 0.0, %v1935
      %v1937 = vpop.f32.mrf.mxu0
      %v1938 = vadd.f32 0.0, %v1937
      %1939 = vmatmul.bf16.gmra.mxu0 %v1131
      %v1940 = vpop.f32.mrf.mxu0
      %v1941 = vadd.f32 0.0, %v1940
      %v1942 = vpop.f32.mrf.mxu0
      %v1943 = vadd.f32 0.0, %v1942
      %1944 = vmatmul.bf16.gmra.mxu0 %v1132
      %v1945 = vpop.f32.mrf.mxu0
      %v1946 = vadd.f32 0.0, %v1945
      %v1947 = vpop.f32.mrf.mxu0
      %v1948 = vadd.f32 0.0, %v1947
      %1949 = vmatmul.bf16.gmra.mxu0 %v1133
      %v1950 = vpop.f32.mrf.mxu0
      %v1951 = vadd.f32 0.0, %v1950
      %v1952 = vpop.f32.mrf.mxu0
      %v1953 = vadd.f32 0.0, %v1952
      %1954 = vmatmul.bf16.gmra.mxu0 %v1134
      %v1955 = vpop.f32.mrf.mxu0
      %v1956 = vadd.f32 0.0, %v1955
      %v1957 = vpop.f32.mrf.mxu0
      %v1958 = vadd.f32 0.0, %v1957
      %1959 = vdwg.mxu0
      %v1960 = vadd.f32 %v1321, %v1323
      %v1961 = vadd.f32 %v1960, %v1326
      %v1962 = vadd.f32 %v1961, %v1328
      %v1963 = vadd.f32 %v1962, %v1331
      %v1964 = vadd.f32 %v1963, %v1333
      %v1965 = vadd.f32 %v1964, %v1336
      %v1966 = vadd.f32 %v1965, %v1338
      %v1967 = vadd.f32 %v1966, %v1341
      %v1968 = vadd.f32 %v1967, %v1343
      %v1969 = vadd.f32 %v1968, %v1346
      %v1970 = vadd.f32 %v1969, %v1348
      %v1971 = vadd.f32 %v1970, %v1351
      %v1972 = vadd.f32 %v1971, %v1353
      %v1973 = vadd.f32 %v1972, %v1356
      %v1974 = vadd.f32 %v1973, %v1358
      %v1975 = vadd.f32 %v1974, %v1361
      %v1976 = vadd.f32 %v1975, %v1363
      %v1977 = vadd.f32 %v1976, %v1366
      %v1978 = vadd.f32 %v1977, %v1368
      %v1979 = vadd.f32 %v1978, %v1371
      %v1980 = vadd.f32 %v1979, %v1373
      %v1981 = vadd.f32 %v1980, %v1376
      %v1982 = vadd.f32 %v1981, %v1378
      %v1983 = vadd.f32 %v1982, %v1381
      %v1984 = vadd.f32 %v1983, %v1383
      %v1985 = vadd.f32 %v1984, %v1386
      %v1986 = vadd.f32 %v1985, %v1388
      %v1987 = vadd.f32 %v1986, %v1391
      %v1988 = vadd.f32 %v1987, %v1393
      %v1989 = vadd.f32 %v1988, %v1396
      %v1990 = vadd.f32 %v1989, %v1398
      %v1991 = vadd.f32 %v1990, %v1401
      %v1992 = vadd.f32 %v1991, %v1403
      %v1993 = vadd.f32 %v1992, %v1406
      %v1994 = vadd.f32 %v1993, %v1408
      %v1995 = vadd.f32 %v1994, %v1411
      %v1996 = vadd.f32 %v1995, %v1413
      %v1997 = vadd.f32 %v1996, %v1416
      %v1998 = vadd.f32 %v1997, %v1418
      %v1999 = vadd.f32 %v1998, %v1421
      %v2000 = vadd.f32 %v1999, %v1423
      %v2001 = vadd.f32 %v2000, %v1426
      %v2002 = vadd.f32 %v2001, %v1428
      %v2003 = vadd.f32 %v2002, %v1431
      %v2004 = vadd.f32 %v2003, %v1433
      %v2005 = vadd.f32 %v2004, %v1436
      %v2006 = vadd.f32 %v2005, %v1438
      %v2007 = vadd.f32 %v2006, %v1441
      %v2008 = vadd.f32 %v2007, %v1443
      %v2009 = vadd.f32 %v2008, %v1446
      %v2010 = vadd.f32 %v2009, %v1448
      %v2011 = vadd.f32 %v2010, %v1451
      %v2012 = vadd.f32 %v2011, %v1453
      %v2013 = vadd.f32 %v2012, %v1456
      %v2014 = vadd.f32 %v2013, %v1458
      %v2015 = vadd.f32 %v2014, %v1461
      %v2016 = vadd.f32 %v2015, %v1463
      %v2017 = vadd.f32 %v2016, %v1466
      %v2018 = vadd.f32 %v2017, %v1468
      %v2019 = vadd.f32 %v2018, %v1471
      %v2020 = vadd.f32 %v2019, %v1473
      %v2021 = vadd.f32 %v2020, %v1476
      %v2022 = vadd.f32 %v2021, %v1478
      %v2023 = vadd.f32 %v2022, %v1481
      %v2024 = vadd.f32 %v2023, %v1483
      %v2025 = vadd.f32 %v2024, %v1486
      %v2026 = vadd.f32 %v2025, %v1488
      %v2027 = vadd.f32 %v2026, %v1491
      %v2028 = vadd.f32 %v2027, %v1493
      %v2029 = vadd.f32 %v2028, %v1496
      %v2030 = vadd.f32 %v2029, %v1498
      %v2031 = vadd.f32 %v2030, %v1501
      %v2032 = vadd.f32 %v2031, %v1503
      %v2033 = vadd.f32 %v2032, %v1506
      %v2034 = vadd.f32 %v2033, %v1508
      %v2035 = vadd.f32 %v2034, %v1511
      %v2036 = vadd.f32 %v2035, %v1513
      %v2037 = vadd.f32 %v2036, %v1516
      %v2038 = vadd.f32 %v2037, %v1518
      %v2039 = vadd.f32 %v2038, %v1521
      %v2040 = vadd.f32 %v2039, %v1523
      %v2041 = vadd.f32 %v2040, %v1526
      %v2042 = vadd.f32 %v2041, %v1528
      %v2043 = vadd.f32 %v2042, %v1531
      %v2044 = vadd.f32 %v2043, %v1533
      %v2045 = vadd.f32 %v2044, %v1536
      %v2046 = vadd.f32 %v2045, %v1538
      %v2047 = vadd.f32 %v2046, %v1541
      %v2048 = vadd.f32 %v2047, %v1543
      %v2049 = vadd.f32 %v2048, %v1546
      %v2050 = vadd.f32 %v2049, %v1548
      %v2051 = vadd.f32 %v2050, %v1551
      %v2052 = vadd.f32 %v2051, %v1553
      %v2053 = vadd.f32 %v2052, %v1556
      %v2054 = vadd.f32 %v2053, %v1558
      %v2055 = vadd.f32 %v2054, %v1561
      %v2056 = vadd.f32 %v2055, %v1563
      %v2057 = vadd.f32 %v2056, %v1566
      %v2058 = vadd.f32 %v2057, %v1568
      %v2059 = vadd.f32 %v2058, %v1571
      %v2060 = vadd.f32 %v2059, %v1573
      %v2061 = vadd.f32 %v2060, %v1576
      %v2062 = vadd.f32 %v2061, %v1578
      %v2063 = vadd.f32 %v2062, %v1581
      %v2064 = vadd.f32 %v2063, %v1583
      %v2065 = vadd.f32 %v2064, %v1586
      %v2066 = vadd.f32 %v2065, %v1588
      %v2067 = vadd.f32 %v2066, %v1591
      %v2068 = vadd.f32 %v2067, %v1593
      %v2069 = vadd.f32 %v2068, %v1596
      %v2070 = vadd.f32 %v2069, %v1598
      %v2071 = vadd.f32 %v2070, %v1601
      %v2072 = vadd.f32 %v2071, %v1603
      %v2073 = vadd.f32 %v2072, %v1606
      %v2074 = vadd.f32 %v2073, %v1608
      %v2075 = vadd.f32 %v2074, %v1611
      %v2076 = vadd.f32 %v2075, %v1613
      %v2077 = vadd.f32 %v2076, %v1616
      %v2078 = vadd.f32 %v2077, %v1618
      %v2079 = vadd.f32 %v2078, %v1621
      %v2080 = vadd.f32 %v2079, %v1623
      %v2081 = vadd.f32 %v2080, %v1626
      %v2082 = vadd.f32 %v2081, %v1628
      %v2083 = vadd.f32 %v2082, %v1631
      %v2084 = vadd.f32 %v2083, %v1633
      %v2085 = vadd.f32 %v2084, %v1636
      %v2086 = vadd.f32 %v2085, %v1638
      %v2087 = vadd.f32 %v2086, %v1641
      %v2088 = vadd.f32 %v2087, %v1643
      %v2089 = vadd.f32 %v2088, %v1646
      %v2090 = vadd.f32 %v2089, %v1648
      %v2091 = vadd.f32 %v2090, %v1651
      %v2092 = vadd.f32 %v2091, %v1653
      %v2093 = vadd.f32 %v2092, %v1656
      %v2094 = vadd.f32 %v2093, %v1658
      %v2095 = vadd.f32 %v2094, %v1661
      %v2096 = vadd.f32 %v2095, %v1663
      %v2097 = vadd.f32 %v2096, %v1666
      %v2098 = vadd.f32 %v2097, %v1668
      %v2099 = vadd.f32 %v2098, %v1671
      %v2100 = vadd.f32 %v2099, %v1673
      %v2101 = vadd.f32 %v2100, %v1676
      %v2102 = vadd.f32 %v2101, %v1678
      %v2103 = vadd.f32 %v2102, %v1681
      %v2104 = vadd.f32 %v2103, %v1683
      %v2105 = vadd.f32 %v2104, %v1686
      %v2106 = vadd.f32 %v2105, %v1688
      %v2107 = vadd.f32 %v2106, %v1691
      %v2108 = vadd.f32 %v2107, %v1693
      %v2109 = vadd.f32 %v2108, %v1696
      %v2110 = vadd.f32 %v2109, %v1698
      %v2111 = vadd.f32 %v2110, %v1701
      %v2112 = vadd.f32 %v2111, %v1703
      %v2113 = vadd.f32 %v2112, %v1706
      %v2114 = vadd.f32 %v2113, %v1708
      %v2115 = vadd.f32 %v2114, %v1711
      %v2116 = vadd.f32 %v2115, %v1713
      %v2117 = vadd.f32 %v2116, %v1716
      %v2118 = vadd.f32 %v2117, %v1718
      %v2119 = vadd.f32 %v2118, %v1721
      %v2120 = vadd.f32 %v2119, %v1723
      %v2121 = vadd.f32 %v2120, %v1726
      %v2122 = vadd.f32 %v2121, %v1728
      %v2123 = vadd.f32 %v2122, %v1731
      %v2124 = vadd.f32 %v2123, %v1733
      %v2125 = vadd.f32 %v2124, %v1736
      %v2126 = vadd.f32 %v2125, %v1738
      %v2127 = vadd.f32 %v2126, %v1741
      %v2128 = vadd.f32 %v2127, %v1743
      %v2129 = vadd.f32 %v2128, %v1746
      %v2130 = vadd.f32 %v2129, %v1748
      %v2131 = vadd.f32 %v2130, %v1751
      %v2132 = vadd.f32 %v2131, %v1753
      %v2133 = vadd.f32 %v2132, %v1756
      %v2134 = vadd.f32 %v2133, %v1758
      %v2135 = vadd.f32 %v2134, %v1761
      %v2136 = vadd.f32 %v2135, %v1763
      %v2137 = vadd.f32 %v2136, %v1766
      %v2138 = vadd.f32 %v2137, %v1768
      %v2139 = vadd.f32 %v2138, %v1771
      %v2140 = vadd.f32 %v2139, %v1773
      %v2141 = vadd.f32 %v2140, %v1776
      %v2142 = vadd.f32 %v2141, %v1778
      %v2143 = vadd.f32 %v2142, %v1781
      %v2144 = vadd.f32 %v2143, %v1783
      %v2145 = vadd.f32 %v2144, %v1786
      %v2146 = vadd.f32 %v2145, %v1788
      %v2147 = vadd.f32 %v2146, %v1791
      %v2148 = vadd.f32 %v2147, %v1793
      %v2149 = vadd.f32 %v2148, %v1796
      %v2150 = vadd.f32 %v2149, %v1798
      %v2151 = vadd.f32 %v2150, %v1801
      %v2152 = vadd.f32 %v2151, %v1803
      %v2153 = vadd.f32 %v2152, %v1806
      %v2154 = vadd.f32 %v2153, %v1808
      %v2155 = vadd.f32 %v2154, %v1811
      %v2156 = vadd.f32 %v2155, %v1813
      %v2157 = vadd.f32 %v2156, %v1816
      %v2158 = vadd.f32 %v2157, %v1818
      %v2159 = vadd.f32 %v2158, %v1821
      %v2160 = vadd.f32 %v2159, %v1823
      %v2161 = vadd.f32 %v2160, %v1826
      %v2162 = vadd.f32 %v2161, %v1828
      %v2163 = vadd.f32 %v2162, %v1831
      %v2164 = vadd.f32 %v2163, %v1833
      %v2165 = vadd.f32 %v2164, %v1836
      %v2166 = vadd.f32 %v2165, %v1838
      %v2167 = vadd.f32 %v2166, %v1841
      %v2168 = vadd.f32 %v2167, %v1843
      %v2169 = vadd.f32 %v2168, %v1846
      %v2170 = vadd.f32 %v2169, %v1848
      %v2171 = vadd.f32 %v2170, %v1851
      %v2172 = vadd.f32 %v2171, %v1853
      %v2173 = vadd.f32 %v2172, %v1856
      %v2174 = vadd.f32 %v2173, %v1858
      %v2175 = vadd.f32 %v2174, %v1861
      %v2176 = vadd.f32 %v2175, %v1863
      %v2177 = vadd.f32 %v2176, %v1866
      %v2178 = vadd.f32 %v2177, %v1868
      %v2179 = vadd.f32 %v2178, %v1871
      %v2180 = vadd.f32 %v2179, %v1873
      %v2181 = vadd.f32 %v2180, %v1876
      %v2182 = vadd.f32 %v2181, %v1878
      %v2183 = vadd.f32 %v2182, %v1881
      %v2184 = vadd.f32 %v2183, %v1883
      %v2185 = vadd.f32 %v2184, %v1886
      %v2186 = vadd.f32 %v2185, %v1888
      %v2187 = vadd.f32 %v2186, %v1891
      %v2188 = vadd.f32 %v2187, %v1893
      %v2189 = vadd.f32 %v2188, %v1896
      %v2190 = vadd.f32 %v2189, %v1898
      %v2191 = vadd.f32 %v2190, %v1901
      %v2192 = vadd.f32 %v2191, %v1903
      %v2193 = vadd.f32 %v2192, %v1906
      %v2194 = vadd.f32 %v2193, %v1908
      %v2195 = vadd.f32 %v2194, %v1911
      %v2196 = vadd.f32 %v2195, %v1913
      %v2197 = vadd.f32 %v2196, %v1916
      %v2198 = vadd.f32 %v2197, %v1918
      %v2199 = vadd.f32 %v2198, %v1921
      %v2200 = vadd.f32 %v2199, %v1923
      %v2201 = vadd.f32 %v2200, %v1926
      %v2202 = vadd.f32 %v2201, %v1928
      %v2203 = vadd.f32 %v2202, %v1931
      %v2204 = vadd.f32 %v2203, %v1933
      %v2205 = vadd.f32 %v2204, %v1936
      %v2206 = vadd.f32 %v2205, %v1938
      %v2207 = vadd.f32 %v2206, %v1941
      %v2208 = vadd.f32 %v2207, %v1943
      %v2209 = vadd.f32 %v2208, %v1946
      %v2210 = vadd.f32 %v2209, %v1948
      %v2211 = vadd.f32 %v2210, %v1951
      %v2212 = vadd.f32 %v2211, %v1953
      %v2213 = vadd.f32 %v2212, %v1956
      %v2214 = vadd.f32 %v2213, %v1958
      %v2215 = vrot.slane %v2214, 4
      %v2216 = vadd.f32 %v2214, %v2215
      %v2217 = vrot.slane %v2216, 2
      %v2218 = vadd.f32 %v2216, %v2217
      %v2219 = vrot.slane %v2218, 1
      %v2220 = vadd.f32 %v2218, %v2219
      %v2221 = vrcp.pop 2048.0
      %v2222 = vmul.f32 2048.0, %v2221
      %v2223 = vsub.f32 1.0, %v2222
      %v2224 = vmul.f32 %v2221, %v2223
      %v2225 = vadd.f32 %v2221, %v2224
      %vm2226 = vweird.f32 %v2221
      %v2227 = vsel %vm2226, %v2221, %v2225
      %v2228 = vmul.f32 %v2220, %v2227
      %v2229 = vsub.f32 %v1321, %v2228
      %v2230 = vsub.f32 %v1323, %v2228
      %v2231 = vsub.f32 %v1326, %v2228
      %v2232 = vsub.f32 %v1328, %v2228
      %v2233 = vsub.f32 %v1331, %v2228
      %v2234 = vsub.f32 %v1333, %v2228
      %v2235 = vsub.f32 %v1336, %v2228
      %v2236 = vsub.f32 %v1338, %v2228
      %v2237 = vsub.f32 %v1341, %v2228
      %v2238 = vsub.f32 %v1343, %v2228
      %v2239 = vsub.f32 %v1346, %v2228
      %v2240 = vsub.f32 %v1348, %v2228
      %v2241 = vsub.f32 %v1351, %v2228
      %v2242 = vsub.f32 %v1353, %v2228
      %v2243 = vsub.f32 %v1356, %v2228
      %v2244 = vsub.f32 %v1358, %v2228
      %v2245 = vsub.f32 %v1361, %v2228
      %v2246 = vsub.f32 %v1363, %v2228
      %v2247 = vsub.f32 %v1366, %v2228
      %v2248 = vsub.f32 %v1368, %v2228
      %v2249 = vsub.f32 %v1371, %v2228
      %v2250 = vsub.f32 %v1373, %v2228
      %v2251 = vsub.f32 %v1376, %v2228
      %v2252 = vsub.f32 %v1378, %v2228
      %v2253 = vsub.f32 %v1381, %v2228
      %v2254 = vsub.f32 %v1383, %v2228
      %v2255 = vsub.f32 %v1386, %v2228
      %v2256 = vsub.f32 %v1388, %v2228
      %v2257 = vsub.f32 %v1391, %v2228
      %v2258 = vsub.f32 %v1393, %v2228
      %v2259 = vsub.f32 %v1396, %v2228
      %v2260 = vsub.f32 %v1398, %v2228
      %v2261 = vsub.f32 %v1401, %v2228
      %v2262 = vsub.f32 %v1403, %v2228
      %v2263 = vsub.f32 %v1406, %v2228
      %v2264 = vsub.f32 %v1408, %v2228
      %v2265 = vsub.f32 %v1411, %v2228
      %v2266 = vsub.f32 %v1413, %v2228
      %v2267 = vsub.f32 %v1416, %v2228
      %v2268 = vsub.f32 %v1418, %v2228
      %v2269 = vsub.f32 %v1421, %v2228
      %v2270 = vsub.f32 %v1423, %v2228
      %v2271 = vsub.f32 %v1426, %v2228
      %v2272 = vsub.f32 %v1428, %v2228
      %v2273 = vsub.f32 %v1431, %v2228
      %v2274 = vsub.f32 %v1433, %v2228
      %v2275 = vsub.f32 %v1436, %v2228
      %v2276 = vsub.f32 %v1438, %v2228
      %v2277 = vsub.f32 %v1441, %v2228
      %v2278 = vsub.f32 %v1443, %v2228
      %v2279 = vsub.f32 %v1446, %v2228
      %v2280 = vsub.f32 %v1448, %v2228
      %v2281 = vsub.f32 %v1451, %v2228
      %v2282 = vsub.f32 %v1453, %v2228
      %v2283 = vsub.f32 %v1456, %v2228
      %v2284 = vsub.f32 %v1458, %v2228
      %v2285 = vsub.f32 %v1461, %v2228
      %v2286 = vsub.f32 %v1463, %v2228
      %v2287 = vsub.f32 %v1466, %v2228
      %v2288 = vsub.f32 %v1468, %v2228
      %v2289 = vsub.f32 %v1471, %v2228
      %v2290 = vsub.f32 %v1473, %v2228
      %v2291 = vsub.f32 %v1476, %v2228
      %v2292 = vsub.f32 %v1478, %v2228
      %v2293 = vsub.f32 %v1481, %v2228
      %v2294 = vsub.f32 %v1483, %v2228
      %v2295 = vsub.f32 %v1486, %v2228
      %v2296 = vsub.f32 %v1488, %v2228
      %v2297 = vsub.f32 %v1491, %v2228
      %v2298 = vsub.f32 %v1493, %v2228
      %v2299 = vsub.f32 %v1496, %v2228
      %v2300 = vsub.f32 %v1498, %v2228
      %v2301 = vsub.f32 %v1501, %v2228
      %v2302 = vsub.f32 %v1503, %v2228
      %v2303 = vsub.f32 %v1506, %v2228
      %v2304 = vsub.f32 %v1508, %v2228
      %v2305 = vsub.f32 %v1511, %v2228
      %v2306 = vsub.f32 %v1513, %v2228
      %v2307 = vsub.f32 %v1516, %v2228
      %v2308 = vsub.f32 %v1518, %v2228
      %v2309 = vsub.f32 %v1521, %v2228
      %v2310 = vsub.f32 %v1523, %v2228
      %v2311 = vsub.f32 %v1526, %v2228
      %v2312 = vsub.f32 %v1528, %v2228
      %v2313 = vsub.f32 %v1531, %v2228
      %v2314 = vsub.f32 %v1533, %v2228
      %v2315 = vsub.f32 %v1536, %v2228
      %v2316 = vsub.f32 %v1538, %v2228
      %v2317 = vsub.f32 %v1541, %v2228
      %v2318 = vsub.f32 %v1543, %v2228
      %v2319 = vsub.f32 %v1546, %v2228
      %v2320 = vsub.f32 %v1548, %v2228
      %v2321 = vsub.f32 %v1551, %v2228
      %v2322 = vsub.f32 %v1553, %v2228
      %v2323 = vsub.f32 %v1556, %v2228
      %v2324 = vsub.f32 %v1558, %v2228
      %v2325 = vsub.f32 %v1561, %v2228
      %v2326 = vsub.f32 %v1563, %v2228
      %v2327 = vsub.f32 %v1566, %v2228
      %v2328 = vsub.f32 %v1568, %v2228
      %v2329 = vsub.f32 %v1571, %v2228
      %v2330 = vsub.f32 %v1573, %v2228
      %v2331 = vsub.f32 %v1576, %v2228
      %v2332 = vsub.f32 %v1578, %v2228
      %v2333 = vsub.f32 %v1581, %v2228
      %v2334 = vsub.f32 %v1583, %v2228
      %v2335 = vsub.f32 %v1586, %v2228
      %v2336 = vsub.f32 %v1588, %v2228
      %v2337 = vsub.f32 %v1591, %v2228
      %v2338 = vsub.f32 %v1593, %v2228
      %v2339 = vsub.f32 %v1596, %v2228
      %v2340 = vsub.f32 %v1598, %v2228
      %v2341 = vsub.f32 %v1601, %v2228
      %v2342 = vsub.f32 %v1603, %v2228
      %v2343 = vsub.f32 %v1606, %v2228
      %v2344 = vsub.f32 %v1608, %v2228
      %v2345 = vsub.f32 %v1611, %v2228
      %v2346 = vsub.f32 %v1613, %v2228
      %v2347 = vsub.f32 %v1616, %v2228
      %v2348 = vsub.f32 %v1618, %v2228
      %v2349 = vsub.f32 %v1621, %v2228
      %v2350 = vsub.f32 %v1623, %v2228
      %v2351 = vsub.f32 %v1626, %v2228
      %v2352 = vsub.f32 %v1628, %v2228
      %v2353 = vsub.f32 %v1631, %v2228
      %v2354 = vsub.f32 %v1633, %v2228
      %v2355 = vsub.f32 %v1636, %v2228
      %v2356 = vsub.f32 %v1638, %v2228
      %v2357 = vsub.f32 %v1641, %v2228
      %v2358 = vsub.f32 %v1643, %v2228
      %v2359 = vsub.f32 %v1646, %v2228
      %v2360 = vsub.f32 %v1648, %v2228
      %v2361 = vsub.f32 %v1651, %v2228
      %v2362 = vsub.f32 %v1653, %v2228
      %v2363 = vsub.f32 %v1656, %v2228
      %v2364 = vsub.f32 %v1658, %v2228
      %v2365 = vsub.f32 %v1661, %v2228
      %v2366 = vsub.f32 %v1663, %v2228
      %v2367 = vsub.f32 %v1666, %v2228
      %v2368 = vsub.f32 %v1668, %v2228
      %v2369 = vsub.f32 %v1671, %v2228
      %v2370 = vsub.f32 %v1673, %v2228
      %v2371 = vsub.f32 %v1676, %v2228
      %v2372 = vsub.f32 %v1678, %v2228
      %v2373 = vsub.f32 %v1681, %v2228
      %v2374 = vsub.f32 %v1683, %v2228
      %v2375 = vsub.f32 %v1686, %v2228
      %v2376 = vsub.f32 %v1688, %v2228
      %v2377 = vsub.f32 %v1691, %v2228
      %v2378 = vsub.f32 %v1693, %v2228
      %v2379 = vsub.f32 %v1696, %v2228
      %v2380 = vsub.f32 %v1698, %v2228
      %v2381 = vsub.f32 %v1701, %v2228
      %v2382 = vsub.f32 %v1703, %v2228
      %v2383 = vsub.f32 %v1706, %v2228
      %v2384 = vsub.f32 %v1708, %v2228
      %v2385 = vsub.f32 %v1711, %v2228
      %v2386 = vsub.f32 %v1713, %v2228
      %v2387 = vsub.f32 %v1716, %v2228
      %v2388 = vsub.f32 %v1718, %v2228
      %v2389 = vsub.f32 %v1721, %v2228
      %v2390 = vsub.f32 %v1723, %v2228
      %v2391 = vsub.f32 %v1726, %v2228
      %v2392 = vsub.f32 %v1728, %v2228
      %v2393 = vsub.f32 %v1731, %v2228
      %v2394 = vsub.f32 %v1733, %v2228
      %v2395 = vsub.f32 %v1736, %v2228
      %v2396 = vsub.f32 %v1738, %v2228
      %v2397 = vsub.f32 %v1741, %v2228
      %v2398 = vsub.f32 %v1743, %v2228
      %v2399 = vsub.f32 %v1746, %v2228
      %v2400 = vsub.f32 %v1748, %v2228
      %v2401 = vsub.f32 %v1751, %v2228
      %v2402 = vsub.f32 %v1753, %v2228
      %v2403 = vsub.f32 %v1756, %v2228
      %v2404 = vsub.f32 %v1758, %v2228
      %v2405 = vsub.f32 %v1761, %v2228
      %v2406 = vsub.f32 %v1763, %v2228
      %v2407 = vsub.f32 %v1766, %v2228
      %v2408 = vsub.f32 %v1768, %v2228
      %v2409 = vsub.f32 %v1771, %v2228
      %v2410 = vsub.f32 %v1773, %v2228
      %v2411 = vsub.f32 %v1776, %v2228
      %v2412 = vsub.f32 %v1778, %v2228
      %v2413 = vsub.f32 %v1781, %v2228
      %v2414 = vsub.f32 %v1783, %v2228
      %v2415 = vsub.f32 %v1786, %v2228
      %v2416 = vsub.f32 %v1788, %v2228
      %v2417 = vsub.f32 %v1791, %v2228
      %v2418 = vsub.f32 %v1793, %v2228
      %v2419 = vsub.f32 %v1796, %v2228
      %v2420 = vsub.f32 %v1798, %v2228
      %v2421 = vsub.f32 %v1801, %v2228
      %v2422 = vsub.f32 %v1803, %v2228
      %v2423 = vsub.f32 %v1806, %v2228
      %v2424 = vsub.f32 %v1808, %v2228
      %v2425 = vsub.f32 %v1811, %v2228
      %v2426 = vsub.f32 %v1813, %v2228
      %v2427 = vsub.f32 %v1816, %v2228
      %v2428 = vsub.f32 %v1818, %v2228
      %v2429 = vsub.f32 %v1821, %v2228
      %v2430 = vsub.f32 %v1823, %v2228
      %v2431 = vsub.f32 %v1826, %v2228
      %v2432 = vsub.f32 %v1828, %v2228
      %v2433 = vsub.f32 %v1831, %v2228
      %v2434 = vsub.f32 %v1833, %v2228
      %v2435 = vsub.f32 %v1836, %v2228
      %v2436 = vsub.f32 %v1838, %v2228
      %v2437 = vsub.f32 %v1841, %v2228
      %v2438 = vsub.f32 %v1843, %v2228
      %v2439 = vsub.f32 %v1846, %v2228
      %v2440 = vsub.f32 %v1848, %v2228
      %v2441 = vsub.f32 %v1851, %v2228
      %v2442 = vsub.f32 %v1853, %v2228
      %v2443 = vsub.f32 %v1856, %v2228
      %v2444 = vsub.f32 %v1858, %v2228
      %v2445 = vsub.f32 %v1861, %v2228
      %v2446 = vsub.f32 %v1863, %v2228
      %v2447 = vsub.f32 %v1866, %v2228
      %v2448 = vsub.f32 %v1868, %v2228
      %v2449 = vsub.f32 %v1871, %v2228
      %v2450 = vsub.f32 %v1873, %v2228
      %v2451 = vsub.f32 %v1876, %v2228
      %v2452 = vsub.f32 %v1878, %v2228
      %v2453 = vsub.f32 %v1881, %v2228
      %v2454 = vsub.f32 %v1883, %v2228
      %v2455 = vsub.f32 %v1886, %v2228
      %v2456 = vsub.f32 %v1888, %v2228
      %v2457 = vsub.f32 %v1891, %v2228
      %v2458 = vsub.f32 %v1893, %v2228
      %v2459 = vsub.f32 %v1896, %v2228
      %v2460 = vsub.f32 %v1898, %v2228
      %v2461 = vsub.f32 %v1901, %v2228
      %v2462 = vsub.f32 %v1903, %v2228
      %v2463 = vsub.f32 %v1906, %v2228
      %v2464 = vsub.f32 %v1908, %v2228
      %v2465 = vsub.f32 %v1911, %v2228
      %v2466 = vsub.f32 %v1913, %v2228
      %v2467 = vsub.f32 %v1916, %v2228
      %v2468 = vsub.f32 %v1918, %v2228
      %v2469 = vsub.f32 %v1921, %v2228
      %v2470 = vsub.f32 %v1923, %v2228
      %v2471 = vsub.f32 %v1926, %v2228
      %v2472 = vsub.f32 %v1928, %v2228
      %v2473 = vsub.f32 %v1931, %v2228
      %v2474 = vsub.f32 %v1933, %v2228
      %v2475 = vsub.f32 %v1936, %v2228
      %v2476 = vsub.f32 %v1938, %v2228
      %v2477 = vsub.f32 %v1941, %v2228
      %v2478 = vsub.f32 %v1943, %v2228
      %v2479 = vsub.f32 %v1946, %v2228
      %v2480 = vsub.f32 %v1948, %v2228
      %v2481 = vsub.f32 %v1951, %v2228
      %v2482 = vsub.f32 %v1953, %v2228
      %v2483 = vsub.f32 %v1956, %v2228
      %v2484 = vsub.f32 %v1958, %v2228
      %v2485 = vmul.f32 %v2229, %v2229
      %v2486 = vmul.f32 %v2230, %v2230
      %v2487 = vmul.f32 %v2231, %v2231
      %v2488 = vmul.f32 %v2232, %v2232
      %v2489 = vmul.f32 %v2233, %v2233
      %v2490 = vmul.f32 %v2234, %v2234
      %v2491 = vmul.f32 %v2235, %v2235
      %v2492 = vmul.f32 %v2236, %v2236
      %v2493 = vmul.f32 %v2237, %v2237
      %v2494 = vmul.f32 %v2238, %v2238
      %v2495 = vmul.f32 %v2239, %v2239
      %v2496 = vmul.f32 %v2240, %v2240
      %v2497 = vmul.f32 %v2241, %v2241
      %v2498 = vmul.f32 %v2242, %v2242
      %v2499 = vmul.f32 %v2243, %v2243
      %v2500 = vmul.f32 %v2244, %v2244
      %v2501 = vmul.f32 %v2245, %v2245
      %v2502 = vmul.f32 %v2246, %v2246
      %v2503 = vmul.f32 %v2247, %v2247
      %v2504 = vmul.f32 %v2248, %v2248
      %v2505 = vmul.f32 %v2249, %v2249
      %v2506 = vmul.f32 %v2250, %v2250
      %v2507 = vmul.f32 %v2251, %v2251
      %v2508 = vmul.f32 %v2252, %v2252
      %v2509 = vmul.f32 %v2253, %v2253
      %v2510 = vmul.f32 %v2254, %v2254
      %v2511 = vmul.f32 %v2255, %v2255
      %v2512 = vmul.f32 %v2256, %v2256
      %v2513 = vmul.f32 %v2257, %v2257
      %v2514 = vmul.f32 %v2258, %v2258
      %v2515 = vmul.f32 %v2259, %v2259
      %v2516 = vmul.f32 %v2260, %v2260
      %v2517 = vmul.f32 %v2261, %v2261
      %v2518 = vmul.f32 %v2262, %v2262
      %v2519 = vmul.f32 %v2263, %v2263
      %v2520 = vmul.f32 %v2264, %v2264
      %v2521 = vmul.f32 %v2265, %v2265
      %v2522 = vmul.f32 %v2266, %v2266
      %v2523 = vmul.f32 %v2267, %v2267
      %v2524 = vmul.f32 %v2268, %v2268
      %v2525 = vmul.f32 %v2269, %v2269
      %v2526 = vmul.f32 %v2270, %v2270
      %v2527 = vmul.f32 %v2271, %v2271
      %v2528 = vmul.f32 %v2272, %v2272
      %v2529 = vmul.f32 %v2273, %v2273
      %v2530 = vmul.f32 %v2274, %v2274
      %v2531 = vmul.f32 %v2275, %v2275
      %v2532 = vmul.f32 %v2276, %v2276
      %v2533 = vmul.f32 %v2277, %v2277
      %v2534 = vmul.f32 %v2278, %v2278
      %v2535 = vmul.f32 %v2279, %v2279
      %v2536 = vmul.f32 %v2280, %v2280
      %v2537 = vmul.f32 %v2281, %v2281
      %v2538 = vmul.f32 %v2282, %v2282
      %v2539 = vmul.f32 %v2283, %v2283
      %v2540 = vmul.f32 %v2284, %v2284
      %v2541 = vmul.f32 %v2285, %v2285
      %v2542 = vmul.f32 %v2286, %v2286
      %v2543 = vmul.f32 %v2287, %v2287
      %v2544 = vmul.f32 %v2288, %v2288
      %v2545 = vmul.f32 %v2289, %v2289
      %v2546 = vmul.f32 %v2290, %v2290
      %v2547 = vmul.f32 %v2291, %v2291
      %v2548 = vmul.f32 %v2292, %v2292
      %v2549 = vmul.f32 %v2293, %v2293
      %v2550 = vmul.f32 %v2294, %v2294
      %v2551 = vmul.f32 %v2295, %v2295
      %v2552 = vmul.f32 %v2296, %v2296
      %v2553 = vmul.f32 %v2297, %v2297
      %v2554 = vmul.f32 %v2298, %v2298
      %v2555 = vmul.f32 %v2299, %v2299
      %v2556 = vmul.f32 %v2300, %v2300
      %v2557 = vmul.f32 %v2301, %v2301
      %v2558 = vmul.f32 %v2302, %v2302
      %v2559 = vmul.f32 %v2303, %v2303
      %v2560 = vmul.f32 %v2304, %v2304
      %v2561 = vmul.f32 %v2305, %v2305
      %v2562 = vmul.f32 %v2306, %v2306
      %v2563 = vmul.f32 %v2307, %v2307
      %v2564 = vmul.f32 %v2308, %v2308
      %v2565 = vmul.f32 %v2309, %v2309
      %v2566 = vmul.f32 %v2310, %v2310
      %v2567 = vmul.f32 %v2311, %v2311
      %v2568 = vmul.f32 %v2312, %v2312
      %v2569 = vmul.f32 %v2313, %v2313
      %v2570 = vmul.f32 %v2314, %v2314
      %v2571 = vmul.f32 %v2315, %v2315
      %v2572 = vmul.f32 %v2316, %v2316
      %v2573 = vmul.f32 %v2317, %v2317
      %v2574 = vmul.f32 %v2318, %v2318
      %v2575 = vmul.f32 %v2319, %v2319
      %v2576 = vmul.f32 %v2320, %v2320
      %v2577 = vmul.f32 %v2321, %v2321
      %v2578 = vmul.f32 %v2322, %v2322
      %v2579 = vmul.f32 %v2323, %v2323
      %v2580 = vmul.f32 %v2324, %v2324
      %v2581 = vmul.f32 %v2325, %v2325
      %v2582 = vmul.f32 %v2326, %v2326
      %v2583 = vmul.f32 %v2327, %v2327
      %v2584 = vmul.f32 %v2328, %v2328
      %v2585 = vmul.f32 %v2329, %v2329
      %v2586 = vmul.f32 %v2330, %v2330
      %v2587 = vmul.f32 %v2331, %v2331
      %v2588 = vmul.f32 %v2332, %v2332
      %v2589 = vmul.f32 %v2333, %v2333
      %v2590 = vmul.f32 %v2334, %v2334
      %v2591 = vmul.f32 %v2335, %v2335
      %v2592 = vmul.f32 %v2336, %v2336
      %v2593 = vmul.f32 %v2337, %v2337
      %v2594 = vmul.f32 %v2338, %v2338
      %v2595 = vmul.f32 %v2339, %v2339
      %v2596 = vmul.f32 %v2340, %v2340
      %v2597 = vmul.f32 %v2341, %v2341
      %v2598 = vmul.f32 %v2342, %v2342
      %v2599 = vmul.f32 %v2343, %v2343
      %v2600 = vmul.f32 %v2344, %v2344
      %v2601 = vmul.f32 %v2345, %v2345
      %v2602 = vmul.f32 %v2346, %v2346
      %v2603 = vmul.f32 %v2347, %v2347
      %v2604 = vmul.f32 %v2348, %v2348
      %v2605 = vmul.f32 %v2349, %v2349
      %v2606 = vmul.f32 %v2350, %v2350
      %v2607 = vmul.f32 %v2351, %v2351
      %v2608 = vmul.f32 %v2352, %v2352
      %v2609 = vmul.f32 %v2353, %v2353
      %v2610 = vmul.f32 %v2354, %v2354
      %v2611 = vmul.f32 %v2355, %v2355
      %v2612 = vmul.f32 %v2356, %v2356
      %v2613 = vmul.f32 %v2357, %v2357
      %v2614 = vmul.f32 %v2358, %v2358
      %v2615 = vmul.f32 %v2359, %v2359
      %v2616 = vmul.f32 %v2360, %v2360
      %v2617 = vmul.f32 %v2361, %v2361
      %v2618 = vmul.f32 %v2362, %v2362
      %v2619 = vmul.f32 %v2363, %v2363
      %v2620 = vmul.f32 %v2364, %v2364
      %v2621 = vmul.f32 %v2365, %v2365
      %v2622 = vmul.f32 %v2366, %v2366
      %v2623 = vmul.f32 %v2367, %v2367
      %v2624 = vmul.f32 %v2368, %v2368
      %v2625 = vmul.f32 %v2369, %v2369
      %v2626 = vmul.f32 %v2370, %v2370
      %v2627 = vmul.f32 %v2371, %v2371
      %v2628 = vmul.f32 %v2372, %v2372
      %v2629 = vmul.f32 %v2373, %v2373
      %v2630 = vmul.f32 %v2374, %v2374
      %v2631 = vmul.f32 %v2375, %v2375
      %v2632 = vmul.f32 %v2376, %v2376
      %v2633 = vmul.f32 %v2377, %v2377
      %v2634 = vmul.f32 %v2378, %v2378
      %v2635 = vmul.f32 %v2379, %v2379
      %v2636 = vmul.f32 %v2380, %v2380
      %v2637 = vmul.f32 %v2381, %v2381
      %v2638 = vmul.f32 %v2382, %v2382
      %v2639 = vmul.f32 %v2383, %v2383
      %v2640 = vmul.f32 %v2384, %v2384
      %v2641 = vmul.f32 %v2385, %v2385
      %v2642 = vmul.f32 %v2386, %v2386
      %v2643 = vmul.f32 %v2387, %v2387
      %v2644 = vmul.f32 %v2388, %v2388
      %v2645 = vmul.f32 %v2389, %v2389
      %v2646 = vmul.f32 %v2390, %v2390
      %v2647 = vmul.f32 %v2391, %v2391
      %v2648 = vmul.f32 %v2392, %v2392
      %v2649 = vmul.f32 %v2393, %v2393
      %v2650 = vmul.f32 %v2394, %v2394
      %v2651 = vmul.f32 %v2395, %v2395
      %v2652 = vmul.f32 %v2396, %v2396
      %v2653 = vmul.f32 %v2397, %v2397
      %v2654 = vmul.f32 %v2398, %v2398
      %v2655 = vmul.f32 %v2399, %v2399
      %v2656 = vmul.f32 %v2400, %v2400
      %v2657 = vmul.f32 %v2401, %v2401
      %v2658 = vmul.f32 %v2402, %v2402
      %v2659 = vmul.f32 %v2403, %v2403
      %v2660 = vmul.f32 %v2404, %v2404
      %v2661 = vmul.f32 %v2405, %v2405
      %v2662 = vmul.f32 %v2406, %v2406
      %v2663 = vmul.f32 %v2407, %v2407
      %v2664 = vmul.f32 %v2408, %v2408
      %v2665 = vmul.f32 %v2409, %v2409
      %v2666 = vmul.f32 %v2410, %v2410
      %v2667 = vmul.f32 %v2411, %v2411
      %v2668 = vmul.f32 %v2412, %v2412
      %v2669 = vmul.f32 %v2413, %v2413
      %v2670 = vmul.f32 %v2414, %v2414
      %v2671 = vmul.f32 %v2415, %v2415
      %v2672 = vmul.f32 %v2416, %v2416
      %v2673 = vmul.f32 %v2417, %v2417
      %v2674 = vmul.f32 %v2418, %v2418
      %v2675 = vmul.f32 %v2419, %v2419
      %v2676 = vmul.f32 %v2420, %v2420
      %v2677 = vmul.f32 %v2421, %v2421
      %v2678 = vmul.f32 %v2422, %v2422
      %v2679 = vmul.f32 %v2423, %v2423
      %v2680 = vmul.f32 %v2424, %v2424
      %v2681 = vmul.f32 %v2425, %v2425
      %v2682 = vmul.f32 %v2426, %v2426
      %v2683 = vmul.f32 %v2427, %v2427
      %v2684 = vmul.f32 %v2428, %v2428
      %v2685 = vmul.f32 %v2429, %v2429
      %v2686 = vmul.f32 %v2430, %v2430
      %v2687 = vmul.f32 %v2431, %v2431
      %v2688 = vmul.f32 %v2432, %v2432
      %v2689 = vmul.f32 %v2433, %v2433
      %v2690 = vmul.f32 %v2434, %v2434
      %v2691 = vmul.f32 %v2435, %v2435
      %v2692 = vmul.f32 %v2436, %v2436
      %v2693 = vmul.f32 %v2437, %v2437
      %v2694 = vmul.f32 %v2438, %v2438
      %v2695 = vmul.f32 %v2439, %v2439
      %v2696 = vmul.f32 %v2440, %v2440
      %v2697 = vmul.f32 %v2441, %v2441
      %v2698 = vmul.f32 %v2442, %v2442
      %v2699 = vmul.f32 %v2443, %v2443
      %v2700 = vmul.f32 %v2444, %v2444
      %v2701 = vmul.f32 %v2445, %v2445
      %v2702 = vmul.f32 %v2446, %v2446
      %v2703 = vmul.f32 %v2447, %v2447
      %v2704 = vmul.f32 %v2448, %v2448
      %v2705 = vmul.f32 %v2449, %v2449
      %v2706 = vmul.f32 %v2450, %v2450
      %v2707 = vmul.f32 %v2451, %v2451
      %v2708 = vmul.f32 %v2452, %v2452
      %v2709 = vmul.f32 %v2453, %v2453
      %v2710 = vmul.f32 %v2454, %v2454
      %v2711 = vmul.f32 %v2455, %v2455
      %v2712 = vmul.f32 %v2456, %v2456
      %v2713 = vmul.f32 %v2457, %v2457
      %v2714 = vmul.f32 %v2458, %v2458
      %v2715 = vmul.f32 %v2459, %v2459
      %v2716 = vmul.f32 %v2460, %v2460
      %v2717 = vmul.f32 %v2461, %v2461
      %v2718 = vmul.f32 %v2462, %v2462
      %v2719 = vmul.f32 %v2463, %v2463
      %v2720 = vmul.f32 %v2464, %v2464
      %v2721 = vmul.f32 %v2465, %v2465
      %v2722 = vmul.f32 %v2466, %v2466
      %v2723 = vmul.f32 %v2467, %v2467
      %v2724 = vmul.f32 %v2468, %v2468
      %v2725 = vmul.f32 %v2469, %v2469
      %v2726 = vmul.f32 %v2470, %v2470
      %v2727 = vmul.f32 %v2471, %v2471
      %v2728 = vmul.f32 %v2472, %v2472
      %v2729 = vmul.f32 %v2473, %v2473
      %v2730 = vmul.f32 %v2474, %v2474
      %v2731 = vmul.f32 %v2475, %v2475
      %v2732 = vmul.f32 %v2476, %v2476
      %v2733 = vmul.f32 %v2477, %v2477
      %v2734 = vmul.f32 %v2478, %v2478
      %v2735 = vmul.f32 %v2479, %v2479
      %v2736 = vmul.f32 %v2480, %v2480
      %v2737 = vmul.f32 %v2481, %v2481
      %v2738 = vmul.f32 %v2482, %v2482
      %v2739 = vmul.f32 %v2483, %v2483
      %v2740 = vmul.f32 %v2484, %v2484
      %v2741 = vadd.f32 %v2485, %v2486
      %v2742 = vadd.f32 %v2741, %v2487
      %v2743 = vadd.f32 %v2742, %v2488
      %v2744 = vadd.f32 %v2743, %v2489
      %v2745 = vadd.f32 %v2744, %v2490
      %v2746 = vadd.f32 %v2745, %v2491
      %v2747 = vadd.f32 %v2746, %v2492
      %v2748 = vadd.f32 %v2747, %v2493
      %v2749 = vadd.f32 %v2748, %v2494
      %v2750 = vadd.f32 %v2749, %v2495
      %v2751 = vadd.f32 %v2750, %v2496
      %v2752 = vadd.f32 %v2751, %v2497
      %v2753 = vadd.f32 %v2752, %v2498
      %v2754 = vadd.f32 %v2753, %v2499
      %v2755 = vadd.f32 %v2754, %v2500
      %v2756 = vadd.f32 %v2755, %v2501
      %v2757 = vadd.f32 %v2756, %v2502
      %v2758 = vadd.f32 %v2757, %v2503
      %v2759 = vadd.f32 %v2758, %v2504
      %v2760 = vadd.f32 %v2759, %v2505
      %v2761 = vadd.f32 %v2760, %v2506
      %v2762 = vadd.f32 %v2761, %v2507
      %v2763 = vadd.f32 %v2762, %v2508
      %v2764 = vadd.f32 %v2763, %v2509
      %v2765 = vadd.f32 %v2764, %v2510
      %v2766 = vadd.f32 %v2765, %v2511
      %v2767 = vadd.f32 %v2766, %v2512
      %v2768 = vadd.f32 %v2767, %v2513
      %v2769 = vadd.f32 %v2768, %v2514
      %v2770 = vadd.f32 %v2769, %v2515
      %v2771 = vadd.f32 %v2770, %v2516
      %v2772 = vadd.f32 %v2771, %v2517
      %v2773 = vadd.f32 %v2772, %v2518
      %v2774 = vadd.f32 %v2773, %v2519
      %v2775 = vadd.f32 %v2774, %v2520
      %v2776 = vadd.f32 %v2775, %v2521
      %v2777 = vadd.f32 %v2776, %v2522
      %v2778 = vadd.f32 %v2777, %v2523
      %v2779 = vadd.f32 %v2778, %v2524
      %v2780 = vadd.f32 %v2779, %v2525
      %v2781 = vadd.f32 %v2780, %v2526
      %v2782 = vadd.f32 %v2781, %v2527
      %v2783 = vadd.f32 %v2782, %v2528
      %v2784 = vadd.f32 %v2783, %v2529
      %v2785 = vadd.f32 %v2784, %v2530
      %v2786 = vadd.f32 %v2785, %v2531
      %v2787 = vadd.f32 %v2786, %v2532
      %v2788 = vadd.f32 %v2787, %v2533
      %v2789 = vadd.f32 %v2788, %v2534
      %v2790 = vadd.f32 %v2789, %v2535
      %v2791 = vadd.f32 %v2790, %v2536
      %v2792 = vadd.f32 %v2791, %v2537
      %v2793 = vadd.f32 %v2792, %v2538
      %v2794 = vadd.f32 %v2793, %v2539
      %v2795 = vadd.f32 %v2794, %v2540
      %v2796 = vadd.f32 %v2795, %v2541
      %v2797 = vadd.f32 %v2796, %v2542
      %v2798 = vadd.f32 %v2797, %v2543
      %v2799 = vadd.f32 %v2798, %v2544
      %v2800 = vadd.f32 %v2799, %v2545
      %v2801 = vadd.f32 %v2800, %v2546
      %v2802 = vadd.f32 %v2801, %v2547
      %v2803 = vadd.f32 %v2802, %v2548
      %v2804 = vadd.f32 %v2803, %v2549
      %v2805 = vadd.f32 %v2804, %v2550
      %v2806 = vadd.f32 %v2805, %v2551
      %v2807 = vadd.f32 %v2806, %v2552
      %v2808 = vadd.f32 %v2807, %v2553
      %v2809 = vadd.f32 %v2808, %v2554
      %v2810 = vadd.f32 %v2809, %v2555
      %v2811 = vadd.f32 %v2810, %v2556
      %v2812 = vadd.f32 %v2811, %v2557
      %v2813 = vadd.f32 %v2812, %v2558
      %v2814 = vadd.f32 %v2813, %v2559
      %v2815 = vadd.f32 %v2814, %v2560
      %v2816 = vadd.f32 %v2815, %v2561
      %v2817 = vadd.f32 %v2816, %v2562
      %v2818 = vadd.f32 %v2817, %v2563
      %v2819 = vadd.f32 %v2818, %v2564
      %v2820 = vadd.f32 %v2819, %v2565
      %v2821 = vadd.f32 %v2820, %v2566
      %v2822 = vadd.f32 %v2821, %v2567
      %v2823 = vadd.f32 %v2822, %v2568
      %v2824 = vadd.f32 %v2823, %v2569
      %v2825 = vadd.f32 %v2824, %v2570
      %v2826 = vadd.f32 %v2825, %v2571
      %v2827 = vadd.f32 %v2826, %v2572
      %v2828 = vadd.f32 %v2827, %v2573
      %v2829 = vadd.f32 %v2828, %v2574
      %v2830 = vadd.f32 %v2829, %v2575
      %v2831 = vadd.f32 %v2830, %v2576
      %v2832 = vadd.f32 %v2831, %v2577
      %v2833 = vadd.f32 %v2832, %v2578
      %v2834 = vadd.f32 %v2833, %v2579
      %v2835 = vadd.f32 %v2834, %v2580
      %v2836 = vadd.f32 %v2835, %v2581
      %v2837 = vadd.f32 %v2836, %v2582
      %v2838 = vadd.f32 %v2837, %v2583
      %v2839 = vadd.f32 %v2838, %v2584
      %v2840 = vadd.f32 %v2839, %v2585
      %v2841 = vadd.f32 %v2840, %v2586
      %v2842 = vadd.f32 %v2841, %v2587
      %v2843 = vadd.f32 %v2842, %v2588
      %v2844 = vadd.f32 %v2843, %v2589
      %v2845 = vadd.f32 %v2844, %v2590
      %v2846 = vadd.f32 %v2845, %v2591
      %v2847 = vadd.f32 %v2846, %v2592
      %v2848 = vadd.f32 %v2847, %v2593
      %v2849 = vadd.f32 %v2848, %v2594
      %v2850 = vadd.f32 %v2849, %v2595
      %v2851 = vadd.f32 %v2850, %v2596
      %v2852 = vadd.f32 %v2851, %v2597
      %v2853 = vadd.f32 %v2852, %v2598
      %v2854 = vadd.f32 %v2853, %v2599
      %v2855 = vadd.f32 %v2854, %v2600
      %v2856 = vadd.f32 %v2855, %v2601
      %v2857 = vadd.f32 %v2856, %v2602
      %v2858 = vadd.f32 %v2857, %v2603
      %v2859 = vadd.f32 %v2858, %v2604
      %v2860 = vadd.f32 %v2859, %v2605
      %v2861 = vadd.f32 %v2860, %v2606
      %v2862 = vadd.f32 %v2861, %v2607
      %v2863 = vadd.f32 %v2862, %v2608
      %v2864 = vadd.f32 %v2863, %v2609
      %v2865 = vadd.f32 %v2864, %v2610
      %v2866 = vadd.f32 %v2865, %v2611
      %v2867 = vadd.f32 %v2866, %v2612
      %v2868 = vadd.f32 %v2867, %v2613
      %v2869 = vadd.f32 %v2868, %v2614
      %v2870 = vadd.f32 %v2869, %v2615
      %v2871 = vadd.f32 %v2870, %v2616
      %v2872 = vadd.f32 %v2871, %v2617
      %v2873 = vadd.f32 %v2872, %v2618
      %v2874 = vadd.f32 %v2873, %v2619
      %v2875 = vadd.f32 %v2874, %v2620
      %v2876 = vadd.f32 %v2875, %v2621
      %v2877 = vadd.f32 %v2876, %v2622
      %v2878 = vadd.f32 %v2877, %v2623
      %v2879 = vadd.f32 %v2878, %v2624
      %v2880 = vadd.f32 %v2879, %v2625
      %v2881 = vadd.f32 %v2880, %v2626
      %v2882 = vadd.f32 %v2881, %v2627
      %v2883 = vadd.f32 %v2882, %v2628
      %v2884 = vadd.f32 %v2883, %v2629
      %v2885 = vadd.f32 %v2884, %v2630
      %v2886 = vadd.f32 %v2885, %v2631
      %v2887 = vadd.f32 %v2886, %v2632
      %v2888 = vadd.f32 %v2887, %v2633
      %v2889 = vadd.f32 %v2888, %v2634
      %v2890 = vadd.f32 %v2889, %v2635
      %v2891 = vadd.f32 %v2890, %v2636
      %v2892 = vadd.f32 %v2891, %v2637
      %v2893 = vadd.f32 %v2892, %v2638
      %v2894 = vadd.f32 %v2893, %v2639
      %v2895 = vadd.f32 %v2894, %v2640
      %v2896 = vadd.f32 %v2895, %v2641
      %v2897 = vadd.f32 %v2896, %v2642
      %v2898 = vadd.f32 %v2897, %v2643
      %v2899 = vadd.f32 %v2898, %v2644
      %v2900 = vadd.f32 %v2899, %v2645
      %v2901 = vadd.f32 %v2900, %v2646
      %v2902 = vadd.f32 %v2901, %v2647
      %v2903 = vadd.f32 %v2902, %v2648
      %v2904 = vadd.f32 %v2903, %v2649
      %v2905 = vadd.f32 %v2904, %v2650
      %v2906 = vadd.f32 %v2905, %v2651
      %v2907 = vadd.f32 %v2906, %v2652
      %v2908 = vadd.f32 %v2907, %v2653
      %v2909 = vadd.f32 %v2908, %v2654
      %v2910 = vadd.f32 %v2909, %v2655
      %v2911 = vadd.f32 %v2910, %v2656
      %v2912 = vadd.f32 %v2911, %v2657
      %v2913 = vadd.f32 %v2912, %v2658
      %v2914 = vadd.f32 %v2913, %v2659
      %v2915 = vadd.f32 %v2914, %v2660
      %v2916 = vadd.f32 %v2915, %v2661
      %v2917 = vadd.f32 %v2916, %v2662
      %v2918 = vadd.f32 %v2917, %v2663
      %v2919 = vadd.f32 %v2918, %v2664
      %v2920 = vadd.f32 %v2919, %v2665
      %v2921 = vadd.f32 %v2920, %v2666
      %v2922 = vadd.f32 %v2921, %v2667
      %v2923 = vadd.f32 %v2922, %v2668
      %v2924 = vadd.f32 %v2923, %v2669
      %v2925 = vadd.f32 %v2924, %v2670
      %v2926 = vadd.f32 %v2925, %v2671
      %v2927 = vadd.f32 %v2926, %v2672
      %v2928 = vadd.f32 %v2927, %v2673
      %v2929 = vadd.f32 %v2928, %v2674
      %v2930 = vadd.f32 %v2929, %v2675
      %v2931 = vadd.f32 %v2930, %v2676
      %v2932 = vadd.f32 %v2931, %v2677
      %v2933 = vadd.f32 %v2932, %v2678
      %v2934 = vadd.f32 %v2933, %v2679
      %v2935 = vadd.f32 %v2934, %v2680
      %v2936 = vadd.f32 %v2935, %v2681
      %v2937 = vadd.f32 %v2936, %v2682
      %v2938 = vadd.f32 %v2937, %v2683
      %v2939 = vadd.f32 %v2938, %v2684
      %v2940 = vadd.f32 %v2939, %v2685
      %v2941 = vadd.f32 %v2940, %v2686
      %v2942 = vadd.f32 %v2941, %v2687
      %v2943 = vadd.f32 %v2942, %v2688
      %v2944 = vadd.f32 %v2943, %v2689
      %v2945 = vadd.f32 %v2944, %v2690
      %v2946 = vadd.f32 %v2945, %v2691
      %v2947 = vadd.f32 %v2946, %v2692
      %v2948 = vadd.f32 %v2947, %v2693
      %v2949 = vadd.f32 %v2948, %v2694
      %v2950 = vadd.f32 %v2949, %v2695
      %v2951 = vadd.f32 %v2950, %v2696
      %v2952 = vadd.f32 %v2951, %v2697
      %v2953 = vadd.f32 %v2952, %v2698
      %v2954 = vadd.f32 %v2953, %v2699
      %v2955 = vadd.f32 %v2954, %v2700
      %v2956 = vadd.f32 %v2955, %v2701
      %v2957 = vadd.f32 %v2956, %v2702
      %v2958 = vadd.f32 %v2957, %v2703
      %v2959 = vadd.f32 %v2958, %v2704
      %v2960 = vadd.f32 %v2959, %v2705
      %v2961 = vadd.f32 %v2960, %v2706
      %v2962 = vadd.f32 %v2961, %v2707
      %v2963 = vadd.f32 %v2962, %v2708
      %v2964 = vadd.f32 %v2963, %v2709
      %v2965 = vadd.f32 %v2964, %v2710
      %v2966 = vadd.f32 %v2965, %v2711
      %v2967 = vadd.f32 %v2966, %v2712
      %v2968 = vadd.f32 %v2967, %v2713
      %v2969 = vadd.f32 %v2968, %v2714
      %v2970 = vadd.f32 %v2969, %v2715
      %v2971 = vadd.f32 %v2970, %v2716
      %v2972 = vadd.f32 %v2971, %v2717
      %v2973 = vadd.f32 %v2972, %v2718
      %v2974 = vadd.f32 %v2973, %v2719
      %v2975 = vadd.f32 %v2974, %v2720
      %v2976 = vadd.f32 %v2975, %v2721
      %v2977 = vadd.f32 %v2976, %v2722
      %v2978 = vadd.f32 %v2977, %v2723
      %v2979 = vadd.f32 %v2978, %v2724
      %v2980 = vadd.f32 %v2979, %v2725
      %v2981 = vadd.f32 %v2980, %v2726
      %v2982 = vadd.f32 %v2981, %v2727
      %v2983 = vadd.f32 %v2982, %v2728
      %v2984 = vadd.f32 %v2983, %v2729
      %v2985 = vadd.f32 %v2984, %v2730
      %v2986 = vadd.f32 %v2985, %v2731
      %v2987 = vadd.f32 %v2986, %v2732
      %v2988 = vadd.f32 %v2987, %v2733
      %v2989 = vadd.f32 %v2988, %v2734
      %v2990 = vadd.f32 %v2989, %v2735
      %v2991 = vadd.f32 %v2990, %v2736
      %v2992 = vadd.f32 %v2991, %v2737
      %v2993 = vadd.f32 %v2992, %v2738
      %v2994 = vadd.f32 %v2993, %v2739
      %v2995 = vadd.f32 %v2994, %v2740
      %v2996 = vrot.slane %v2995, 4
      %v2997 = vadd.f32 %v2995, %v2996
      %v2998 = vrot.slane %v2997, 2
      %v2999 = vadd.f32 %v2997, %v2998
      %v3000 = vrot.slane %v2999, 1
      %v3001 = vadd.f32 %v2999, %v3000
      %v3002 = vmul.f32 %v3001, %v2227
      %v3003 = vadd.f32 %v3002, 1e-05
      %v3004 = vrsqrt.pop %v3003
      %v3005 = vmul.f32 %v3004, %v3003
      %v3006 = vmul.f32 %v3005, %v3004
      %v3007 = vmul.f32 0.5, %v3006
      %v3008 = vsub.f32 1.5, %v3007
      %v3009 = vmul.f32 %v3004, %v3008
      %vm3010 = vweird.f32 %v3003
      %vm3011 = vweird.f32 %v3004
      %vm3012 = vmor %vm3010, %vm3011
      %v3013 = vsel %vm3012, %v3004, %v3009
      %v3014 = vmul.f32 %v2229, %v3013
      %v3015 = vmul.f32 %v2230, %v3013
      %v3016 = vmul.f32 %v2231, %v3013
      %v3017 = vmul.f32 %v2232, %v3013
      %v3018 = vmul.f32 %v2233, %v3013
      %v3019 = vmul.f32 %v2234, %v3013
      %v3020 = vmul.f32 %v2235, %v3013
      %v3021 = vmul.f32 %v2236, %v3013
      %v3022 = vmul.f32 %v2237, %v3013
      %v3023 = vmul.f32 %v2238, %v3013
      %v3024 = vmul.f32 %v2239, %v3013
      %v3025 = vmul.f32 %v2240, %v3013
      %v3026 = vmul.f32 %v2241, %v3013
      %v3027 = vmul.f32 %v2242, %v3013
      %v3028 = vmul.f32 %v2243, %v3013
      %v3029 = vmul.f32 %v2244, %v3013
      %v3030 = vmul.f32 %v2245, %v3013
      %v3031 = vmul.f32 %v2246, %v3013
      %v3032 = vmul.f32 %v2247, %v3013
      %v3033 = vmul.f32 %v2248, %v3013
      %v3034 = vmul.f32 %v2249, %v3013
      %v3035 = vmul.f32 %v2250, %v3013
      %v3036 = vmul.f32 %v2251, %v3013
      %v3037 = vmul.f32 %v2252, %v3013
      %v3038 = vmul.f32 %v2253, %v3013
      %v3039 = vmul.f32 %v2254, %v3013
      %v3040 = vmul.f32 %v2255, %v3013
      %v3041 = vmul.f32 %v2256, %v3013
      %v3042 = vmul.f32 %v2257, %v3013
      %v3043 = vmul.f32 %v2258, %v3013
      %v3044 = vmul.f32 %v2259, %v3013
      %v3045 = vmul.f32 %v2260, %v3013
      %v3046 = vmul.f32 %v2261, %v3013
      %v3047 = vmul.f32 %v2262, %v3013
      %v3048 = vmul.f32 %v2263, %v3013
      %v3049 = vmul.f32 %v2264, %v3013
      %v3050 = vmul.f32 %v2265, %v3013
      %v3051 = vmul.f32 %v2266, %v3013
      %v3052 = vmul.f32 %v2267, %v3013
      %v3053 = vmul.f32 %v2268, %v3013
      %v3054 = vmul.f32 %v2269, %v3013
      %v3055 = vmul.f32 %v2270, %v3013
      %v3056 = vmul.f32 %v2271, %v3013
      %v3057 = vmul.f32 %v2272, %v3013
      %v3058 = vmul.f32 %v2273, %v3013
      %v3059 = vmul.f32 %v2274, %v3013
      %v3060 = vmul.f32 %v2275, %v3013
      %v3061 = vmul.f32 %v2276, %v3013
      %v3062 = vmul.f32 %v2277, %v3013
      %v3063 = vmul.f32 %v2278, %v3013
      %v3064 = vmul.f32 %v2279, %v3013
      %v3065 = vmul.f32 %v2280, %v3013
      %v3066 = vmul.f32 %v2281, %v3013
      %v3067 = vmul.f32 %v2282, %v3013
      %v3068 = vmul.f32 %v2283, %v3013
      %v3069 = vmul.f32 %v2284, %v3013
      %v3070 = vmul.f32 %v2285, %v3013
      %v3071 = vmul.f32 %v2286, %v3013
      %v3072 = vmul.f32 %v2287, %v3013
      %v3073 = vmul.f32 %v2288, %v3013
      %v3074 = vmul.f32 %v2289, %v3013
      %v3075 = vmul.f32 %v2290, %v3013
      %v3076 = vmul.f32 %v2291, %v3013
      %v3077 = vmul.f32 %v2292, %v3013
      %v3078 = vmul.f32 %v2293, %v3013
      %v3079 = vmul.f32 %v2294, %v3013
      %v3080 = vmul.f32 %v2295, %v3013
      %v3081 = vmul.f32 %v2296, %v3013
      %v3082 = vmul.f32 %v2297, %v3013
      %v3083 = vmul.f32 %v2298, %v3013
      %v3084 = vmul.f32 %v2299, %v3013
      %v3085 = vmul.f32 %v2300, %v3013
      %v3086 = vmul.f32 %v2301, %v3013
      %v3087 = vmul.f32 %v2302, %v3013
      %v3088 = vmul.f32 %v2303, %v3013
      %v3089 = vmul.f32 %v2304, %v3013
      %v3090 = vmul.f32 %v2305, %v3013
      %v3091 = vmul.f32 %v2306, %v3013
      %v3092 = vmul.f32 %v2307, %v3013
      %v3093 = vmul.f32 %v2308, %v3013
      %v3094 = vmul.f32 %v2309, %v3013
      %v3095 = vmul.f32 %v2310, %v3013
      %v3096 = vmul.f32 %v2311, %v3013
      %v3097 = vmul.f32 %v2312, %v3013
      %v3098 = vmul.f32 %v2313, %v3013
      %v3099 = vmul.f32 %v2314, %v3013
      %v3100 = vmul.f32 %v2315, %v3013
      %v3101 = vmul.f32 %v2316, %v3013
      %v3102 = vmul.f32 %v2317, %v3013
      %v3103 = vmul.f32 %v2318, %v3013
      %v3104 = vmul.f32 %v2319, %v3013
      %v3105 = vmul.f32 %v2320, %v3013
      %v3106 = vmul.f32 %v2321, %v3013
      %v3107 = vmul.f32 %v2322, %v3013
      %v3108 = vmul.f32 %v2323, %v3013
      %v3109 = vmul.f32 %v2324, %v3013
      %v3110 = vmul.f32 %v2325, %v3013
      %v3111 = vmul.f32 %v2326, %v3013
      %v3112 = vmul.f32 %v2327, %v3013
      %v3113 = vmul.f32 %v2328, %v3013
      %v3114 = vmul.f32 %v2329, %v3013
      %v3115 = vmul.f32 %v2330, %v3013
      %v3116 = vmul.f32 %v2331, %v3013
      %v3117 = vmul.f32 %v2332, %v3013
      %v3118 = vmul.f32 %v2333, %v3013
      %v3119 = vmul.f32 %v2334, %v3013
      %v3120 = vmul.f32 %v2335, %v3013
      %v3121 = vmul.f32 %v2336, %v3013
      %v3122 = vmul.f32 %v2337, %v3013
      %v3123 = vmul.f32 %v2338, %v3013
      %v3124 = vmul.f32 %v2339, %v3013
      %v3125 = vmul.f32 %v2340, %v3013
      %v3126 = vmul.f32 %v2341, %v3013
      %v3127 = vmul.f32 %v2342, %v3013
      %v3128 = vmul.f32 %v2343, %v3013
      %v3129 = vmul.f32 %v2344, %v3013
      %v3130 = vmul.f32 %v2345, %v3013
      %v3131 = vmul.f32 %v2346, %v3013
      %v3132 = vmul.f32 %v2347, %v3013
      %v3133 = vmul.f32 %v2348, %v3013
      %v3134 = vmul.f32 %v2349, %v3013
      %v3135 = vmul.f32 %v2350, %v3013
      %v3136 = vmul.f32 %v2351, %v3013
      %v3137 = vmul.f32 %v2352, %v3013
      %v3138 = vmul.f32 %v2353, %v3013
      %v3139 = vmul.f32 %v2354, %v3013
      %v3140 = vmul.f32 %v2355, %v3013
      %v3141 = vmul.f32 %v2356, %v3013
      %v3142 = vmul.f32 %v2357, %v3013
      %v3143 = vmul.f32 %v2358, %v3013
      %v3144 = vmul.f32 %v2359, %v3013
      %v3145 = vmul.f32 %v2360, %v3013
      %v3146 = vmul.f32 %v2361, %v3013
      %v3147 = vmul.f32 %v2362, %v3013
      %v3148 = vmul.f32 %v2363, %v3013
      %v3149 = vmul.f32 %v2364, %v3013
      %v3150 = vmul.f32 %v2365, %v3013
      %v3151 = vmul.f32 %v2366, %v3013
      %v3152 = vmul.f32 %v2367, %v3013
      %v3153 = vmul.f32 %v2368, %v3013
      %v3154 = vmul.f32 %v2369, %v3013
      %v3155 = vmul.f32 %v2370, %v3013
      %v3156 = vmul.f32 %v2371, %v3013
      %v3157 = vmul.f32 %v2372, %v3013
      %v3158 = vmul.f32 %v2373, %v3013
      %v3159 = vmul.f32 %v2374, %v3013
      %v3160 = vmul.f32 %v2375, %v3013
      %v3161 = vmul.f32 %v2376, %v3013
      %v3162 = vmul.f32 %v2377, %v3013
      %v3163 = vmul.f32 %v2378, %v3013
      %v3164 = vmul.f32 %v2379, %v3013
      %v3165 = vmul.f32 %v2380, %v3013
      %v3166 = vmul.f32 %v2381, %v3013
      %v3167 = vmul.f32 %v2382, %v3013
      %v3168 = vmul.f32 %v2383, %v3013
      %v3169 = vmul.f32 %v2384, %v3013
      %v3170 = vmul.f32 %v2385, %v3013
      %v3171 = vmul.f32 %v2386, %v3013
      %v3172 = vmul.f32 %v2387, %v3013
      %v3173 = vmul.f32 %v2388, %v3013
      %v3174 = vmul.f32 %v2389, %v3013
      %v3175 = vmul.f32 %v2390, %v3013
      %v3176 = vmul.f32 %v2391, %v3013
      %v3177 = vmul.f32 %v2392, %v3013
      %v3178 = vmul.f32 %v2393, %v3013
      %v3179 = vmul.f32 %v2394, %v3013
      %v3180 = vmul.f32 %v2395, %v3013
      %v3181 = vmul.f32 %v2396, %v3013
      %v3182 = vmul.f32 %v2397, %v3013
      %v3183 = vmul.f32 %v2398, %v3013
      %v3184 = vmul.f32 %v2399, %v3013
      %v3185 = vmul.f32 %v2400, %v3013
      %v3186 = vmul.f32 %v2401, %v3013
      %v3187 = vmul.f32 %v2402, %v3013
      %v3188 = vmul.f32 %v2403, %v3013
      %v3189 = vmul.f32 %v2404, %v3013
      %v3190 = vmul.f32 %v2405, %v3013
      %v3191 = vmul.f32 %v2406, %v3013
      %v3192 = vmul.f32 %v2407, %v3013
      %v3193 = vmul.f32 %v2408, %v3013
      %v3194 = vmul.f32 %v2409, %v3013
      %v3195 = vmul.f32 %v2410, %v3013
      %v3196 = vmul.f32 %v2411, %v3013
      %v3197 = vmul.f32 %v2412, %v3013
      %v3198 = vmul.f32 %v2413, %v3013
      %v3199 = vmul.f32 %v2414, %v3013
      %v3200 = vmul.f32 %v2415, %v3013
      %v3201 = vmul.f32 %v2416, %v3013
      %v3202 = vmul.f32 %v2417, %v3013
      %v3203 = vmul.f32 %v2418, %v3013
      %v3204 = vmul.f32 %v2419, %v3013
      %v3205 = vmul.f32 %v2420, %v3013
      %v3206 = vmul.f32 %v2421, %v3013
      %v3207 = vmul.f32 %v2422, %v3013
      %v3208 = vmul.f32 %v2423, %v3013
      %v3209 = vmul.f32 %v2424, %v3013
      %v3210 = vmul.f32 %v2425, %v3013
      %v3211 = vmul.f32 %v2426, %v3013
      %v3212 = vmul.f32 %v2427, %v3013
      %v3213 = vmul.f32 %v2428, %v3013
      %v3214 = vmul.f32 %v2429, %v3013
      %v3215 = vmul.f32 %v2430, %v3013
      %v3216 = vmul.f32 %v2431, %v3013
      %v3217 = vmul.f32 %v2432, %v3013
      %v3218 = vmul.f32 %v2433, %v3013
      %v3219 = vmul.f32 %v2434, %v3013
      %v3220 = vmul.f32 %v2435, %v3013
      %v3221 = vmul.f32 %v2436, %v3013
      %v3222 = vmul.f32 %v2437, %v3013
      %v3223 = vmul.f32 %v2438, %v3013
      %v3224 = vmul.f32 %v2439, %v3013
      %v3225 = vmul.f32 %v2440, %v3013
      %v3226 = vmul.f32 %v2441, %v3013
      %v3227 = vmul.f32 %v2442, %v3013
      %v3228 = vmul.f32 %v2443, %v3013
      %v3229 = vmul.f32 %v2444, %v3013
      %v3230 = vmul.f32 %v2445, %v3013
      %v3231 = vmul.f32 %v2446, %v3013
      %v3232 = vmul.f32 %v2447, %v3013
      %v3233 = vmul.f32 %v2448, %v3013
      %v3234 = vmul.f32 %v2449, %v3013
      %v3235 = vmul.f32 %v2450, %v3013
      %v3236 = vmul.f32 %v2451, %v3013
      %v3237 = vmul.f32 %v2452, %v3013
      %v3238 = vmul.f32 %v2453, %v3013
      %v3239 = vmul.f32 %v2454, %v3013
      %v3240 = vmul.f32 %v2455, %v3013
      %v3241 = vmul.f32 %v2456, %v3013
      %v3242 = vmul.f32 %v2457, %v3013
      %v3243 = vmul.f32 %v2458, %v3013
      %v3244 = vmul.f32 %v2459, %v3013
      %v3245 = vmul.f32 %v2460, %v3013
      %v3246 = vmul.f32 %v2461, %v3013
      %v3247 = vmul.f32 %v2462, %v3013
      %v3248 = vmul.f32 %v2463, %v3013
      %v3249 = vmul.f32 %v2464, %v3013
      %v3250 = vmul.f32 %v2465, %v3013
      %v3251 = vmul.f32 %v2466, %v3013
      %v3252 = vmul.f32 %v2467, %v3013
      %v3253 = vmul.f32 %v2468, %v3013
      %v3254 = vmul.f32 %v2469, %v3013
      %v3255 = vmul.f32 %v2470, %v3013
      %v3256 = vmul.f32 %v2471, %v3013
      %v3257 = vmul.f32 %v2472, %v3013
      %v3258 = vmul.f32 %v2473, %v3013
      %v3259 = vmul.f32 %v2474, %v3013
      %v3260 = vmul.f32 %v2475, %v3013
      %v3261 = vmul.f32 %v2476, %v3013
      %v3262 = vmul.f32 %v2477, %v3013
      %v3263 = vmul.f32 %v2478, %v3013
      %v3264 = vmul.f32 %v2479, %v3013
      %v3265 = vmul.f32 %v2480, %v3013
      %v3266 = vmul.f32 %v2481, %v3013
      %v3267 = vmul.f32 %v2482, %v3013
      %v3268 = vmul.f32 %v2483, %v3013
      %v3269 = vmul.f32 %v2484, %v3013
      %v3270 = vld [vmem:[%s2] sm:$0x1]
      %v3272 = vperm.slane %v3270, 0
      %v3274 = vmul.f32 %v3014, %v3272
      %v3275 = vmul.f32 %v3015, %v3272
      %v3276 = vmul.f32 %v3016, %v3272
      %v3277 = vmul.f32 %v3017, %v3272
      %v3278 = vmul.f32 %v3018, %v3272
      %v3279 = vmul.f32 %v3019, %v3272
      %v3280 = vmul.f32 %v3020, %v3272
      %v3281 = vmul.f32 %v3021, %v3272
      %v3282 = vmul.f32 %v3022, %v3272
      %v3283 = vmul.f32 %v3023, %v3272
      %v3284 = vmul.f32 %v3024, %v3272
      %v3285 = vmul.f32 %v3025, %v3272
      %v3286 = vmul.f32 %v3026, %v3272
      %v3287 = vmul.f32 %v3027, %v3272
      %v3288 = vmul.f32 %v3028, %v3272
      %v3289 = vmul.f32 %v3029, %v3272
      %v3290 = vmul.f32 %v3030, %v3272
      %v3291 = vmul.f32 %v3031, %v3272
      %v3292 = vmul.f32 %v3032, %v3272
      %v3293 = vmul.f32 %v3033, %v3272
      %v3294 = vmul.f32 %v3034, %v3272
      %v3295 = vmul.f32 %v3035, %v3272
      %v3296 = vmul.f32 %v3036, %v3272
      %v3297 = vmul.f32 %v3037, %v3272
      %v3298 = vmul.f32 %v3038, %v3272
      %v3299 = vmul.f32 %v3039, %v3272
      %v3300 = vmul.f32 %v3040, %v3272
      %v3301 = vmul.f32 %v3041, %v3272
      %v3302 = vmul.f32 %v3042, %v3272
      %v3303 = vmul.f32 %v3043, %v3272
      %v3304 = vmul.f32 %v3044, %v3272
      %v3305 = vmul.f32 %v3045, %v3272
      %v3306 = vmul.f32 %v3046, %v3272
      %v3307 = vmul.f32 %v3047, %v3272
      %v3308 = vmul.f32 %v3048, %v3272
      %v3309 = vmul.f32 %v3049, %v3272
      %v3310 = vmul.f32 %v3050, %v3272
      %v3311 = vmul.f32 %v3051, %v3272
      %v3312 = vmul.f32 %v3052, %v3272
      %v3313 = vmul.f32 %v3053, %v3272
      %v3314 = vmul.f32 %v3054, %v3272
      %v3315 = vmul.f32 %v3055, %v3272
      %v3316 = vmul.f32 %v3056, %v3272
      %v3317 = vmul.f32 %v3057, %v3272
      %v3318 = vmul.f32 %v3058, %v3272
      %v3319 = vmul.f32 %v3059, %v3272
      %v3320 = vmul.f32 %v3060, %v3272
      %v3321 = vmul.f32 %v3061, %v3272
      %v3322 = vmul.f32 %v3062, %v3272
      %v3323 = vmul.f32 %v3063, %v3272
      %v3324 = vmul.f32 %v3064, %v3272
      %v3325 = vmul.f32 %v3065, %v3272
      %v3326 = vmul.f32 %v3066, %v3272
      %v3327 = vmul.f32 %v3067, %v3272
      %v3328 = vmul.f32 %v3068, %v3272
      %v3329 = vmul.f32 %v3069, %v3272
      %v3330 = vmul.f32 %v3070, %v3272
      %v3331 = vmul.f32 %v3071, %v3272
      %v3332 = vmul.f32 %v3072, %v3272
      %v3333 = vmul.f32 %v3073, %v3272
      %v3334 = vmul.f32 %v3074, %v3272
      %v3335 = vmul.f32 %v3075, %v3272
      %v3336 = vmul.f32 %v3076, %v3272
      %v3337 = vmul.f32 %v3077, %v3272
      %v3338 = vmul.f32 %v3078, %v3272
      %v3339 = vmul.f32 %v3079, %v3272
      %v3340 = vmul.f32 %v3080, %v3272
      %v3341 = vmul.f32 %v3081, %v3272
      %v3342 = vmul.f32 %v3082, %v3272
      %v3343 = vmul.f32 %v3083, %v3272
      %v3344 = vmul.f32 %v3084, %v3272
      %v3345 = vmul.f32 %v3085, %v3272
      %v3346 = vmul.f32 %v3086, %v3272
      %v3347 = vmul.f32 %v3087, %v3272
      %v3348 = vmul.f32 %v3088, %v3272
      %v3349 = vmul.f32 %v3089, %v3272
      %v3350 = vmul.f32 %v3090, %v3272
      %v3351 = vmul.f32 %v3091, %v3272
      %v3352 = vmul.f32 %v3092, %v3272
      %v3353 = vmul.f32 %v3093, %v3272
      %v3354 = vmul.f32 %v3094, %v3272
      %v3355 = vmul.f32 %v3095, %v3272
      %v3356 = vmul.f32 %v3096, %v3272
      %v3357 = vmul.f32 %v3097, %v3272
      %v3358 = vmul.f32 %v3098, %v3272
      %v3359 = vmul.f32 %v3099, %v3272
      %v3360 = vmul.f32 %v3100, %v3272
      %v3361 = vmul.f32 %v3101, %v3272
      %v3362 = vmul.f32 %v3102, %v3272
      %v3363 = vmul.f32 %v3103, %v3272
      %v3364 = vmul.f32 %v3104, %v3272
      %v3365 = vmul.f32 %v3105, %v3272
      %v3366 = vmul.f32 %v3106, %v3272
      %v3367 = vmul.f32 %v3107, %v3272
      %v3368 = vmul.f32 %v3108, %v3272
      %v3369 = vmul.f32 %v3109, %v3272
      %v3370 = vmul.f32 %v3110, %v3272
      %v3371 = vmul.f32 %v3111, %v3272
      %v3372 = vmul.f32 %v3112, %v3272
      %v3373 = vmul.f32 %v3113, %v3272
      %v3374 = vmul.f32 %v3114, %v3272
      %v3375 = vmul.f32 %v3115, %v3272
      %v3376 = vmul.f32 %v3116, %v3272
      %v3377 = vmul.f32 %v3117, %v3272
      %v3378 = vmul.f32 %v3118, %v3272
      %v3379 = vmul.f32 %v3119, %v3272
      %v3380 = vmul.f32 %v3120, %v3272
      %v3381 = vmul.f32 %v3121, %v3272
      %v3382 = vmul.f32 %v3122, %v3272
      %v3383 = vmul.f32 %v3123, %v3272
      %v3384 = vmul.f32 %v3124, %v3272
      %v3385 = vmul.f32 %v3125, %v3272
      %v3386 = vmul.f32 %v3126, %v3272
      %v3387 = vmul.f32 %v3127, %v3272
      %v3388 = vmul.f32 %v3128, %v3272
      %v3389 = vmul.f32 %v3129, %v3272
      %v3390 = vmul.f32 %v3130, %v3272
      %v3391 = vmul.f32 %v3131, %v3272
      %v3392 = vmul.f32 %v3132, %v3272
      %v3393 = vmul.f32 %v3133, %v3272
      %v3394 = vmul.f32 %v3134, %v3272
      %v3395 = vmul.f32 %v3135, %v3272
      %v3396 = vmul.f32 %v3136, %v3272
      %v3397 = vmul.f32 %v3137, %v3272
      %v3398 = vmul.f32 %v3138, %v3272
      %v3399 = vmul.f32 %v3139, %v3272
      %v3400 = vmul.f32 %v3140, %v3272
      %v3401 = vmul.f32 %v3141, %v3272
      %v3402 = vmul.f32 %v3142, %v3272
      %v3403 = vmul.f32 %v3143, %v3272
      %v3404 = vmul.f32 %v3144, %v3272
      %v3405 = vmul.f32 %v3145, %v3272
      %v3406 = vmul.f32 %v3146, %v3272
      %v3407 = vmul.f32 %v3147, %v3272
      %v3408 = vmul.f32 %v3148, %v3272
      %v3409 = vmul.f32 %v3149, %v3272
      %v3410 = vmul.f32 %v3150, %v3272
      %v3411 = vmul.f32 %v3151, %v3272
      %v3412 = vmul.f32 %v3152, %v3272
      %v3413 = vmul.f32 %v3153, %v3272
      %v3414 = vmul.f32 %v3154, %v3272
      %v3415 = vmul.f32 %v3155, %v3272
      %v3416 = vmul.f32 %v3156, %v3272
      %v3417 = vmul.f32 %v3157, %v3272
      %v3418 = vmul.f32 %v3158, %v3272
      %v3419 = vmul.f32 %v3159, %v3272
      %v3420 = vmul.f32 %v3160, %v3272
      %v3421 = vmul.f32 %v3161, %v3272
      %v3422 = vmul.f32 %v3162, %v3272
      %v3423 = vmul.f32 %v3163, %v3272
      %v3424 = vmul.f32 %v3164, %v3272
      %v3425 = vmul.f32 %v3165, %v3272
      %v3426 = vmul.f32 %v3166, %v3272
      %v3427 = vmul.f32 %v3167, %v3272
      %v3428 = vmul.f32 %v3168, %v3272
      %v3429 = vmul.f32 %v3169, %v3272
      %v3430 = vmul.f32 %v3170, %v3272
      %v3431 = vmul.f32 %v3171, %v3272
      %v3432 = vmul.f32 %v3172, %v3272
      %v3433 = vmul.f32 %v3173, %v3272
      %v3434 = vmul.f32 %v3174, %v3272
      %v3435 = vmul.f32 %v3175, %v3272
      %v3436 = vmul.f32 %v3176, %v3272
      %v3437 = vmul.f32 %v3177, %v3272
      %v3438 = vmul.f32 %v3178, %v3272
      %v3439 = vmul.f32 %v3179, %v3272
      %v3440 = vmul.f32 %v3180, %v3272
      %v3441 = vmul.f32 %v3181, %v3272
      %v3442 = vmul.f32 %v3182, %v3272
      %v3443 = vmul.f32 %v3183, %v3272
      %v3444 = vmul.f32 %v3184, %v3272
      %v3445 = vmul.f32 %v3185, %v3272
      %v3446 = vmul.f32 %v3186, %v3272
      %v3447 = vmul.f32 %v3187, %v3272
      %v3448 = vmul.f32 %v3188, %v3272
      %v3449 = vmul.f32 %v3189, %v3272
      %v3450 = vmul.f32 %v3190, %v3272
      %v3451 = vmul.f32 %v3191, %v3272
      %v3452 = vmul.f32 %v3192, %v3272
      %v3453 = vmul.f32 %v3193, %v3272
      %v3454 = vmul.f32 %v3194, %v3272
      %v3455 = vmul.f32 %v3195, %v3272
      %v3456 = vmul.f32 %v3196, %v3272
      %v3457 = vmul.f32 %v3197, %v3272
      %v3458 = vmul.f32 %v3198, %v3272
      %v3459 = vmul.f32 %v3199, %v3272
      %v3460 = vmul.f32 %v3200, %v3272
      %v3461 = vmul.f32 %v3201, %v3272
      %v3462 = vmul.f32 %v3202, %v3272
      %v3463 = vmul.f32 %v3203, %v3272
      %v3464 = vmul.f32 %v3204, %v3272
      %v3465 = vmul.f32 %v3205, %v3272
      %v3466 = vmul.f32 %v3206, %v3272
      %v3467 = vmul.f32 %v3207, %v3272
      %v3468 = vmul.f32 %v3208, %v3272
      %v3469 = vmul.f32 %v3209, %v3272
      %v3470 = vmul.f32 %v3210, %v3272
      %v3471 = vmul.f32 %v3211, %v3272
      %v3472 = vmul.f32 %v3212, %v3272
      %v3473 = vmul.f32 %v3213, %v3272
      %v3474 = vmul.f32 %v3214, %v3272
      %v3475 = vmul.f32 %v3215, %v3272
      %v3476 = vmul.f32 %v3216, %v3272
      %v3477 = vmul.f32 %v3217, %v3272
      %v3478 = vmul.f32 %v3218, %v3272
      %v3479 = vmul.f32 %v3219, %v3272
      %v3480 = vmul.f32 %v3220, %v3272
      %v3481 = vmul.f32 %v3221, %v3272
      %v3482 = vmul.f32 %v3222, %v3272
      %v3483 = vmul.f32 %v3223, %v3272
      %v3484 = vmul.f32 %v3224, %v3272
      %v3485 = vmul.f32 %v3225, %v3272
      %v3486 = vmul.f32 %v3226, %v3272
      %v3487 = vmul.f32 %v3227, %v3272
      %v3488 = vmul.f32 %v3228, %v3272
      %v3489 = vmul.f32 %v3229, %v3272
      %v3490 = vmul.f32 %v3230, %v3272
      %v3491 = vmul.f32 %v3231, %v3272
      %v3492 = vmul.f32 %v3232, %v3272
      %v3493 = vmul.f32 %v3233, %v3272
      %v3494 = vmul.f32 %v3234, %v3272
      %v3495 = vmul.f32 %v3235, %v3272
      %v3496 = vmul.f32 %v3236, %v3272
      %v3497 = vmul.f32 %v3237, %v3272
      %v3498 = vmul.f32 %v3238, %v3272
      %v3499 = vmul.f32 %v3239, %v3272
      %v3500 = vmul.f32 %v3240, %v3272
      %v3501 = vmul.f32 %v3241, %v3272
      %v3502 = vmul.f32 %v3242, %v3272
      %v3503 = vmul.f32 %v3243, %v3272
      %v3504 = vmul.f32 %v3244, %v3272
      %v3505 = vmul.f32 %v3245, %v3272
      %v3506 = vmul.f32 %v3246, %v3272
      %v3507 = vmul.f32 %v3247, %v3272
      %v3508 = vmul.f32 %v3248, %v3272
      %v3509 = vmul.f32 %v3249, %v3272
      %v3510 = vmul.f32 %v3250, %v3272
      %v3511 = vmul.f32 %v3251, %v3272
      %v3512 = vmul.f32 %v3252, %v3272
      %v3513 = vmul.f32 %v3253, %v3272
      %v3514 = vmul.f32 %v3254, %v3272
      %v3515 = vmul.f32 %v3255, %v3272
      %v3516 = vmul.f32 %v3256, %v3272
      %v3517 = vmul.f32 %v3257, %v3272
      %v3518 = vmul.f32 %v3258, %v3272
      %v3519 = vmul.f32 %v3259, %v3272
      %v3520 = vmul.f32 %v3260, %v3272
      %v3521 = vmul.f32 %v3261, %v3272
      %v3522 = vmul.f32 %v3262, %v3272
      %v3523 = vmul.f32 %v3263, %v3272
      %v3524 = vmul.f32 %v3264, %v3272
      %v3525 = vmul.f32 %v3265, %v3272
      %v3526 = vmul.f32 %v3266, %v3272
      %v3527 = vmul.f32 %v3267, %v3272
      %v3528 = vmul.f32 %v3268, %v3272
      %v3529 = vmul.f32 %v3269, %v3272
      %v3530 = vld [vmem:[%s3] sm:$0x1]
      %v3532 = vperm.slane %v3530, 0
      %v3534 = vadd.f32 %v3274, %v3532
      %v3535 = vadd.f32 %v3275, %v3532
      %v3536 = vadd.f32 %v3276, %v3532
      %v3537 = vadd.f32 %v3277, %v3532
      %v3538 = vadd.f32 %v3278, %v3532
      %v3539 = vadd.f32 %v3279, %v3532
      %v3540 = vadd.f32 %v3280, %v3532
      %v3541 = vadd.f32 %v3281, %v3532
      %v3542 = vadd.f32 %v3282, %v3532
      %v3543 = vadd.f32 %v3283, %v3532
      %v3544 = vadd.f32 %v3284, %v3532
      %v3545 = vadd.f32 %v3285, %v3532
      %v3546 = vadd.f32 %v3286, %v3532
      %v3547 = vadd.f32 %v3287, %v3532
      %v3548 = vadd.f32 %v3288, %v3532
      %v3549 = vadd.f32 %v3289, %v3532
      %v3550 = vadd.f32 %v3290, %v3532
      %v3551 = vadd.f32 %v3291, %v3532
      %v3552 = vadd.f32 %v3292, %v3532
      %v3553 = vadd.f32 %v3293, %v3532
      %v3554 = vadd.f32 %v3294, %v3532
      %v3555 = vadd.f32 %v3295, %v3532
      %v3556 = vadd.f32 %v3296, %v3532
      %v3557 = vadd.f32 %v3297, %v3532
      %v3558 = vadd.f32 %v3298, %v3532
      %v3559 = vadd.f32 %v3299, %v3532
      %v3560 = vadd.f32 %v3300, %v3532
      %v3561 = vadd.f32 %v3301, %v3532
      %v3562 = vadd.f32 %v3302, %v3532
      %v3563 = vadd.f32 %v3303, %v3532
      %v3564 = vadd.f32 %v3304, %v3532
      %v3565 = vadd.f32 %v3305, %v3532
      %v3566 = vadd.f32 %v3306, %v3532
      %v3567 = vadd.f32 %v3307, %v3532
      %v3568 = vadd.f32 %v3308, %v3532
      %v3569 = vadd.f32 %v3309, %v3532
      %v3570 = vadd.f32 %v3310, %v3532
      %v3571 = vadd.f32 %v3311, %v3532
      %v3572 = vadd.f32 %v3312, %v3532
      %v3573 = vadd.f32 %v3313, %v3532
      %v3574 = vadd.f32 %v3314, %v3532
      %v3575 = vadd.f32 %v3315, %v3532
      %v3576 = vadd.f32 %v3316, %v3532
      %v3577 = vadd.f32 %v3317, %v3532
      %v3578 = vadd.f32 %v3318, %v3532
      %v3579 = vadd.f32 %v3319, %v3532
      %v3580 = vadd.f32 %v3320, %v3532
      %v3581 = vadd.f32 %v3321, %v3532
      %v3582 = vadd.f32 %v3322, %v3532
      %v3583 = vadd.f32 %v3323, %v3532
      %v3584 = vadd.f32 %v3324, %v3532
      %v3585 = vadd.f32 %v3325, %v3532
      %v3586 = vadd.f32 %v3326, %v3532
      %v3587 = vadd.f32 %v3327, %v3532
      %v3588 = vadd.f32 %v3328, %v3532
      %v3589 = vadd.f32 %v3329, %v3532
      %v3590 = vadd.f32 %v3330, %v3532
      %v3591 = vadd.f32 %v3331, %v3532
      %v3592 = vadd.f32 %v3332, %v3532
      %v3593 = vadd.f32 %v3333, %v3532
      %v3594 = vadd.f32 %v3334, %v3532
      %v3595 = vadd.f32 %v3335, %v3532
      %v3596 = vadd.f32 %v3336, %v3532
      %v3597 = vadd.f32 %v3337, %v3532
      %v3598 = vadd.f32 %v3338, %v3532
      %v3599 = vadd.f32 %v3339, %v3532
      %v3600 = vadd.f32 %v3340, %v3532
      %v3601 = vadd.f32 %v3341, %v3532
      %v3602 = vadd.f32 %v3342, %v3532
      %v3603 = vadd.f32 %v3343, %v3532
      %v3604 = vadd.f32 %v3344, %v3532
      %v3605 = vadd.f32 %v3345, %v3532
      %v3606 = vadd.f32 %v3346, %v3532
      %v3607 = vadd.f32 %v3347, %v3532
      %v3608 = vadd.f32 %v3348, %v3532
      %v3609 = vadd.f32 %v3349, %v3532
      %v3610 = vadd.f32 %v3350, %v3532
      %v3611 = vadd.f32 %v3351, %v3532
      %v3612 = vadd.f32 %v3352, %v3532
      %v3613 = vadd.f32 %v3353, %v3532
      %v3614 = vadd.f32 %v3354, %v3532
      %v3615 = vadd.f32 %v3355, %v3532
      %v3616 = vadd.f32 %v3356, %v3532
      %v3617 = vadd.f32 %v3357, %v3532
      %v3618 = vadd.f32 %v3358, %v3532
      %v3619 = vadd.f32 %v3359, %v3532
      %v3620 = vadd.f32 %v3360, %v3532
      %v3621 = vadd.f32 %v3361, %v3532
      %v3622 = vadd.f32 %v3362, %v3532
      %v3623 = vadd.f32 %v3363, %v3532
      %v3624 = vadd.f32 %v3364, %v3532
      %v3625 = vadd.f32 %v3365, %v3532
      %v3626 = vadd.f32 %v3366, %v3532
      %v3627 = vadd.f32 %v3367, %v3532
      %v3628 = vadd.f32 %v3368, %v3532
      %v3629 = vadd.f32 %v3369, %v3532
      %v3630 = vadd.f32 %v3370, %v3532
      %v3631 = vadd.f32 %v3371, %v3532
      %v3632 = vadd.f32 %v3372, %v3532
      %v3633 = vadd.f32 %v3373, %v3532
      %v3634 = vadd.f32 %v3374, %v3532
      %v3635 = vadd.f32 %v3375, %v3532
      %v3636 = vadd.f32 %v3376, %v3532
      %v3637 = vadd.f32 %v3377, %v3532
      %v3638 = vadd.f32 %v3378, %v3532
      %v3639 = vadd.f32 %v3379, %v3532
      %v3640 = vadd.f32 %v3380, %v3532
      %v3641 = vadd.f32 %v3381, %v3532
      %v3642 = vadd.f32 %v3382, %v3532
      %v3643 = vadd.f32 %v3383, %v3532
      %v3644 = vadd.f32 %v3384, %v3532
      %v3645 = vadd.f32 %v3385, %v3532
      %v3646 = vadd.f32 %v3386, %v3532
      %v3647 = vadd.f32 %v3387, %v3532
      %v3648 = vadd.f32 %v3388, %v3532
      %v3649 = vadd.f32 %v3389, %v3532
      %v3650 = vadd.f32 %v3390, %v3532
      %v3651 = vadd.f32 %v3391, %v3532
      %v3652 = vadd.f32 %v3392, %v3532
      %v3653 = vadd.f32 %v3393, %v3532
      %v3654 = vadd.f32 %v3394, %v3532
      %v3655 = vadd.f32 %v3395, %v3532
      %v3656 = vadd.f32 %v3396, %v3532
      %v3657 = vadd.f32 %v3397, %v3532
      %v3658 = vadd.f32 %v3398, %v3532
      %v3659 = vadd.f32 %v3399, %v3532
      %v3660 = vadd.f32 %v3400, %v3532
      %v3661 = vadd.f32 %v3401, %v3532
      %v3662 = vadd.f32 %v3402, %v3532
      %v3663 = vadd.f32 %v3403, %v3532
      %v3664 = vadd.f32 %v3404, %v3532
      %v3665 = vadd.f32 %v3405, %v3532
      %v3666 = vadd.f32 %v3406, %v3532
      %v3667 = vadd.f32 %v3407, %v3532
      %v3668 = vadd.f32 %v3408, %v3532
      %v3669 = vadd.f32 %v3409, %v3532
      %v3670 = vadd.f32 %v3410, %v3532
      %v3671 = vadd.f32 %v3411, %v3532
      %v3672 = vadd.f32 %v3412, %v3532
      %v3673 = vadd.f32 %v3413, %v3532
      %v3674 = vadd.f32 %v3414, %v3532
      %v3675 = vadd.f32 %v3415, %v3532
      %v3676 = vadd.f32 %v3416, %v3532
      %v3677 = vadd.f32 %v3417, %v3532
      %v3678 = vadd.f32 %v3418, %v3532
      %v3679 = vadd.f32 %v3419, %v3532
      %v3680 = vadd.f32 %v3420, %v3532
      %v3681 = vadd.f32 %v3421, %v3532
      %v3682 = vadd.f32 %v3422, %v3532
      %v3683 = vadd.f32 %v3423, %v3532
      %v3684 = vadd.f32 %v3424, %v3532
      %v3685 = vadd.f32 %v3425, %v3532
      %v3686 = vadd.f32 %v3426, %v3532
      %v3687 = vadd.f32 %v3427, %v3532
      %v3688 = vadd.f32 %v3428, %v3532
      %v3689 = vadd.f32 %v3429, %v3532
      %v3690 = vadd.f32 %v3430, %v3532
      %v3691 = vadd.f32 %v3431, %v3532
      %v3692 = vadd.f32 %v3432, %v3532
      %v3693 = vadd.f32 %v3433, %v3532
      %v3694 = vadd.f32 %v3434, %v3532
      %v3695 = vadd.f32 %v3435, %v3532
      %v3696 = vadd.f32 %v3436, %v3532
      %v3697 = vadd.f32 %v3437, %v3532
      %v3698 = vadd.f32 %v3438, %v3532
      %v3699 = vadd.f32 %v3439, %v3532
      %v3700 = vadd.f32 %v3440, %v3532
      %v3701 = vadd.f32 %v3441, %v3532
      %v3702 = vadd.f32 %v3442, %v3532
      %v3703 = vadd.f32 %v3443, %v3532
      %v3704 = vadd.f32 %v3444, %v3532
      %v3705 = vadd.f32 %v3445, %v3532
      %v3706 = vadd.f32 %v3446, %v3532
      %v3707 = vadd.f32 %v3447, %v3532
      %v3708 = vadd.f32 %v3448, %v3532
      %v3709 = vadd.f32 %v3449, %v3532
      %v3710 = vadd.f32 %v3450, %v3532
      %v3711 = vadd.f32 %v3451, %v3532
      %v3712 = vadd.f32 %v3452, %v3532
      %v3713 = vadd.f32 %v3453, %v3532
      %v3714 = vadd.f32 %v3454, %v3532
      %v3715 = vadd.f32 %v3455, %v3532
      %v3716 = vadd.f32 %v3456, %v3532
      %v3717 = vadd.f32 %v3457, %v3532
      %v3718 = vadd.f32 %v3458, %v3532
      %v3719 = vadd.f32 %v3459, %v3532
      %v3720 = vadd.f32 %v3460, %v3532
      %v3721 = vadd.f32 %v3461, %v3532
      %v3722 = vadd.f32 %v3462, %v3532
      %v3723 = vadd.f32 %v3463, %v3532
      %v3724 = vadd.f32 %v3464, %v3532
      %v3725 = vadd.f32 %v3465, %v3532
      %v3726 = vadd.f32 %v3466, %v3532
      %v3727 = vadd.f32 %v3467, %v3532
      %v3728 = vadd.f32 %v3468, %v3532
      %v3729 = vadd.f32 %v3469, %v3532
      %v3730 = vadd.f32 %v3470, %v3532
      %v3731 = vadd.f32 %v3471, %v3532
      %v3732 = vadd.f32 %v3472, %v3532
      %v3733 = vadd.f32 %v3473, %v3532
      %v3734 = vadd.f32 %v3474, %v3532
      %v3735 = vadd.f32 %v3475, %v3532
      %v3736 = vadd.f32 %v3476, %v3532
      %v3737 = vadd.f32 %v3477, %v3532
      %v3738 = vadd.f32 %v3478, %v3532
      %v3739 = vadd.f32 %v3479, %v3532
      %v3740 = vadd.f32 %v3480, %v3532
      %v3741 = vadd.f32 %v3481, %v3532
      %v3742 = vadd.f32 %v3482, %v3532
      %v3743 = vadd.f32 %v3483, %v3532
      %v3744 = vadd.f32 %v3484, %v3532
      %v3745 = vadd.f32 %v3485, %v3532
      %v3746 = vadd.f32 %v3486, %v3532
      %v3747 = vadd.f32 %v3487, %v3532
      %v3748 = vadd.f32 %v3488, %v3532
      %v3749 = vadd.f32 %v3489, %v3532
      %v3750 = vadd.f32 %v3490, %v3532
      %v3751 = vadd.f32 %v3491, %v3532
      %v3752 = vadd.f32 %v3492, %v3532
      %v3753 = vadd.f32 %v3493, %v3532
      %v3754 = vadd.f32 %v3494, %v3532
      %v3755 = vadd.f32 %v3495, %v3532
      %v3756 = vadd.f32 %v3496, %v3532
      %v3757 = vadd.f32 %v3497, %v3532
      %v3758 = vadd.f32 %v3498, %v3532
      %v3759 = vadd.f32 %v3499, %v3532
      %v3760 = vadd.f32 %v3500, %v3532
      %v3761 = vadd.f32 %v3501, %v3532
      %v3762 = vadd.f32 %v3502, %v3532
      %v3763 = vadd.f32 %v3503, %v3532
      %v3764 = vadd.f32 %v3504, %v3532
      %v3765 = vadd.f32 %v3505, %v3532
      %v3766 = vadd.f32 %v3506, %v3532
      %v3767 = vadd.f32 %v3507, %v3532
      %v3768 = vadd.f32 %v3508, %v3532
      %v3769 = vadd.f32 %v3509, %v3532
      %v3770 = vadd.f32 %v3510, %v3532
      %v3771 = vadd.f32 %v3511, %v3532
      %v3772 = vadd.f32 %v3512, %v3532
      %v3773 = vadd.f32 %v3513, %v3532
      %v3774 = vadd.f32 %v3514, %v3532
      %v3775 = vadd.f32 %v3515, %v3532
      %v3776 = vadd.f32 %v3516, %v3532
      %v3777 = vadd.f32 %v3517, %v3532
      %v3778 = vadd.f32 %v3518, %v3532
      %v3779 = vadd.f32 %v3519, %v3532
      %v3780 = vadd.f32 %v3520, %v3532
      %v3781 = vadd.f32 %v3521, %v3532
      %v3782 = vadd.f32 %v3522, %v3532
      %v3783 = vadd.f32 %v3523, %v3532
      %v3784 = vadd.f32 %v3524, %v3532
      %v3785 = vadd.f32 %v3525, %v3532
      %v3786 = vadd.f32 %v3526, %v3532
      %v3787 = vadd.f32 %v3527, %v3532
      %v3788 = vadd.f32 %v3528, %v3532
      %v3789 = vadd.f32 %v3529, %v3532
      %v3790 = vmax.f32 %v3534, 0.0
      %v3791 = vmax.f32 %v3535, 0.0
      %v3792 = vmax.f32 %v3536, 0.0
      %v3793 = vmax.f32 %v3537, 0.0
      %v3794 = vmax.f32 %v3538, 0.0
      %v3795 = vmax.f32 %v3539, 0.0
      %v3796 = vmax.f32 %v3540, 0.0
      %v3797 = vmax.f32 %v3541, 0.0
      %v3798 = vmax.f32 %v3542, 0.0
      %v3799 = vmax.f32 %v3543, 0.0
      %v3800 = vmax.f32 %v3544, 0.0
      %v3801 = vmax.f32 %v3545, 0.0
      %v3802 = vmax.f32 %v3546, 0.0
      %v3803 = vmax.f32 %v3547, 0.0
      %v3804 = vmax.f32 %v3548, 0.0
      %v3805 = vmax.f32 %v3549, 0.0
      %v3806 = vmax.f32 %v3550, 0.0
      %v3807 = vmax.f32 %v3551, 0.0
      %v3808 = vmax.f32 %v3552, 0.0
      %v3809 = vmax.f32 %v3553, 0.0
      %v3810 = vmax.f32 %v3554, 0.0
      %v3811 = vmax.f32 %v3555, 0.0
      %v3812 = vmax.f32 %v3556, 0.0
      %v3813 = vmax.f32 %v3557, 0.0
      %v3814 = vmax.f32 %v3558, 0.0
      %v3815 = vmax.f32 %v3559, 0.0
      %v3816 = vmax.f32 %v3560, 0.0
      %v3817 = vmax.f32 %v3561, 0.0
      %v3818 = vmax.f32 %v3562, 0.0
      %v3819 = vmax.f32 %v3563, 0.0
      %v3820 = vmax.f32 %v3564, 0.0
      %v3821 = vmax.f32 %v3565, 0.0
      %v3822 = vmax.f32 %v3566, 0.0
      %v3823 = vmax.f32 %v3567, 0.0
      %v3824 = vmax.f32 %v3568, 0.0
      %v3825 = vmax.f32 %v3569, 0.0
      %v3826 = vmax.f32 %v3570, 0.0
      %v3827 = vmax.f32 %v3571, 0.0
      %v3828 = vmax.f32 %v3572, 0.0
      %v3829 = vmax.f32 %v3573, 0.0
      %v3830 = vmax.f32 %v3574, 0.0
      %v3831 = vmax.f32 %v3575, 0.0
      %v3832 = vmax.f32 %v3576, 0.0
      %v3833 = vmax.f32 %v3577, 0.0
      %v3834 = vmax.f32 %v3578, 0.0
      %v3835 = vmax.f32 %v3579, 0.0
      %v3836 = vmax.f32 %v3580, 0.0
      %v3837 = vmax.f32 %v3581, 0.0
      %v3838 = vmax.f32 %v3582, 0.0
      %v3839 = vmax.f32 %v3583, 0.0
      %v3840 = vmax.f32 %v3584, 0.0
      %v3841 = vmax.f32 %v3585, 0.0
      %v3842 = vmax.f32 %v3586, 0.0
      %v3843 = vmax.f32 %v3587, 0.0
      %v3844 = vmax.f32 %v3588, 0.0
      %v3845 = vmax.f32 %v3589, 0.0
      %v3846 = vmax.f32 %v3590, 0.0
      %v3847 = vmax.f32 %v3591, 0.0
      %v3848 = vmax.f32 %v3592, 0.0
      %v3849 = vmax.f32 %v3593, 0.0
      %v3850 = vmax.f32 %v3594, 0.0
      %v3851 = vmax.f32 %v3595, 0.0
      %v3852 = vmax.f32 %v3596, 0.0
      %v3853 = vmax.f32 %v3597, 0.0
      %v3854 = vmax.f32 %v3598, 0.0
      %v3855 = vmax.f32 %v3599, 0.0
      %v3856 = vmax.f32 %v3600, 0.0
      %v3857 = vmax.f32 %v3601, 0.0
      %v3858 = vmax.f32 %v3602, 0.0
      %v3859 = vmax.f32 %v3603, 0.0
      %v3860 = vmax.f32 %v3604, 0.0
      %v3861 = vmax.f32 %v3605, 0.0
      %v3862 = vmax.f32 %v3606, 0.0
      %v3863 = vmax.f32 %v3607, 0.0
      %v3864 = vmax.f32 %v3608, 0.0
      %v3865 = vmax.f32 %v3609, 0.0
      %v3866 = vmax.f32 %v3610, 0.0
      %v3867 = vmax.f32 %v3611, 0.0
      %v3868 = vmax.f32 %v3612, 0.0
      %v3869 = vmax.f32 %v3613, 0.0
      %v3870 = vmax.f32 %v3614, 0.0
      %v3871 = vmax.f32 %v3615, 0.0
      %v3872 = vmax.f32 %v3616, 0.0
      %v3873 = vmax.f32 %v3617, 0.0
      %v3874 = vmax.f32 %v3618, 0.0
      %v3875 = vmax.f32 %v3619, 0.0
      %v3876 = vmax.f32 %v3620, 0.0
      %v3877 = vmax.f32 %v3621, 0.0
      %v3878 = vmax.f32 %v3622, 0.0
      %v3879 = vmax.f32 %v3623, 0.0
      %v3880 = vmax.f32 %v3624, 0.0
      %v3881 = vmax.f32 %v3625, 0.0
      %v3882 = vmax.f32 %v3626, 0.0
      %v3883 = vmax.f32 %v3627, 0.0
      %v3884 = vmax.f32 %v3628, 0.0
      %v3885 = vmax.f32 %v3629, 0.0
      %v3886 = vmax.f32 %v3630, 0.0
      %v3887 = vmax.f32 %v3631, 0.0
      %v3888 = vmax.f32 %v3632, 0.0
      %v3889 = vmax.f32 %v3633, 0.0
      %v3890 = vmax.f32 %v3634, 0.0
      %v3891 = vmax.f32 %v3635, 0.0
      %v3892 = vmax.f32 %v3636, 0.0
      %v3893 = vmax.f32 %v3637, 0.0
      %v3894 = vmax.f32 %v3638, 0.0
      %v3895 = vmax.f32 %v3639, 0.0
      %v3896 = vmax.f32 %v3640, 0.0
      %v3897 = vmax.f32 %v3641, 0.0
      %v3898 = vmax.f32 %v3642, 0.0
      %v3899 = vmax.f32 %v3643, 0.0
      %v3900 = vmax.f32 %v3644, 0.0
      %v3901 = vmax.f32 %v3645, 0.0
      %v3902 = vmax.f32 %v3646, 0.0
      %v3903 = vmax.f32 %v3647, 0.0
      %v3904 = vmax.f32 %v3648, 0.0
      %v3905 = vmax.f32 %v3649, 0.0
      %v3906 = vmax.f32 %v3650, 0.0
      %v3907 = vmax.f32 %v3651, 0.0
      %v3908 = vmax.f32 %v3652, 0.0
      %v3909 = vmax.f32 %v3653, 0.0
      %v3910 = vmax.f32 %v3654, 0.0
      %v3911 = vmax.f32 %v3655, 0.0
      %v3912 = vmax.f32 %v3656, 0.0
      %v3913 = vmax.f32 %v3657, 0.0
      %v3914 = vmax.f32 %v3658, 0.0
      %v3915 = vmax.f32 %v3659, 0.0
      %v3916 = vmax.f32 %v3660, 0.0
      %v3917 = vmax.f32 %v3661, 0.0
      %v3918 = vmax.f32 %v3662, 0.0
      %v3919 = vmax.f32 %v3663, 0.0
      %v3920 = vmax.f32 %v3664, 0.0
      %v3921 = vmax.f32 %v3665, 0.0
      %v3922 = vmax.f32 %v3666, 0.0
      %v3923 = vmax.f32 %v3667, 0.0
      %v3924 = vmax.f32 %v3668, 0.0
      %v3925 = vmax.f32 %v3669, 0.0
      %v3926 = vmax.f32 %v3670, 0.0
      %v3927 = vmax.f32 %v3671, 0.0
      %v3928 = vmax.f32 %v3672, 0.0
      %v3929 = vmax.f32 %v3673, 0.0
      %v3930 = vmax.f32 %v3674, 0.0
      %v3931 = vmax.f32 %v3675, 0.0
      %v3932 = vmax.f32 %v3676, 0.0
      %v3933 = vmax.f32 %v3677, 0.0
      %v3934 = vmax.f32 %v3678, 0.0
      %v3935 = vmax.f32 %v3679, 0.0
      %v3936 = vmax.f32 %v3680, 0.0
      %v3937 = vmax.f32 %v3681, 0.0
      %v3938 = vmax.f32 %v3682, 0.0
      %v3939 = vmax.f32 %v3683, 0.0
      %v3940 = vmax.f32 %v3684, 0.0
      %v3941 = vmax.f32 %v3685, 0.0
      %v3942 = vmax.f32 %v3686, 0.0
      %v3943 = vmax.f32 %v3687, 0.0
      %v3944 = vmax.f32 %v3688, 0.0
      %v3945 = vmax.f32 %v3689, 0.0
      %v3946 = vmax.f32 %v3690, 0.0
      %v3947 = vmax.f32 %v3691, 0.0
      %v3948 = vmax.f32 %v3692, 0.0
      %v3949 = vmax.f32 %v3693, 0.0
      %v3950 = vmax.f32 %v3694, 0.0
      %v3951 = vmax.f32 %v3695, 0.0
      %v3952 = vmax.f32 %v3696, 0.0
      %v3953 = vmax.f32 %v3697, 0.0
      %v3954 = vmax.f32 %v3698, 0.0
      %v3955 = vmax.f32 %v3699, 0.0
      %v3956 = vmax.f32 %v3700, 0.0
      %v3957 = vmax.f32 %v3701, 0.0
      %v3958 = vmax.f32 %v3702, 0.0
      %v3959 = vmax.f32 %v3703, 0.0
      %v3960 = vmax.f32 %v3704, 0.0
      %v3961 = vmax.f32 %v3705, 0.0
      %v3962 = vmax.f32 %v3706, 0.0
      %v3963 = vmax.f32 %v3707, 0.0
      %v3964 = vmax.f32 %v3708, 0.0
      %v3965 = vmax.f32 %v3709, 0.0
      %v3966 = vmax.f32 %v3710, 0.0
      %v3967 = vmax.f32 %v3711, 0.0
      %v3968 = vmax.f32 %v3712, 0.0
      %v3969 = vmax.f32 %v3713, 0.0
      %v3970 = vmax.f32 %v3714, 0.0
      %v3971 = vmax.f32 %v3715, 0.0
      %v3972 = vmax.f32 %v3716, 0.0
      %v3973 = vmax.f32 %v3717, 0.0
      %v3974 = vmax.f32 %v3718, 0.0
      %v3975 = vmax.f32 %v3719, 0.0
      %v3976 = vmax.f32 %v3720, 0.0
      %v3977 = vmax.f32 %v3721, 0.0
      %v3978 = vmax.f32 %v3722, 0.0
      %v3979 = vmax.f32 %v3723, 0.0
      %v3980 = vmax.f32 %v3724, 0.0
      %v3981 = vmax.f32 %v3725, 0.0
      %v3982 = vmax.f32 %v3726, 0.0
      %v3983 = vmax.f32 %v3727, 0.0
      %v3984 = vmax.f32 %v3728, 0.0
      %v3985 = vmax.f32 %v3729, 0.0
      %v3986 = vmax.f32 %v3730, 0.0
      %v3987 = vmax.f32 %v3731, 0.0
      %v3988 = vmax.f32 %v3732, 0.0
      %v3989 = vmax.f32 %v3733, 0.0
      %v3990 = vmax.f32 %v3734, 0.0
      %v3991 = vmax.f32 %v3735, 0.0
      %v3992 = vmax.f32 %v3736, 0.0
      %v3993 = vmax.f32 %v3737, 0.0
      %v3994 = vmax.f32 %v3738, 0.0
      %v3995 = vmax.f32 %v3739, 0.0
      %v3996 = vmax.f32 %v3740, 0.0
      %v3997 = vmax.f32 %v3741, 0.0
      %v3998 = vmax.f32 %v3742, 0.0
      %v3999 = vmax.f32 %v3743, 0.0
      %v4000 = vmax.f32 %v3744, 0.0
      %v4001 = vmax.f32 %v3745, 0.0
      %v4002 = vmax.f32 %v3746, 0.0
      %v4003 = vmax.f32 %v3747, 0.0
      %v4004 = vmax.f32 %v3748, 0.0
      %v4005 = vmax.f32 %v3749, 0.0
      %v4006 = vmax.f32 %v3750, 0.0
      %v4007 = vmax.f32 %v3751, 0.0
      %v4008 = vmax.f32 %v3752, 0.0
      %v4009 = vmax.f32 %v3753, 0.0
      %v4010 = vmax.f32 %v3754, 0.0
      %v4011 = vmax.f32 %v3755, 0.0
      %v4012 = vmax.f32 %v3756, 0.0
      %v4013 = vmax.f32 %v3757, 0.0
      %v4014 = vmax.f32 %v3758, 0.0
      %v4015 = vmax.f32 %v3759, 0.0
      %v4016 = vmax.f32 %v3760, 0.0
      %v4017 = vmax.f32 %v3761, 0.0
      %v4018 = vmax.f32 %v3762, 0.0
      %v4019 = vmax.f32 %v3763, 0.0
      %v4020 = vmax.f32 %v3764, 0.0
      %v4021 = vmax.f32 %v3765, 0.0
      %v4022 = vmax.f32 %v3766, 0.0
      %v4023 = vmax.f32 %v3767, 0.0
      %v4024 = vmax.f32 %v3768, 0.0
      %v4025 = vmax.f32 %v3769, 0.0
      %v4026 = vmax.f32 %v3770, 0.0
      %v4027 = vmax.f32 %v3771, 0.0
      %v4028 = vmax.f32 %v3772, 0.0
      %v4029 = vmax.f32 %v3773, 0.0
      %v4030 = vmax.f32 %v3774, 0.0
      %v4031 = vmax.f32 %v3775, 0.0
      %v4032 = vmax.f32 %v3776, 0.0
      %v4033 = vmax.f32 %v3777, 0.0
      %v4034 = vmax.f32 %v3778, 0.0
      %v4035 = vmax.f32 %v3779, 0.0
      %v4036 = vmax.f32 %v3780, 0.0
      %v4037 = vmax.f32 %v3781, 0.0
      %v4038 = vmax.f32 %v3782, 0.0
      %v4039 = vmax.f32 %v3783, 0.0
      %v4040 = vmax.f32 %v3784, 0.0
      %v4041 = vmax.f32 %v3785, 0.0
      %v4042 = vmax.f32 %v3786, 0.0
      %v4043 = vmax.f32 %v3787, 0.0
      %v4044 = vmax.f32 %v3788, 0.0
      %v4045 = vmax.f32 %v3789, 0.0
      %v4046 = vld [vmem:[%s4] sm:$0xff]
      %v4047 = vld [vmem:[%s4 + $0x8] sm:$0xff]
      %v4048 = vld [vmem:[%s4 + $0x10] sm:$0xff]
      %v4049 = vld [vmem:[%s4 + $0x18] sm:$0xff]
      %v4050 = vld [vmem:[%s4 + $0x20] sm:$0xff]
      %v4051 = vld [vmem:[%s4 + $0x28] sm:$0xff]
      %v4052 = vld [vmem:[%s4 + $0x30] sm:$0xff]
      %v4053 = vld [vmem:[%s4 + $0x38] sm:$0xff]
      %v4054 = vpack.c.bf16 %v3791, %v3790
      %v4055 = vpack.c.bf16 %v3793, %v3792
      %v4056 = vpack.c.bf16 %v3795, %v3794
      %v4057 = vpack.c.bf16 %v3797, %v3796
      %v4058 = vpack.c.bf16 %v3799, %v3798
      %v4059 = vpack.c.bf16 %v3801, %v3800
      %v4060 = vpack.c.bf16 %v3803, %v3802
      %v4061 = vpack.c.bf16 %v3805, %v3804
      %v4062 = vpack.c.bf16 %v3807, %v3806
      %v4063 = vpack.c.bf16 %v3809, %v3808
      %v4064 = vpack.c.bf16 %v3811, %v3810
      %v4065 = vpack.c.bf16 %v3813, %v3812
      %v4066 = vpack.c.bf16 %v3815, %v3814
      %v4067 = vpack.c.bf16 %v3817, %v3816
      %v4068 = vpack.c.bf16 %v3819, %v3818
      %v4069 = vpack.c.bf16 %v3821, %v3820
      %v4070 = vpack.c.bf16 %v3823, %v3822
      %v4071 = vpack.c.bf16 %v3825, %v3824
      %v4072 = vpack.c.bf16 %v3827, %v3826
      %v4073 = vpack.c.bf16 %v3829, %v3828
      %v4074 = vpack.c.bf16 %v3831, %v3830
      %v4075 = vpack.c.bf16 %v3833, %v3832
      %v4076 = vpack.c.bf16 %v3835, %v3834
      %v4077 = vpack.c.bf16 %v3837, %v3836
      %v4078 = vpack.c.bf16 %v3839, %v3838
      %v4079 = vpack.c.bf16 %v3841, %v3840
      %v4080 = vpack.c.bf16 %v3843, %v3842
      %v4081 = vpack.c.bf16 %v3845, %v3844
      %v4082 = vpack.c.bf16 %v3847, %v3846
      %v4083 = vpack.c.bf16 %v3849, %v3848
      %v4084 = vpack.c.bf16 %v3851, %v3850
      %v4085 = vpack.c.bf16 %v3853, %v3852
      %v4086 = vpack.c.bf16 %v3855, %v3854
      %v4087 = vpack.c.bf16 %v3857, %v3856
      %v4088 = vpack.c.bf16 %v3859, %v3858
      %v4089 = vpack.c.bf16 %v3861, %v3860
      %v4090 = vpack.c.bf16 %v3863, %v3862
      %v4091 = vpack.c.bf16 %v3865, %v3864
      %v4092 = vpack.c.bf16 %v3867, %v3866
      %v4093 = vpack.c.bf16 %v3869, %v3868
      %v4094 = vpack.c.bf16 %v3871, %v3870
      %v4095 = vpack.c.bf16 %v3873, %v3872
      %v4096 = vpack.c.bf16 %v3875, %v3874
      %v4097 = vpack.c.bf16 %v3877, %v3876
      %v4098 = vpack.c.bf16 %v3879, %v3878
      %v4099 = vpack.c.bf16 %v3881, %v3880
      %v4100 = vpack.c.bf16 %v3883, %v3882
      %v4101 = vpack.c.bf16 %v3885, %v3884
      %v4102 = vpack.c.bf16 %v3887, %v3886
      %v4103 = vpack.c.bf16 %v3889, %v3888
      %v4104 = vpack.c.bf16 %v3891, %v3890
      %v4105 = vpack.c.bf16 %v3893, %v3892
      %v4106 = vpack.c.bf16 %v3895, %v3894
      %v4107 = vpack.c.bf16 %v3897, %v3896
      %v4108 = vpack.c.bf16 %v3899, %v3898
      %v4109 = vpack.c.bf16 %v3901, %v3900
      %v4110 = vpack.c.bf16 %v3903, %v3902
      %v4111 = vpack.c.bf16 %v3905, %v3904
      %v4112 = vpack.c.bf16 %v3907, %v3906
      %v4113 = vpack.c.bf16 %v3909, %v3908
      %v4114 = vpack.c.bf16 %v3911, %v3910
      %v4115 = vpack.c.bf16 %v3913, %v3912
      %v4116 = vpack.c.bf16 %v3915, %v3914
      %v4117 = vpack.c.bf16 %v3917, %v3916
      %v4118 = vpack.c.bf16 %v3919, %v3918
      %v4119 = vpack.c.bf16 %v3921, %v3920
      %v4120 = vpack.c.bf16 %v3923, %v3922
      %v4121 = vpack.c.bf16 %v3925, %v3924
      %v4122 = vpack.c.bf16 %v3927, %v3926
      %v4123 = vpack.c.bf16 %v3929, %v3928
      %v4124 = vpack.c.bf16 %v3931, %v3930
      %v4125 = vpack.c.bf16 %v3933, %v3932
      %v4126 = vpack.c.bf16 %v3935, %v3934
      %v4127 = vpack.c.bf16 %v3937, %v3936
      %v4128 = vpack.c.bf16 %v3939, %v3938
      %v4129 = vpack.c.bf16 %v3941, %v3940
      %v4130 = vpack.c.bf16 %v3943, %v3942
      %v4131 = vpack.c.bf16 %v3945, %v3944
      %v4132 = vpack.c.bf16 %v3947, %v3946
      %v4133 = vpack.c.bf16 %v3949, %v3948
      %v4134 = vpack.c.bf16 %v3951, %v3950
      %v4135 = vpack.c.bf16 %v3953, %v3952
      %v4136 = vpack.c.bf16 %v3955, %v3954
      %v4137 = vpack.c.bf16 %v3957, %v3956
      %v4138 = vpack.c.bf16 %v3959, %v3958
      %v4139 = vpack.c.bf16 %v3961, %v3960
      %v4140 = vpack.c.bf16 %v3963, %v3962
      %v4141 = vpack.c.bf16 %v3965, %v3964
      %v4142 = vpack.c.bf16 %v3967, %v3966
      %v4143 = vpack.c.bf16 %v3969, %v3968
      %v4144 = vpack.c.bf16 %v3971, %v3970
      %v4145 = vpack.c.bf16 %v3973, %v3972
      %v4146 = vpack.c.bf16 %v3975, %v3974
      %v4147 = vpack.c.bf16 %v3977, %v3976
      %v4148 = vpack.c.bf16 %v3979, %v3978
      %v4149 = vpack.c.bf16 %v3981, %v3980
      %v4150 = vpack.c.bf16 %v3983, %v3982
      %v4151 = vpack.c.bf16 %v3985, %v3984
      %v4152 = vpack.c.bf16 %v3987, %v3986
      %v4153 = vpack.c.bf16 %v3989, %v3988
      %v4154 = vpack.c.bf16 %v3991, %v3990
      %v4155 = vpack.c.bf16 %v3993, %v3992
      %v4156 = vpack.c.bf16 %v3995, %v3994
      %v4157 = vpack.c.bf16 %v3997, %v3996
      %v4158 = vpack.c.bf16 %v3999, %v3998
      %v4159 = vpack.c.bf16 %v4001, %v4000
      %v4160 = vpack.c.bf16 %v4003, %v4002
      %v4161 = vpack.c.bf16 %v4005, %v4004
      %v4162 = vpack.c.bf16 %v4007, %v4006
      %v4163 = vpack.c.bf16 %v4009, %v4008
      %v4164 = vpack.c.bf16 %v4011, %v4010
      %v4165 = vpack.c.bf16 %v4013, %v4012
      %v4166 = vpack.c.bf16 %v4015, %v4014
      %v4167 = vpack.c.bf16 %v4017, %v4016
      %v4168 = vpack.c.bf16 %v4019, %v4018
      %v4169 = vpack.c.bf16 %v4021, %v4020
      %v4170 = vpack.c.bf16 %v4023, %v4022
      %v4171 = vpack.c.bf16 %v4025, %v4024
      %v4172 = vpack.c.bf16 %v4027, %v4026
      %v4173 = vpack.c.bf16 %v4029, %v4028
      %v4174 = vpack.c.bf16 %v4031, %v4030
      %v4175 = vpack.c.bf16 %v4033, %v4032
      %v4176 = vpack.c.bf16 %v4035, %v4034
      %v4177 = vpack.c.bf16 %v4037, %v4036
      %v4178 = vpack.c.bf16 %v4039, %v4038
      %v4179 = vpack.c.bf16 %v4041, %v4040
      %v4180 = vpack.c.bf16 %v4043, %v4042
      %v4181 = vpack.c.bf16 %v4045, %v4044
      %v4190 = vunpack.c.l.b16 %v4046
      %v4191 = vunpack.c.h.b16 %v4046
      %v4192 = vunpack.c.l.b16 %v4047
      %v4193 = vunpack.c.h.b16 %v4047
      %v4194 = vunpack.c.l.b16 %v4048
      %v4195 = vunpack.c.h.b16 %v4048
      %v4196 = vunpack.c.l.b16 %v4049
      %v4197 = vunpack.c.h.b16 %v4049
      %v4198 = vunpack.c.l.b16 %v4050
      %v4199 = vunpack.c.h.b16 %v4050
      %v4200 = vunpack.c.l.b16 %v4051
      %v4201 = vunpack.c.h.b16 %v4051
      %v4202 = vunpack.c.l.b16 %v4052
      %v4203 = vunpack.c.h.b16 %v4052
      %v4204 = vunpack.c.l.b16 %v4053
      %v4205 = vunpack.c.h.b16 %v4053
      %v4206 = vpack.c.b16 %v4190, %v4190
      %v4207 = vpack.c.b16 %v4191, %v4191
      %v4208 = vpack.c.b16 %v4192, %v4192
      %v4209 = vpack.c.b16 %v4193, %v4193
      %v4210 = vpack.c.b16 %v4194, %v4194
      %v4211 = vpack.c.b16 %v4195, %v4195
      %v4212 = vpack.c.b16 %v4196, %v4196
      %v4213 = vpack.c.b16 %v4197, %v4197
      %v4214 = vpack.c.b16 %v4198, %v4198
      %v4215 = vpack.c.b16 %v4199, %v4199
      %v4216 = vpack.c.b16 %v4200, %v4200
      %v4217 = vpack.c.b16 %v4201, %v4201
      %v4218 = vpack.c.b16 %v4202, %v4202
      %v4219 = vpack.c.b16 %v4203, %v4203
      %v4220 = vpack.c.b16 %v4204, %v4204
      %v4221 = vpack.c.b16 %v4205, %v4205
      %4238 = vmatpush.bf16.msra.mxu0 %v4061
      %4239 = vmatpush.bf16.msra.mxu0 %v4060
      %4240 = vmatpush.bf16.msra.mxu0 %v4059
      %4241 = vmatpush.bf16.msra.mxu0 %v4058
      %4242 = vmatpush.bf16.msra.mxu0 %v4057
      %4243 = vmatpush.bf16.msra.mxu0 %v4056
      %4244 = vmatpush.bf16.msra.mxu0 %v4055
      %4245 = vmatpush.bf16.msra.mxu0 %v4054
      %4246 = vmatmul.bf16.gmra.mxu0 %v4206
      %v4247 = vpop.f32.mrf.mxu0
      %v4248 = vadd.f32 0.0, %v4247
      %v4249 = vpop.f32.mrf.mxu0
      %4250 = vdwg.mxu0
      %4251 = vmatpush.bf16.msra.mxu0 %v4069
      %4252 = vmatpush.bf16.msra.mxu0 %v4068
      %4253 = vmatpush.bf16.msra.mxu0 %v4067
      %4254 = vmatpush.bf16.msra.mxu0 %v4066
      %4255 = vmatpush.bf16.msra.mxu0 %v4065
      %4256 = vmatpush.bf16.msra.mxu0 %v4064
      %4257 = vmatpush.bf16.msra.mxu0 %v4063
      %4258 = vmatpush.bf16.msra.mxu0 %v4062
      %4259 = vmatmul.bf16.gmra.mxu0 %v4207
      %v4260 = vpop.f32.mrf.mxu0
      %v4261 = vadd.f32 %v4248, %v4260
      %v4262 = vpop.f32.mrf.mxu0
      %4263 = vdwg.mxu0
      %4264 = vmatpush.bf16.msra.mxu0 %v4077
      %4265 = vmatpush.bf16.msra.mxu0 %v4076
      %4266 = vmatpush.bf16.msra.mxu0 %v4075
      %4267 = vmatpush.bf16.msra.mxu0 %v4074
      %4268 = vmatpush.bf16.msra.mxu0 %v4073
      %4269 = vmatpush.bf16.msra.mxu0 %v4072
      %4270 = vmatpush.bf16.msra.mxu0 %v4071
      %4271 = vmatpush.bf16.msra.mxu0 %v4070
      %4272 = vmatmul.bf16.gmra.mxu0 %v4208
      %v4273 = vpop.f32.mrf.mxu0
      %v4274 = vadd.f32 %v4261, %v4273
      %v4275 = vpop.f32.mrf.mxu0
      %4276 = vdwg.mxu0
      %4277 = vmatpush.bf16.msra.mxu0 %v4085
      %4278 = vmatpush.bf16.msra.mxu0 %v4084
      %4279 = vmatpush.bf16.msra.mxu0 %v4083
      %4280 = vmatpush.bf16.msra.mxu0 %v4082
      %4281 = vmatpush.bf16.msra.mxu0 %v4081
      %4282 = vmatpush.bf16.msra.mxu0 %v4080
      %4283 = vmatpush.bf16.msra.mxu0 %v4079
      %4284 = vmatpush.bf16.msra.mxu0 %v4078
      %4285 = vmatmul.bf16.gmra.mxu0 %v4209
      %v4286 = vpop.f32.mrf.mxu0
      %v4287 = vadd.f32 %v4274, %v4286
      %v4288 = vpop.f32.mrf.mxu0
      %4289 = vdwg.mxu0
      %4290 = vmatpush.bf16.msra.mxu0 %v4093
      %4291 = vmatpush.bf16.msra.mxu0 %v4092
      %4292 = vmatpush.bf16.msra.mxu0 %v4091
      %4293 = vmatpush.bf16.msra.mxu0 %v4090
      %4294 = vmatpush.bf16.msra.mxu0 %v4089
      %4295 = vmatpush.bf16.msra.mxu0 %v4088
      %4296 = vmatpush.bf16.msra.mxu0 %v4087
      %4297 = vmatpush.bf16.msra.mxu0 %v4086
      %4298 = vmatmul.bf16.gmra.mxu0 %v4210
      %v4299 = vpop.f32.mrf.mxu0
      %v4300 = vadd.f32 %v4287, %v4299
      %v4301 = vpop.f32.mrf.mxu0
      %4302 = vdwg.mxu0
      %4303 = vmatpush.bf16.msra.mxu0 %v4101
      %4304 = vmatpush.bf16.msra.mxu0 %v4100
      %4305 = vmatpush.bf16.msra.mxu0 %v4099
      %4306 = vmatpush.bf16.msra.mxu0 %v4098
      %4307 = vmatpush.bf16.msra.mxu0 %v4097
      %4308 = vmatpush.bf16.msra.mxu0 %v4096
      %4309 = vmatpush.bf16.msra.mxu0 %v4095
      %4310 = vmatpush.bf16.msra.mxu0 %v4094
      %4311 = vmatmul.bf16.gmra.mxu0 %v4211
      %v4312 = vpop.f32.mrf.mxu0
      %v4313 = vadd.f32 %v4300, %v4312
      %v4314 = vpop.f32.mrf.mxu0
      %4315 = vdwg.mxu0
      %4316 = vmatpush.bf16.msra.mxu0 %v4109
      %4317 = vmatpush.bf16.msra.mxu0 %v4108
      %4318 = vmatpush.bf16.msra.mxu0 %v4107
      %4319 = vmatpush.bf16.msra.mxu0 %v4106
      %4320 = vmatpush.bf16.msra.mxu0 %v4105
      %4321 = vmatpush.bf16.msra.mxu0 %v4104
      %4322 = vmatpush.bf16.msra.mxu0 %v4103
      %4323 = vmatpush.bf16.msra.mxu0 %v4102
      %4324 = vmatmul.bf16.gmra.mxu0 %v4212
      %v4325 = vpop.f32.mrf.mxu0
      %v4326 = vadd.f32 %v4313, %v4325
      %v4327 = vpop.f32.mrf.mxu0
      %4328 = vdwg.mxu0
      %4329 = vmatpush.bf16.msra.mxu0 %v4117
      %4330 = vmatpush.bf16.msra.mxu0 %v4116
      %4331 = vmatpush.bf16.msra.mxu0 %v4115
      %4332 = vmatpush.bf16.msra.mxu0 %v4114
      %4333 = vmatpush.bf16.msra.mxu0 %v4113
      %4334 = vmatpush.bf16.msra.mxu0 %v4112
      %4335 = vmatpush.bf16.msra.mxu0 %v4111
      %4336 = vmatpush.bf16.msra.mxu0 %v4110
      %4337 = vmatmul.bf16.gmra.mxu0 %v4213
      %v4338 = vpop.f32.mrf.mxu0
      %v4339 = vadd.f32 %v4326, %v4338
      %v4340 = vpop.f32.mrf.mxu0
      %4341 = vdwg.mxu0
      %4342 = vmatpush.bf16.msra.mxu0 %v4125
      %4343 = vmatpush.bf16.msra.mxu0 %v4124
      %4344 = vmatpush.bf16.msra.mxu0 %v4123
      %4345 = vmatpush.bf16.msra.mxu0 %v4122
      %4346 = vmatpush.bf16.msra.mxu0 %v4121
      %4347 = vmatpush.bf16.msra.mxu0 %v4120
      %4348 = vmatpush.bf16.msra.mxu0 %v4119
      %4349 = vmatpush.bf16.msra.mxu0 %v4118
      %4350 = vmatmul.bf16.gmra.mxu0 %v4214
      %v4351 = vpop.f32.mrf.mxu0
      %v4352 = vadd.f32 %v4339, %v4351
      %v4353 = vpop.f32.mrf.mxu0
      %4354 = vdwg.mxu0
      %4355 = vmatpush.bf16.msra.mxu0 %v4133
      %4356 = vmatpush.bf16.msra.mxu0 %v4132
      %4357 = vmatpush.bf16.msra.mxu0 %v4131
      %4358 = vmatpush.bf16.msra.mxu0 %v4130
      %4359 = vmatpush.bf16.msra.mxu0 %v4129
      %4360 = vmatpush.bf16.msra.mxu0 %v4128
      %4361 = vmatpush.bf16.msra.mxu0 %v4127
      %4362 = vmatpush.bf16.msra.mxu0 %v4126
      %4363 = vmatmul.bf16.gmra.mxu0 %v4215
      %v4364 = vpop.f32.mrf.mxu0
      %v4365 = vadd.f32 %v4352, %v4364
      %v4366 = vpop.f32.mrf.mxu0
      %4367 = vdwg.mxu0
      %4368 = vmatpush.bf16.msra.mxu0 %v4141
      %4369 = vmatpush.bf16.msra.mxu0 %v4140
      %4370 = vmatpush.bf16.msra.mxu0 %v4139
      %4371 = vmatpush.bf16.msra.mxu0 %v4138
      %4372 = vmatpush.bf16.msra.mxu0 %v4137
      %4373 = vmatpush.bf16.msra.mxu0 %v4136
      %4374 = vmatpush.bf16.msra.mxu0 %v4135
      %4375 = vmatpush.bf16.msra.mxu0 %v4134
      %4376 = vmatmul.bf16.gmra.mxu0 %v4216
      %v4377 = vpop.f32.mrf.mxu0
      %v4378 = vadd.f32 %v4365, %v4377
      %v4379 = vpop.f32.mrf.mxu0
      %4380 = vdwg.mxu0
      %4381 = vmatpush.bf16.msra.mxu0 %v4149
      %4382 = vmatpush.bf16.msra.mxu0 %v4148
      %4383 = vmatpush.bf16.msra.mxu0 %v4147
      %4384 = vmatpush.bf16.msra.mxu0 %v4146
      %4385 = vmatpush.bf16.msra.mxu0 %v4145
      %4386 = vmatpush.bf16.msra.mxu0 %v4144
      %4387 = vmatpush.bf16.msra.mxu0 %v4143
      %4388 = vmatpush.bf16.msra.mxu0 %v4142
      %4389 = vmatmul.bf16.gmra.mxu0 %v4217
      %v4390 = vpop.f32.mrf.mxu0
      %v4391 = vadd.f32 %v4378, %v4390
      %v4392 = vpop.f32.mrf.mxu0
      %4393 = vdwg.mxu0
      %4394 = vmatpush.bf16.msra.mxu0 %v4157
      %4395 = vmatpush.bf16.msra.mxu0 %v4156
      %4396 = vmatpush.bf16.msra.mxu0 %v4155
      %4397 = vmatpush.bf16.msra.mxu0 %v4154
      %4398 = vmatpush.bf16.msra.mxu0 %v4153
      %4399 = vmatpush.bf16.msra.mxu0 %v4152
      %4400 = vmatpush.bf16.msra.mxu0 %v4151
      %4401 = vmatpush.bf16.msra.mxu0 %v4150
      %4402 = vmatmul.bf16.gmra.mxu0 %v4218
      %v4403 = vpop.f32.mrf.mxu0
      %v4404 = vadd.f32 %v4391, %v4403
      %v4405 = vpop.f32.mrf.mxu0
      %4406 = vdwg.mxu0
      %4407 = vmatpush.bf16.msra.mxu0 %v4165
      %4408 = vmatpush.bf16.msra.mxu0 %v4164
      %4409 = vmatpush.bf16.msra.mxu0 %v4163
      %4410 = vmatpush.bf16.msra.mxu0 %v4162
      %4411 = vmatpush.bf16.msra.mxu0 %v4161
      %4412 = vmatpush.bf16.msra.mxu0 %v4160
      %4413 = vmatpush.bf16.msra.mxu0 %v4159
      %4414 = vmatpush.bf16.msra.mxu0 %v4158
      %4415 = vmatmul.bf16.gmra.mxu0 %v4219
      %v4416 = vpop.f32.mrf.mxu0
      %v4417 = vadd.f32 %v4404, %v4416
      %v4418 = vpop.f32.mrf.mxu0
      %4419 = vdwg.mxu0
      %4420 = vmatpush.bf16.msra.mxu0 %v4173
      %4421 = vmatpush.bf16.msra.mxu0 %v4172
      %4422 = vmatpush.bf16.msra.mxu0 %v4171
      %4423 = vmatpush.bf16.msra.mxu0 %v4170
      %4424 = vmatpush.bf16.msra.mxu0 %v4169
      %4425 = vmatpush.bf16.msra.mxu0 %v4168
      %4426 = vmatpush.bf16.msra.mxu0 %v4167
      %4427 = vmatpush.bf16.msra.mxu0 %v4166
      %4428 = vmatmul.bf16.gmra.mxu0 %v4220
      %v4429 = vpop.f32.mrf.mxu0
      %v4430 = vadd.f32 %v4417, %v4429
      %v4431 = vpop.f32.mrf.mxu0
      %4432 = vdwg.mxu0
      %4433 = vmatpush.bf16.msra.mxu0 %v4181
      %4434 = vmatpush.bf16.msra.mxu0 %v4180
      %4435 = vmatpush.bf16.msra.mxu0 %v4179
      %4436 = vmatpush.bf16.msra.mxu0 %v4178
      %4437 = vmatpush.bf16.msra.mxu0 %v4177
      %4438 = vmatpush.bf16.msra.mxu0 %v4176
      %4439 = vmatpush.bf16.msra.mxu0 %v4175
      %4440 = vmatpush.bf16.msra.mxu0 %v4174
      %4441 = vmatmul.bf16.gmra.mxu0 %v4221
      %v4442 = vpop.f32.mrf.mxu0
      %v4443 = vadd.f32 %v4430, %v4442
      %v4444 = vpop.f32.mrf.mxu0
      %4445 = vdwg.mxu0
      %v4446 = vpack.c.bf16 %v4443, %v4443
      %4447 = vst [vmem:[%s222] sm:$0xf] %v4446
      %p4448 = scmp.lt.s32.totalorder %s16, 1
      %s4449 = scalar_select %p4448, %s16, 1
      %s4450 = smul.addr %s4449, 4
      %s4451 = scalar_lea.vmem %s5, %s4450
      // Predicated region
      $region41: #{simsiam_forward.2} parent=39 // pred_check
        %p4452 = pneg %p144
      $region42: #{simsiam_forward.2} parent=39 // pred_check_branch
        %4454 = sbr.rel (%p4452) target = $region44
      $region43: #{simsiam_forward.2} parent=39 // pred_region
        _
      $region44: #{simsiam_forward.2} parent=39 // pred_fallthru
        _
    $region40: #{simsiam_forward.2} parent=5 // pred_fallthru
      _
    %p4455 = scmp.le.s32.totalorder 2, %s11
    // Predicated region
    $region45: #{simsiam_forward.2} parent=5 // pred_check
      %p4456 = pneg %p4455
    $region46: #{simsiam_forward.2} parent=5 // pred_check_branch
      %4458 = sbr.rel (%p4456) target = $region48
    $region47: #{simsiam_forward.2} parent=5 // pred_region
      %s4459 = ssub.s32 %s11, 2
      // Predicated region
      $region49: #{simsiam_forward.2} parent=47 // pred_check
        %p4460 = pneg %p150
      $region50: #{simsiam_forward.2} parent=47 // pred_check_branch
        %4462 = sbr.rel (%p4460) target = $region52
      $region51: #{simsiam_forward.2} parent=47 // pred_region
        %p4463 = scmp.lt.s32.totalorder %s17, 1
        %s4464 = scalar_select %p4463, %s17, 1
        %s4465 = smul.addr %s4464, 4
        %s4466 = scalar_lea.vmem %s5, %s4465
      $region52: #{simsiam_forward.2} parent=47 // pred_fallthru
        _
    $region48: #{simsiam_forward.2} parent=5 // pred_fallthru
      _
  $region6: #{simsiam_forward.2} parent=0 // loop_footer
    %s15 = sadd.s32 1, %s11
  $region7: #{simsiam_forward.2} parent=0 // loop_footer_branch
    %10 = sbr.rel target = $region3
  $region8: #{simsiam_forward.2} parent=0 // loop_exit
    _

</llo_original>
